<compile_context>
chip_gen: v7x
topology: tpu7x:2x2x1
jax: 0.10.0
libtpu: 0.0.40
codegen_flags: <defaults>
</compile_context>

<pallas_src>
import functools

import jax
import jax.numpy as jnp
from jax.experimental import pallas as pl
from jax.experimental.pallas import tpu as pltpu

_PADL = 8   # data columns start at a sublane-aligned offset; column _PADL-1 is the left halo


def _round_up(v, m):
    return ((v + m - 1) // m) * m


# ----------------------------- Pallas kernel --------------------------------
def _conv3x3_acc(acc_ref, pad_ref, w_ref, cin, H, Wm, first):
    """acc_ref (H*Wm, Cout) (+)= 3x3 conv of pad_ref[:, :, :cin] with w_ref (3,3,cin,Cout).

    pad_ref holds the zero-framed input: data rows at [1:H+1], data cols at
    [_PADL:_PADL+W]; the frame (row 0, row H+1, col _PADL-1, cols >= _PADL+W) is zero.
    Each (dy, dx) tap is one 2D bf16 matmul with contraction depth K = cin (true count).
    """
    c0 = _PADL - 1
    for dy in range(3):
        for dx in range(3):
            patch = pad_ref[dy:dy + H, c0 + dx:c0 + dx + Wm, 0:cin]
            patch = patch.reshape(H * Wm, cin).astype(jnp.bfloat16)
            contrib = jnp.dot(patch, w_ref[dy, dx],
                              preferred_element_type=jnp.float32)
            if first and dy == 0 and dx == 0:
                acc_ref[...] = contrib
            else:
                acc_ref[...] += contrib


def _decoder_block_kernel(*refs, has_skip):
    if has_skip:
        (x_ref, s_ref, w1x_ref, w1s_ref, b1_ref, w2_ref, b2_ref,
         o_ref, pad_ref, acc_ref) = refs
    else:
        (x_ref, w1x_ref, b1_ref, w2_ref, b2_ref,
         o_ref, pad_ref, acc_ref) = refs
        s_ref = w1s_ref = None

    H, W, Cout = o_ref.shape[1], o_ref.shape[2], o_ref.shape[3]
    h, Cx = x_ref.shape[1], x_ref.shape[3]        # x is pre-row-upsample: H == 2*h
    Wp, Cm = pad_ref.shape[1], pad_ref.shape[2]
    Wm = Wp - _PADL - 1                           # compute width (W rounded up to 8)

    # ---- zero only the halo frame (interior is always overwritten before reads) ----
    pad_ref[0, :, :] = jnp.zeros((Wp, Cm), jnp.float32)
    pad_ref[H + 1, :, :] = jnp.zeros((Wp, Cm), jnp.float32)
    pad_ref[1:H + 1, _PADL - 1:_PADL, :] = jnp.zeros((H, 1, Cm), jnp.float32)
    pad_ref[1:H + 1, _PADL + W:, :] = jnp.zeros((H, Wp - _PADL - W, Cm), jnp.float32)

    # ---- conv1, x part: nearest-2x ROW upsample folded into the halo fill ----
    for r in range(h):
        row = x_ref[0, r]                                        # (W, Cx), W already doubled
        pad_ref[1 + 2 * r, _PADL:_PADL + W, 0:Cx] = row
        pad_ref[2 + 2 * r, _PADL:_PADL + W, 0:Cx] = row
    _conv3x3_acc(acc_ref, pad_ref, w1x_ref, Cx, H, Wm, first=True)

    # ---- conv1, skip part (implicit torch.cat([x, skip], dim=1)) ----
    if has_skip:
        Cs = s_ref.shape[3]
        pad_ref[1:H + 1, _PADL:_PADL + W, 0:Cs] = s_ref[0]
        _conv3x3_acc(acc_ref, pad_ref, w1s_ref, Cs, H, Wm, first=False)

    # ---- conv1 epilogue (bias + ReLU) written straight back into the pad buffer ----
    y1 = jnp.maximum(acc_ref[...] + b1_ref[...], 0.0)            # (H*Wm, Cout) f32
    pad_ref[1:H + 1, _PADL:_PADL + W, 0:Cout] = y1.reshape(H, Wm, Cout)[:, :W, :]

    # ---- conv2 (reads y1 from VMEM, never touches HBM) ----
    _conv3x3_acc(acc_ref, pad_ref, w2_ref, Cout, H, Wm, first=True)
    y2 = jnp.maximum(acc_ref[...] + b2_ref[...], 0.0)
    o_ref[0] = y2.reshape(H, Wm, Cout)[:, :W, :].astype(o_ref.dtype)


def _decoder_block(x_w, skip, p):
    """One fused decoder block. x_w is the pre-row-upsample x with W already doubled."""
    N, h, W, Cx = x_w.shape
    H = 2 * h
    Cout = p["oc"]
    has_skip = skip is not None
    Cs = skip.shape[-1] if has_skip else 0
    Cmax = max(Cx, Cs, Cout)
    Wm = max(_round_up(W, 8), 8)      # sublane-aligned compute width
    Wp = _PADL + Wm + 1               # left staging + data/compute cols + right halo

    if has_skip:
        operands = (x_w, skip, p["w1x"], p["w1s"], p["bk1"], p["w2k"], p["bk2"])
        in_specs = [
            pl.BlockSpec((1, h, W, Cx), lambda n: (n, 0, 0, 0)),
            pl.BlockSpec((1, H, W, Cs), lambda n: (n, 0, 0, 0)),
            pl.BlockSpec(p["w1x"].shape, lambda n: (0, 0, 0, 0)),
            pl.BlockSpec(p["w1s"].shape, lambda n: (0, 0, 0, 0)),
            pl.BlockSpec(p["bk1"].shape, lambda n: (0, 0)),
            pl.BlockSpec(p["w2k"].shape, lambda n: (0, 0, 0, 0)),
            pl.BlockSpec(p["bk2"].shape, lambda n: (0, 0)),
        ]
    else:
        operands = (x_w, p["w1x"], p["bk1"], p["w2k"], p["bk2"])
        in_specs = [
            pl.BlockSpec((1, h, W, Cx), lambda n: (n, 0, 0, 0)),
            pl.BlockSpec(p["w1x"].shape, lambda n: (0, 0, 0, 0)),
            pl.BlockSpec(p["bk1"].shape, lambda n: (0, 0)),
            pl.BlockSpec(p["w2k"].shape, lambda n: (0, 0, 0, 0)),
            pl.BlockSpec(p["bk2"].shape, lambda n: (0, 0)),
        ]

    return pl.pallas_call(
        functools.partial(_decoder_block_kernel, has_skip=has_skip),
        out_shape=jax.ShapeDtypeStruct((N, H, W, Cout), x_w.dtype),
        grid=(N,),
        in_specs=in_specs,
        out_specs=pl.BlockSpec((1, H, W, Cout), lambda n: (n, 0, 0, 0)),
        scratch_shapes=[
            pltpu.VMEM((H + 2, Wp, Cmax), jnp.float32),   # shared zero-framed halo buffer
            pltpu.VMEM((H * Wm, Cout), jnp.float32),      # f32 accumulator
        ],
        compiler_params=pltpu.CompilerParams(
            dimension_semantics=("parallel",),
            vmem_limit_bytes=32 * 1024 * 1024),
    )(*operands)


# ----------------------------- Decoder forward -------------------------------
def unet_decoder_forward(features_nhwc, block_params):
    """features_nhwc: encoder features (NHWC), ordered as in the PyTorch call."""
    feats = features_nhwc[1:][::-1]
    x = feats[0]
    skips = feats[1:]
    outs = []
    for i, p in enumerate(block_params):
        skip = skips[i] if i < len(skips) else None
        # W half of the nearest-2x upsample in XLA; the H half happens inside the kernel.
        x_w = jnp.repeat(x, 2, axis=2)
        x = _decoder_block(x_w, skip, p)
        outs.append(x)
    return outs


# ----------------------------- Parameter setup -------------------------------
def _fold_bn(gamma, beta, mean, var, eps=1e-5):
    scale = gamma / jnp.sqrt(var + eps)
    bias = beta - mean * scale
    return scale, bias


def make_decoder_params(key, encoder_channels, decoder_channels):
    enc = list(encoder_channels[1:])[::-1]
    head = enc[0]
    in_ch = [head] + list(decoder_channels[:-1])
    skip_ch = list(enc[1:]) + [0]
    out_ch = list(decoder_channels)

    params = []
    for ic, sc, oc in zip(in_ch, skip_ch, out_ch):
        c1_in = ic + sc
        key, *ks = jax.random.split(key, 11)
        w1 = 0.05 * jax.random.normal(ks[0], (3, 3, c1_in, oc), jnp.float32)
        g1 = jax.random.uniform(ks[1], (oc,), jnp.float32, 0.5, 1.5)
        be1 = 0.1 * jax.random.normal(ks[2], (oc,), jnp.float32)
        m1 = 0.1 * jax.random.normal(ks[3], (oc,), jnp.float32)
        v1 = jax.random.uniform(ks[4], (oc,), jnp.float32, 0.5, 1.5)
        w2 = 0.05 * jax.random.normal(ks[5], (3, 3, oc, oc), jnp.float32)
        g2 = jax.random.uniform(ks[6], (oc,), jnp.float32, 0.5, 1.5)
        be2 = 0.1 * jax.random.normal(ks[7], (oc,), jnp.float32)
        m2 = 0.1 * jax.random.normal(ks[8], (oc,), jnp.float32)
        v2 = jax.random.uniform(ks[9], (oc,), jnp.float32, 0.5, 1.5)

        s1, b1 = _fold_bn(g1, be1, m1, v1)
        s2, b2 = _fold_bn(g2, be2, m2, v2)

        # Fold BN scale into the conv weights; store the MXU copy in bf16.
        w1b = (w1 * s1).astype(jnp.bfloat16)
        w2b = (w2 * s2).astype(jnp.bfloat16)

        p = dict(
            oc=oc,
            # pure-JAX reference uses the same (bf16-rounded) folded weights in f32
            w1r=w1b.astype(jnp.float32), b1=b1,
            w2r=w2b.astype(jnp.float32), b2=b2,
            # kernel params: torch.cat([x, skip], dim=1) puts x channels first
            w1x=w1b[:, :, :ic, :],
            w1s=(w1b[:, :, ic:, :] if sc > 0 else None),
            bk1=b1.reshape(1, oc),
            w2k=w2b,
            bk2=b2.reshape(1, oc),
        )
        params.append(p)
    return params


# ----------------------------- Pure-JAX reference ----------------------------
def _ref_conv(x, w, bias):
    y = jax.lax.conv_general_dilated(
        x, w, window_strides=(1, 1), padding="SAME",
        dimension_numbers=("NHWC", "HWIO", "NHWC"))
    return jnp.maximum(y + bias, 0.0)


def _ref_decoder(features_nhwc, block_params):
    feats = features_nhwc[1:][::-1]
    x = feats[0]
    skips = feats[1:]
    outs = []
    for i, p in enumerate(block_params):
        skip = skips[i] if i < len(skips) else None
        x = jnp.repeat(jnp.repeat(x, 2, axis=1), 2, axis=2)   # nearest-2x
        if skip is not None:
            x = jnp.concatenate([x, skip], axis=-1)
        x = _ref_conv(x, p["w1r"], p["b1"])
        x = _ref_conv(x, p["w2r"], p["b2"])
        outs.append(x)
    return outs


# ----------------------------- Main -----------------------------------------
if __name__ == "__main__":
    key = jax.random.PRNGKey(0)

    # Small synthetic U-Net encoder pyramid (PyTorch NCHW convention).
    N = 2
    encoder_channels = (3, 8, 16, 24, 32, 48)   # stem + 5 stages
    decoder_channels = (32, 24, 16, 8, 8)       # n_blocks = 5
    spatial = (32, 16, 8, 4, 2, 1)              # strides 1,2,4,8,16,32

    key, *fks = jax.random.split(key, len(encoder_channels) + 1)
    features_nchw = [
        jax.random.normal(fk, (N, c, s, s), jnp.float32)
        for fk, c, s in zip(fks, encoder_channels, spatial)
    ]
    # Kernel layout is NHWC: channels on the lane dimension.
    features_nhwc = [jnp.transpose(f, (0, 2, 3, 1)) for f in features_nchw]

    key, pk = jax.random.split(key)
    params = make_decoder_params(pk, encoder_channels, decoder_channels)

    outs = unet_decoder_forward(features_nhwc, params)
    outs = [jax.block_until_ready(o) for o in outs]

    # Correctness check against a pure-JAX reference (kernel uses bf16 MXU operands
    # with f32 accumulation, so the tolerance is loosened from the f32-only 1e-3).
    refs = _ref_decoder(features_nhwc, params)
    for o, r in zip(outs, refs):
        assert o.shape == r.shape, (o.shape, r.shape)
        max_err = float(jnp.abs(o - r).max())
        assert jnp.allclose(o, r, atol=5e-2, rtol=5e-2), max_err

    print("KERNEL_OK")
</pallas_src>

<mosaic_0001>
module attributes {stable_mosaic.version = 11 : i64} {
  func.func @_decoder_block_kernel(%arg0: i32, %arg1: memref<1x1x2x48xf32, #tpu.memory_space<vmem>>, %arg2: memref<1x2x2x32xf32, #tpu.memory_space<vmem>>, %arg3: memref<3x3x48x32xbf16, #tpu.memory_space<vmem>>, %arg4: memref<3x3x32x32xbf16, #tpu.memory_space<vmem>>, %arg5: memref<1x32xf32, #tpu.memory_space<vmem>>, %arg6: memref<3x3x32x32xbf16, #tpu.memory_space<vmem>>, %arg7: memref<1x32xf32, #tpu.memory_space<vmem>>, %arg8: memref<1x2x2x32xf32, #tpu.memory_space<vmem>>, %arg9: memref<4x17x48xf32, #tpu.memory_space<vmem>>, %arg10: memref<16x32xf32, #tpu.memory_space<vmem>>) attributes {dimension_semantics = [#tpu.dimension_semantics<parallel>], iteration_bounds = array<i64: 2>, scalar_prefetch = 0 : i64, scratch_operands = 2 : i64, tpu.core_type = #tpu.core_type<tc>, window_params = [{transform_indices = @transform_0, window_bounds = array<i64: 1, 1, 2, 48>}, {transform_indices = @transform_1, window_bounds = array<i64: 1, 2, 2, 32>}, {pipeline_mode = #tpu.pipeline_mode<synchronous>, transform_indices = @transform_2, window_bounds = array<i64: 3, 3, 48, 32>}, {pipeline_mode = #tpu.pipeline_mode<synchronous>, transform_indices = @transform_3, window_bounds = array<i64: 3, 3, 32, 32>}, {pipeline_mode = #tpu.pipeline_mode<synchronous>, transform_indices = @transform_4, window_bounds = array<i64: 1, 32>}, {pipeline_mode = #tpu.pipeline_mode<synchronous>, transform_indices = @transform_5, window_bounds = array<i64: 3, 3, 32, 32>}, {pipeline_mode = #tpu.pipeline_mode<synchronous>, transform_indices = @transform_6, window_bounds = array<i64: 1, 32>}, {transform_indices = @transform_7, window_bounds = array<i64: 1, 2, 2, 32>}]} {
    %cst = arith.constant 0.000000e+00 : f32
    %0 = vector.broadcast %cst : f32 to vector<17x48xf32>
    %c0 = arith.constant 0 : index
    %c0_0 = arith.constant 0 : index
    %c0_1 = arith.constant 0 : index
    %1 = vector.load %arg9[%c0, %c0_0, %c0_1] : memref<4x17x48xf32, #tpu.memory_space<vmem>>, vector<1x17x48xf32>
    %2 = vector.shape_cast %1 : vector<1x17x48xf32> to vector<17x48xf32>
    %3 = vector.shape_cast %0 : vector<17x48xf32> to vector<1x17x48xf32>
    tpu.vector_store %arg9[%c0, %c0_0, %c0_1], %3 {strides = array<i32>} : memref<4x17x48xf32, #tpu.memory_space<vmem>>, vector<1x17x48xf32>,
    %cst_2 = arith.constant 0.000000e+00 : f32
    %4 = vector.broadcast %cst_2 : f32 to vector<17x48xf32>
    %c3 = arith.constant 3 : index
    %c0_3 = arith.constant 0 : index
    %c0_4 = arith.constant 0 : index
    %5 = vector.load %arg9[%c3, %c0_3, %c0_4] : memref<4x17x48xf32, #tpu.memory_space<vmem>>, vector<1x17x48xf32>
    %6 = vector.shape_cast %5 : vector<1x17x48xf32> to vector<17x48xf32>
    %7 = vector.shape_cast %4 : vector<17x48xf32> to vector<1x17x48xf32>
    tpu.vector_store %arg9[%c3, %c0_3, %c0_4], %7 {strides = array<i32>} : memref<4x17x48xf32, #tpu.memory_space<vmem>>, vector<1x17x48xf32>,
    %cst_5 = arith.constant 0.000000e+00 : f32
    %8 = vector.broadcast %cst_5 : f32 to vector<2x1x48xf32>
    %c1 = arith.constant 1 : index
    %c7 = arith.constant 7 : index
    %c0_6 = arith.constant 0 : index
    %9 = vector.load %arg9[%c1, %c7, %c0_6] : memref<4x17x48xf32, #tpu.memory_space<vmem>>, vector<2x1x48xf32>
    tpu.vector_store %arg9[%c1, %c7, %c0_6], %8 {strides = array<i32>} : memref<4x17x48xf32, #tpu.memory_space<vmem>>, vector<2x1x48xf32>,
    %cst_7 = arith.constant 0.000000e+00 : f32
    %10 = vector.broadcast %cst_7 : f32 to vector<2x7x48xf32>
    %c1_8 = arith.constant 1 : index
    %c10 = arith.constant 10 : index
    %c0_9 = arith.constant 0 : index
    %11 = vector.load %arg9[%c1_8, %c10, %c0_9] : memref<4x17x48xf32, #tpu.memory_space<vmem>>, vector<2x7x48xf32>
    tpu.vector_store %arg9[%c1_8, %c10, %c0_9], %10 {strides = array<i32>} : memref<4x17x48xf32, #tpu.memory_space<vmem>>, vector<2x7x48xf32>,
    %c0_10 = arith.constant 0 : index
    %c0_11 = arith.constant 0 : index
    %c0_12 = arith.constant 0 : index
    %c0_13 = arith.constant 0 : index
    %12 = vector.load %arg1[%c0_10, %c0_11, %c0_12, %c0_13] : memref<1x1x2x48xf32, #tpu.memory_space<vmem>>, vector<1x1x2x48xf32>
    %13 = vector.shape_cast %12 : vector<1x1x2x48xf32> to vector<2x48xf32>
    %c1_14 = arith.constant 1 : index
    %c8 = arith.constant 8 : index
    %c0_15 = arith.constant 0 : index
    %14 = vector.load %arg9[%c1_14, %c8, %c0_15] : memref<4x17x48xf32, #tpu.memory_space<vmem>>, vector<1x2x48xf32>
    %15 = vector.shape_cast %14 : vector<1x2x48xf32> to vector<2x48xf32>
    %16 = vector.shape_cast %13 : vector<2x48xf32> to vector<1x2x48xf32>
    tpu.vector_store %arg9[%c1_14, %c8, %c0_15], %16 {strides = array<i32>} : memref<4x17x48xf32, #tpu.memory_space<vmem>>, vector<1x2x48xf32>,
    %c2 = arith.constant 2 : index
    %c8_16 = arith.constant 8 : index
    %c0_17 = arith.constant 0 : index
    %17 = vector.load %arg9[%c2, %c8_16, %c0_17] : memref<4x17x48xf32, #tpu.memory_space<vmem>>, vector<1x2x48xf32>
    %18 = vector.shape_cast %17 : vector<1x2x48xf32> to vector<2x48xf32>
    %19 = vector.shape_cast %13 : vector<2x48xf32> to vector<1x2x48xf32>
    tpu.vector_store %arg9[%c2, %c8_16, %c0_17], %19 {strides = array<i32>} : memref<4x17x48xf32, #tpu.memory_space<vmem>>, vector<1x2x48xf32>,
    %c0_18 = arith.constant 0 : index
    %c7_19 = arith.constant 7 : index
    %c0_20 = arith.constant 0 : index
    %20 = vector.load %arg9[%c0_18, %c7_19, %c0_20] : memref<4x17x48xf32, #tpu.memory_space<vmem>>, vector<2x8x48xf32>
    %21 = vector.shape_cast %20 : vector<2x8x48xf32> to vector<16x48xf32>
    %22 = arith.truncf %21 : vector<16x48xf32> to vector<16x48xbf16>
    %c0_21 = arith.constant 0 : index
    %c0_22 = arith.constant 0 : index
    %c0_23 = arith.constant 0 : index
    %c0_24 = arith.constant 0 : index
    %23 = vector.load %arg3[%c0_21, %c0_22, %c0_23, %c0_24] : memref<3x3x48x32xbf16, #tpu.memory_space<vmem>>, vector<1x1x48x32xbf16>
    %24 = vector.shape_cast %23 : vector<1x1x48x32xbf16> to vector<48x32xbf16>
    %cst_25 = arith.constant dense<0.000000e+00> : vector<16x32xf32>
    %25 = tpu.matmul %22, %24, %cst_25 {dimension_numbers = #tpu.dot_dimension_numbers<[1], [0], [0], [1], [0, 0, 1, 1], [], []>} : vector<16x48xbf16>, vector<48x32xbf16>, vector<16x32xf32> -> vector<16x32xf32>
    %c0_26 = arith.constant 0 : index
    %c0_27 = arith.constant 0 : index
    %26 = vector.load %arg10[%c0_26, %c0_27] : memref<16x32xf32, #tpu.memory_space<vmem>>, vector<16x32xf32>
    tpu.vector_store %arg10[%c0_26, %c0_27], %25 {strides = array<i32>} : memref<16x32xf32, #tpu.memory_space<vmem>>, vector<16x32xf32>,
    %c0_28 = arith.constant 0 : index
    %c8_29 = arith.constant 8 : index
    %c0_30 = arith.constant 0 : index
    %27 = vector.load %arg9[%c0_28, %c8_29, %c0_30] : memref<4x17x48xf32, #tpu.memory_space<vmem>>, vector<2x8x48xf32>
    %28 = vector.shape_cast %27 : vector<2x8x48xf32> to vector<16x48xf32>
    %29 = arith.truncf %28 : vector<16x48xf32> to vector<16x48xbf16>
    %c0_31 = arith.constant 0 : index
    %c1_32 = arith.constant 1 : index
    %c0_33 = arith.constant 0 : index
    %c0_34 = arith.constant 0 : index
    %30 = vector.load %arg3[%c0_31, %c1_32, %c0_33, %c0_34] : memref<3x3x48x32xbf16, #tpu.memory_space<vmem>>, vector<1x1x48x32xbf16>
    %31 = vector.shape_cast %30 : vector<1x1x48x32xbf16> to vector<48x32xbf16>
    %cst_35 = arith.constant dense<0.000000e+00> : vector<16x32xf32>
    %32 = tpu.matmul %29, %31, %cst_35 {dimension_numbers = #tpu.dot_dimension_numbers<[1], [0], [0], [1], [0, 0, 1, 1], [], []>} : vector<16x48xbf16>, vector<48x32xbf16>, vector<16x32xf32> -> vector<16x32xf32>
    %c0_36 = arith.constant 0 : index
    %c0_37 = arith.constant 0 : index
    %33 = vector.load %arg10[%c0_36, %c0_37] : memref<16x32xf32, #tpu.memory_space<vmem>>, vector<16x32xf32>
    %34 = arith.addf %33, %32 : vector<16x32xf32>
    %c0_38 = arith.constant 0 : index
    %c0_39 = arith.constant 0 : index
    %35 = vector.load %arg10[%c0_38, %c0_39] : memref<16x32xf32, #tpu.memory_space<vmem>>, vector<16x32xf32>
    tpu.vector_store %arg10[%c0_38, %c0_39], %34 {strides = array<i32>} : memref<16x32xf32, #tpu.memory_space<vmem>>, vector<16x32xf32>,
    %c0_40 = arith.constant 0 : index
    %c9 = arith.constant 9 : index
    %c0_41 = arith.constant 0 : index
    %36 = vector.load %arg9[%c0_40, %c9, %c0_41] : memref<4x17x48xf32, #tpu.memory_space<vmem>>, vector<2x8x48xf32>
    %37 = vector.shape_cast %36 : vector<2x8x48xf32> to vector<16x48xf32>
    %38 = arith.truncf %37 : vector<16x48xf32> to vector<16x48xbf16>
    %c0_42 = arith.constant 0 : index
    %c2_43 = arith.constant 2 : index
    %c0_44 = arith.constant 0 : index
    %c0_45 = arith.constant 0 : index
    %39 = vector.load %arg3[%c0_42, %c2_43, %c0_44, %c0_45] : memref<3x3x48x32xbf16, #tpu.memory_space<vmem>>, vector<1x1x48x32xbf16>
    %40 = vector.shape_cast %39 : vector<1x1x48x32xbf16> to vector<48x32xbf16>
    %cst_46 = arith.constant dense<0.000000e+00> : vector<16x32xf32>
    %41 = tpu.matmul %38, %40, %cst_46 {dimension_numbers = #tpu.dot_dimension_numbers<[1], [0], [0], [1], [0, 0, 1, 1], [], []>} : vector<16x48xbf16>, vector<48x32xbf16>, vector<16x32xf32> -> vector<16x32xf32>
    %c0_47 = arith.constant 0 : index
    %c0_48 = arith.constant 0 : index
    %42 = vector.load %arg10[%c0_47, %c0_48] : memref<16x32xf32, #tpu.memory_space<vmem>>, vector<16x32xf32>
    %43 = arith.addf %42, %41 : vector<16x32xf32>
    %c0_49 = arith.constant 0 : index
    %c0_50 = arith.constant 0 : index
    %44 = vector.load %arg10[%c0_49, %c0_50] : memref<16x32xf32, #tpu.memory_space<vmem>>, vector<16x32xf32>
    tpu.vector_store %arg10[%c0_49, %c0_50], %43 {strides = array<i32>} : memref<16x32xf32, #tpu.memory_space<vmem>>, vector<16x32xf32>,
    %c1_51 = arith.constant 1 : index
    %c7_52 = arith.constant 7 : index
    %c0_53 = arith.constant 0 : index
    %45 = vector.load %arg9[%c1_51, %c7_52, %c0_53] : memref<4x17x48xf32, #tpu.memory_space<vmem>>, vector<2x8x48xf32>
    %46 = vector.shape_cast %45 : vector<2x8x48xf32> to vector<16x48xf32>
    %47 = arith.truncf %46 : vector<16x48xf32> to vector<16x48xbf16>
    %c1_54 = arith.constant 1 : index
    %c0_55 = arith.constant 0 : index
    %c0_56 = arith.constant 0 : index
    %c0_57 = arith.constant 0 : index
    %48 = vector.load %arg3[%c1_54, %c0_55, %c0_56, %c0_57] : memref<3x3x48x32xbf16, #tpu.memory_space<vmem>>, vector<1x1x48x32xbf16>
    %49 = vector.shape_cast %48 : vector<1x1x48x32xbf16> to vector<48x32xbf16>
    %cst_58 = arith.constant dense<0.000000e+00> : vector<16x32xf32>
    %50 = tpu.matmul %47, %49, %cst_58 {dimension_numbers = #tpu.dot_dimension_numbers<[1], [0], [0], [1], [0, 0, 1, 1], [], []>} : vector<16x48xbf16>, vector<48x32xbf16>, vector<16x32xf32> -> vector<16x32xf32>
    %c0_59 = arith.constant 0 : index
    %c0_60 = arith.constant 0 : index
    %51 = vector.load %arg10[%c0_59, %c0_60] : memref<16x32xf32, #tpu.memory_space<vmem>>, vector<16x32xf32>
    %52 = arith.addf %51, %50 : vector<16x32xf32>
    %c0_61 = arith.constant 0 : index
    %c0_62 = arith.constant 0 : index
    %53 = vector.load %arg10[%c0_61, %c0_62] : memref<16x32xf32, #tpu.memory_space<vmem>>, vector<16x32xf32>
    tpu.vector_store %arg10[%c0_61, %c0_62], %52 {strides = array<i32>} : memref<16x32xf32, #tpu.memory_space<vmem>>, vector<16x32xf32>,
    %c1_63 = arith.constant 1 : index
    %c8_64 = arith.constant 8 : index
    %c0_65 = arith.constant 0 : index
    %54 = vector.load %arg9[%c1_63, %c8_64, %c0_65] : memref<4x17x48xf32, #tpu.memory_space<vmem>>, vector<2x8x48xf32>
    %55 = vector.shape_cast %54 : vector<2x8x48xf32> to vector<16x48xf32>
    %56 = arith.truncf %55 : vector<16x48xf32> to vector<16x48xbf16>
    %c1_66 = arith.constant 1 : index
    %c1_67 = arith.constant 1 : index
    %c0_68 = arith.constant 0 : index
    %c0_69 = arith.constant 0 : index
    %57 = vector.load %arg3[%c1_66, %c1_67, %c0_68, %c0_69] : memref<3x3x48x32xbf16, #tpu.memory_space<vmem>>, vector<1x1x48x32xbf16>
    %58 = vector.shape_cast %57 : vector<1x1x48x32xbf16> to vector<48x32xbf16>
    %cst_70 = arith.constant dense<0.000000e+00> : vector<16x32xf32>
    %59 = tpu.matmul %56, %58, %cst_70 {dimension_numbers = #tpu.dot_dimension_numbers<[1], [0], [0], [1], [0, 0, 1, 1], [], []>} : vector<16x48xbf16>, vector<48x32xbf16>, vector<16x32xf32> -> vector<16x32xf32>
    %c0_71 = arith.constant 0 : index
    %c0_72 = arith.constant 0 : index
    %60 = vector.load %arg10[%c0_71, %c0_72] : memref<16x32xf32, #tpu.memory_space<vmem>>, vector<16x32xf32>
    %61 = arith.addf %60, %59 : vector<16x32xf32>
    %c0_73 = arith.constant 0 : index
    %c0_74 = arith.constant 0 : index
    %62 = vector.load %arg10[%c0_73, %c0_74] : memref<16x32xf32, #tpu.memory_space<vmem>>, vector<16x32xf32>
    tpu.vector_store %arg10[%c0_73, %c0_74], %61 {strides = array<i32>} : memref<16x32xf32, #tpu.memory_space<vmem>>, vector<16x32xf32>,
    %c1_75 = arith.constant 1 : index
    %c9_76 = arith.constant 9 : index
    %c0_77 = arith.constant 0 : index
    %63 = vector.load %arg9[%c1_75, %c9_76, %c0_77] : memref<4x17x48xf32, #tpu.memory_space<vmem>>, vector<2x8x48xf32>
    %64 = vector.shape_cast %63 : vector<2x8x48xf32> to vector<16x48xf32>
    %65 = arith.truncf %64 : vector<16x48xf32> to vector<16x48xbf16>
    %c1_78 = arith.constant 1 : index
    %c2_79 = arith.constant 2 : index
    %c0_80 = arith.constant 0 : index
    %c0_81 = arith.constant 0 : index
    %66 = vector.load %arg3[%c1_78, %c2_79, %c0_80, %c0_81] : memref<3x3x48x32xbf16, #tpu.memory_space<vmem>>, vector<1x1x48x32xbf16>
    %67 = vector.shape_cast %66 : vector<1x1x48x32xbf16> to vector<48x32xbf16>
    %cst_82 = arith.constant dense<0.000000e+00> : vector<16x32xf32>
    %68 = tpu.matmul %65, %67, %cst_82 {dimension_numbers = #tpu.dot_dimension_numbers<[1], [0], [0], [1], [0, 0, 1, 1], [], []>} : vector<16x48xbf16>, vector<48x32xbf16>, vector<16x32xf32> -> vector<16x32xf32>
    %c0_83 = arith.constant 0 : index
    %c0_84 = arith.constant 0 : index
    %69 = vector.load %arg10[%c0_83, %c0_84] : memref<16x32xf32, #tpu.memory_space<vmem>>, vector<16x32xf32>
    %70 = arith.addf %69, %68 : vector<16x32xf32>
    %c0_85 = arith.constant 0 : index
    %c0_86 = arith.constant 0 : index
    %71 = vector.load %arg10[%c0_85, %c0_86] : memref<16x32xf32, #tpu.memory_space<vmem>>, vector<16x32xf32>
    tpu.vector_store %arg10[%c0_85, %c0_86], %70 {strides = array<i32>} : memref<16x32xf32, #tpu.memory_space<vmem>>, vector<16x32xf32>,
    %c2_87 = arith.constant 2 : index
    %c7_88 = arith.constant 7 : index
    %c0_89 = arith.constant 0 : index
    %72 = vector.load %arg9[%c2_87, %c7_88, %c0_89] : memref<4x17x48xf32, #tpu.memory_space<vmem>>, vector<2x8x48xf32>
    %73 = vector.shape_cast %72 : vector<2x8x48xf32> to vector<16x48xf32>
    %74 = arith.truncf %73 : vector<16x48xf32> to vector<16x48xbf16>
    %c2_90 = arith.constant 2 : index
    %c0_91 = arith.constant 0 : index
    %c0_92 = arith.constant 0 : index
    %c0_93 = arith.constant 0 : index
    %75 = vector.load %arg3[%c2_90, %c0_91, %c0_92, %c0_93] : memref<3x3x48x32xbf16, #tpu.memory_space<vmem>>, vector<1x1x48x32xbf16>
    %76 = vector.shape_cast %75 : vector<1x1x48x32xbf16> to vector<48x32xbf16>
    %cst_94 = arith.constant dense<0.000000e+00> : vector<16x32xf32>
    %77 = tpu.matmul %74, %76, %cst_94 {dimension_numbers = #tpu.dot_dimension_numbers<[1], [0], [0], [1], [0, 0, 1, 1], [], []>} : vector<16x48xbf16>, vector<48x32xbf16>, vector<16x32xf32> -> vector<16x32xf32>
    %c0_95 = arith.constant 0 : index
    %c0_96 = arith.constant 0 : index
    %78 = vector.load %arg10[%c0_95, %c0_96] : memref<16x32xf32, #tpu.memory_space<vmem>>, vector<16x32xf32>
    %79 = arith.addf %78, %77 : vector<16x32xf32>
    %c0_97 = arith.constant 0 : index
    %c0_98 = arith.constant 0 : index
    %80 = vector.load %arg10[%c0_97, %c0_98] : memref<16x32xf32, #tpu.memory_space<vmem>>, vector<16x32xf32>
    tpu.vector_store %arg10[%c0_97, %c0_98], %79 {strides = array<i32>} : memref<16x32xf32, #tpu.memory_space<vmem>>, vector<16x32xf32>,
    %c2_99 = arith.constant 2 : index
    %c8_100 = arith.constant 8 : index
    %c0_101 = arith.constant 0 : index
    %81 = vector.load %arg9[%c2_99, %c8_100, %c0_101] : memref<4x17x48xf32, #tpu.memory_space<vmem>>, vector<2x8x48xf32>
    %82 = vector.shape_cast %81 : vector<2x8x48xf32> to vector<16x48xf32>
    %83 = arith.truncf %82 : vector<16x48xf32> to vector<16x48xbf16>
    %c2_102 = arith.constant 2 : index
    %c1_103 = arith.constant 1 : index
    %c0_104 = arith.constant 0 : index
    %c0_105 = arith.constant 0 : index
    %84 = vector.load %arg3[%c2_102, %c1_103, %c0_104, %c0_105] : memref<3x3x48x32xbf16, #tpu.memory_space<vmem>>, vector<1x1x48x32xbf16>
    %85 = vector.shape_cast %84 : vector<1x1x48x32xbf16> to vector<48x32xbf16>
    %cst_106 = arith.constant dense<0.000000e+00> : vector<16x32xf32>
    %86 = tpu.matmul %83, %85, %cst_106 {dimension_numbers = #tpu.dot_dimension_numbers<[1], [0], [0], [1], [0, 0, 1, 1], [], []>} : vector<16x48xbf16>, vector<48x32xbf16>, vector<16x32xf32> -> vector<16x32xf32>
    %c0_107 = arith.constant 0 : index
    %c0_108 = arith.constant 0 : index
    %87 = vector.load %arg10[%c0_107, %c0_108] : memref<16x32xf32, #tpu.memory_space<vmem>>, vector<16x32xf32>
    %88 = arith.addf %87, %86 : vector<16x32xf32>
    %c0_109 = arith.constant 0 : index
    %c0_110 = arith.constant 0 : index
    %89 = vector.load %arg10[%c0_109, %c0_110] : memref<16x32xf32, #tpu.memory_space<vmem>>, vector<16x32xf32>
    tpu.vector_store %arg10[%c0_109, %c0_110], %88 {strides = array<i32>} : memref<16x32xf32, #tpu.memory_space<vmem>>, vector<16x32xf32>,
    %c2_111 = arith.constant 2 : index
    %c9_112 = arith.constant 9 : index
    %c0_113 = arith.constant 0 : index
    %90 = vector.load %arg9[%c2_111, %c9_112, %c0_113] : memref<4x17x48xf32, #tpu.memory_space<vmem>>, vector<2x8x48xf32>
    %91 = vector.shape_cast %90 : vector<2x8x48xf32> to vector<16x48xf32>
    %92 = arith.truncf %91 : vector<16x48xf32> to vector<16x48xbf16>
    %c2_114 = arith.constant 2 : index
    %c2_115 = arith.constant 2 : index
    %c0_116 = arith.constant 0 : index
    %c0_117 = arith.constant 0 : index
    %93 = vector.load %arg3[%c2_114, %c2_115, %c0_116, %c0_117] : memref<3x3x48x32xbf16, #tpu.memory_space<vmem>>, vector<1x1x48x32xbf16>
    %94 = vector.shape_cast %93 : vector<1x1x48x32xbf16> to vector<48x32xbf16>
    %cst_118 = arith.constant dense<0.000000e+00> : vector<16x32xf32>
    %95 = tpu.matmul %92, %94, %cst_118 {dimension_numbers = #tpu.dot_dimension_numbers<[1], [0], [0], [1], [0, 0, 1, 1], [], []>} : vector<16x48xbf16>, vector<48x32xbf16>, vector<16x32xf32> -> vector<16x32xf32>
    %c0_119 = arith.constant 0 : index
    %c0_120 = arith.constant 0 : index
    %96 = vector.load %arg10[%c0_119, %c0_120] : memref<16x32xf32, #tpu.memory_space<vmem>>, vector<16x32xf32>
    %97 = arith.addf %96, %95 : vector<16x32xf32>
    %c0_121 = arith.constant 0 : index
    %c0_122 = arith.constant 0 : index
    %98 = vector.load %arg10[%c0_121, %c0_122] : memref<16x32xf32, #tpu.memory_space<vmem>>, vector<16x32xf32>
    tpu.vector_store %arg10[%c0_121, %c0_122], %97 {strides = array<i32>} : memref<16x32xf32, #tpu.memory_space<vmem>>, vector<16x32xf32>,
    %c0_123 = arith.constant 0 : index
    %c0_124 = arith.constant 0 : index
    %c0_125 = arith.constant 0 : index
    %c0_126 = arith.constant 0 : index
    %99 = vector.load %arg2[%c0_123, %c0_124, %c0_125, %c0_126] : memref<1x2x2x32xf32, #tpu.memory_space<vmem>>, vector<1x2x2x32xf32>
    %100 = vector.shape_cast %99 : vector<1x2x2x32xf32> to vector<2x2x32xf32>
    %c1_127 = arith.constant 1 : index
    %c8_128 = arith.constant 8 : index
    %c0_129 = arith.constant 0 : index
    %101 = vector.load %arg9[%c1_127, %c8_128, %c0_129] : memref<4x17x48xf32, #tpu.memory_space<vmem>>, vector<2x2x32xf32>
    tpu.vector_store %arg9[%c1_127, %c8_128, %c0_129], %100 {strides = array<i32>} : memref<4x17x48xf32, #tpu.memory_space<vmem>>, vector<2x2x32xf32>,
    %c0_130 = arith.constant 0 : index
    %c7_131 = arith.constant 7 : index
    %c0_132 = arith.constant 0 : index
    %102 = vector.load %arg9[%c0_130, %c7_131, %c0_132] : memref<4x17x48xf32, #tpu.memory_space<vmem>>, vector<2x8x32xf32>
    %103 = vector.shape_cast %102 : vector<2x8x32xf32> to vector<16x32xf32>
    %104 = arith.truncf %103 : vector<16x32xf32> to vector<16x32xbf16>
    %c0_133 = arith.constant 0 : index
    %c0_134 = arith.constant 0 : index
    %c0_135 = arith.constant 0 : index
    %c0_136 = arith.constant 0 : index
    %105 = vector.load %arg4[%c0_133, %c0_134, %c0_135, %c0_136] : memref<3x3x32x32xbf16, #tpu.memory_space<vmem>>, vector<1x1x32x32xbf16>
    %106 = vector.shape_cast %105 : vector<1x1x32x32xbf16> to vector<32x32xbf16>
    %cst_137 = arith.constant dense<0.000000e+00> : vector<16x32xf32>
    %107 = tpu.matmul %104, %106, %cst_137 {dimension_numbers = #tpu.dot_dimension_numbers<[1], [0], [0], [1], [0, 0, 1, 1], [], []>} : vector<16x32xbf16>, vector<32x32xbf16>, vector<16x32xf32> -> vector<16x32xf32>
    %c0_138 = arith.constant 0 : index
    %c0_139 = arith.constant 0 : index
    %108 = vector.load %arg10[%c0_138, %c0_139] : memref<16x32xf32, #tpu.memory_space<vmem>>, vector<16x32xf32>
    %109 = arith.addf %108, %107 : vector<16x32xf32>
    %c0_140 = arith.constant 0 : index
    %c0_141 = arith.constant 0 : index
    %110 = vector.load %arg10[%c0_140, %c0_141] : memref<16x32xf32, #tpu.memory_space<vmem>>, vector<16x32xf32>
    tpu.vector_store %arg10[%c0_140, %c0_141], %109 {strides = array<i32>} : memref<16x32xf32, #tpu.memory_space<vmem>>, vector<16x32xf32>,
    %c0_142 = arith.constant 0 : index
    %c8_143 = arith.constant 8 : index
    %c0_144 = arith.constant 0 : index
    %111 = vector.load %arg9[%c0_142, %c8_143, %c0_144] : memref<4x17x48xf32, #tpu.memory_space<vmem>>, vector<2x8x32xf32>
    %112 = vector.shape_cast %111 : vector<2x8x32xf32> to vector<16x32xf32>
    %113 = arith.truncf %112 : vector<16x32xf32> to vector<16x32xbf16>
    %c0_145 = arith.constant 0 : index
    %c1_146 = arith.constant 1 : index
    %c0_147 = arith.constant 0 : index
    %c0_148 = arith.constant 0 : index
    %114 = vector.load %arg4[%c0_145, %c1_146, %c0_147, %c0_148] : memref<3x3x32x32xbf16, #tpu.memory_space<vmem>>, vector<1x1x32x32xbf16>
    %115 = vector.shape_cast %114 : vector<1x1x32x32xbf16> to vector<32x32xbf16>
    %cst_149 = arith.constant dense<0.000000e+00> : vector<16x32xf32>
    %116 = tpu.matmul %113, %115, %cst_149 {dimension_numbers = #tpu.dot_dimension_numbers<[1], [0], [0], [1], [0, 0, 1, 1], [], []>} : vector<16x32xbf16>, vector<32x32xbf16>, vector<16x32xf32> -> vector<16x32xf32>
    %c0_150 = arith.constant 0 : index
    %c0_151 = arith.constant 0 : index
    %117 = vector.load %arg10[%c0_150, %c0_151] : memref<16x32xf32, #tpu.memory_space<vmem>>, vector<16x32xf32>
    %118 = arith.addf %117, %116 : vector<16x32xf32>
    %c0_152 = arith.constant 0 : index
    %c0_153 = arith.constant 0 : index
    %119 = vector.load %arg10[%c0_152, %c0_153] : memref<16x32xf32, #tpu.memory_space<vmem>>, vector<16x32xf32>
    tpu.vector_store %arg10[%c0_152, %c0_153], %118 {strides = array<i32>} : memref<16x32xf32, #tpu.memory_space<vmem>>, vector<16x32xf32>,
    %c0_154 = arith.constant 0 : index
    %c9_155 = arith.constant 9 : index
    %c0_156 = arith.constant 0 : index
    %120 = vector.load %arg9[%c0_154, %c9_155, %c0_156] : memref<4x17x48xf32, #tpu.memory_space<vmem>>, vector<2x8x32xf32>
    %121 = vector.shape_cast %120 : vector<2x8x32xf32> to vector<16x32xf32>
    %122 = arith.truncf %121 : vector<16x32xf32> to vector<16x32xbf16>
    %c0_157 = arith.constant 0 : index
    %c2_158 = arith.constant 2 : index
    %c0_159 = arith.constant 0 : index
    %c0_160 = arith.constant 0 : index
    %123 = vector.load %arg4[%c0_157, %c2_158, %c0_159, %c0_160] : memref<3x3x32x32xbf16, #tpu.memory_space<vmem>>, vector<1x1x32x32xbf16>
    %124 = vector.shape_cast %123 : vector<1x1x32x32xbf16> to vector<32x32xbf16>
    %cst_161 = arith.constant dense<0.000000e+00> : vector<16x32xf32>
    %125 = tpu.matmul %122, %124, %cst_161 {dimension_numbers = #tpu.dot_dimension_numbers<[1], [0], [0], [1], [0, 0, 1, 1], [], []>} : vector<16x32xbf16>, vector<32x32xbf16>, vector<16x32xf32> -> vector<16x32xf32>
    %c0_162 = arith.constant 0 : index
    %c0_163 = arith.constant 0 : index
    %126 = vector.load %arg10[%c0_162, %c0_163] : memref<16x32xf32, #tpu.memory_space<vmem>>, vector<16x32xf32>
    %127 = arith.addf %126, %125 : vector<16x32xf32>
    %c0_164 = arith.constant 0 : index
    %c0_165 = arith.constant 0 : index
    %128 = vector.load %arg10[%c0_164, %c0_165] : memref<16x32xf32, #tpu.memory_space<vmem>>, vector<16x32xf32>
    tpu.vector_store %arg10[%c0_164, %c0_165], %127 {strides = array<i32>} : memref<16x32xf32, #tpu.memory_space<vmem>>, vector<16x32xf32>,
    %c1_166 = arith.constant 1 : index
    %c7_167 = arith.constant 7 : index
    %c0_168 = arith.constant 0 : index
    %129 = vector.load %arg9[%c1_166, %c7_167, %c0_168] : memref<4x17x48xf32, #tpu.memory_space<vmem>>, vector<2x8x32xf32>
    %130 = vector.shape_cast %129 : vector<2x8x32xf32> to vector<16x32xf32>
    %131 = arith.truncf %130 : vector<16x32xf32> to vector<16x32xbf16>
    %c1_169 = arith.constant 1 : index
    %c0_170 = arith.constant 0 : index
    %c0_171 = arith.constant 0 : index
    %c0_172 = arith.constant 0 : index
    %132 = vector.load %arg4[%c1_169, %c0_170, %c0_171, %c0_172] : memref<3x3x32x32xbf16, #tpu.memory_space<vmem>>, vector<1x1x32x32xbf16>
    %133 = vector.shape_cast %132 : vector<1x1x32x32xbf16> to vector<32x32xbf16>
    %cst_173 = arith.constant dense<0.000000e+00> : vector<16x32xf32>
    %134 = tpu.matmul %131, %133, %cst_173 {dimension_numbers = #tpu.dot_dimension_numbers<[1], [0], [0], [1], [0, 0, 1, 1], [], []>} : vector<16x32xbf16>, vector<32x32xbf16>, vector<16x32xf32> -> vector<16x32xf32>
    %c0_174 = arith.constant 0 : index
    %c0_175 = arith.constant 0 : index
    %135 = vector.load %arg10[%c0_174, %c0_175] : memref<16x32xf32, #tpu.memory_space<vmem>>, vector<16x32xf32>
    %136 = arith.addf %135, %134 : vector<16x32xf32>
    %c0_176 = arith.constant 0 : index
    %c0_177 = arith.constant 0 : index
    %137 = vector.load %arg10[%c0_176, %c0_177] : memref<16x32xf32, #tpu.memory_space<vmem>>, vector<16x32xf32>
    tpu.vector_store %arg10[%c0_176, %c0_177], %136 {strides = array<i32>} : memref<16x32xf32, #tpu.memory_space<vmem>>, vector<16x32xf32>,
    %c1_178 = arith.constant 1 : index
    %c8_179 = arith.constant 8 : index
    %c0_180 = arith.constant 0 : index
    %138 = vector.load %arg9[%c1_178, %c8_179, %c0_180] : memref<4x17x48xf32, #tpu.memory_space<vmem>>, vector<2x8x32xf32>
    %139 = vector.shape_cast %138 : vector<2x8x32xf32> to vector<16x32xf32>
    %140 = arith.truncf %139 : vector<16x32xf32> to vector<16x32xbf16>
    %c1_181 = arith.constant 1 : index
    %c1_182 = arith.constant 1 : index
    %c0_183 = arith.constant 0 : index
    %c0_184 = arith.constant 0 : index
    %141 = vector.load %arg4[%c1_181, %c1_182, %c0_183, %c0_184] : memref<3x3x32x32xbf16, #tpu.memory_space<vmem>>, vector<1x1x32x32xbf16>
    %142 = vector.shape_cast %141 : vector<1x1x32x32xbf16> to vector<32x32xbf16>
    %cst_185 = arith.constant dense<0.000000e+00> : vector<16x32xf32>
    %143 = tpu.matmul %140, %142, %cst_185 {dimension_numbers = #tpu.dot_dimension_numbers<[1], [0], [0], [1], [0, 0, 1, 1], [], []>} : vector<16x32xbf16>, vector<32x32xbf16>, vector<16x32xf32> -> vector<16x32xf32>
    %c0_186 = arith.constant 0 : index
    %c0_187 = arith.constant 0 : index
    %144 = vector.load %arg10[%c0_186, %c0_187] : memref<16x32xf32, #tpu.memory_space<vmem>>, vector<16x32xf32>
    %145 = arith.addf %144, %143 : vector<16x32xf32>
    %c0_188 = arith.constant 0 : index
    %c0_189 = arith.constant 0 : index
    %146 = vector.load %arg10[%c0_188, %c0_189] : memref<16x32xf32, #tpu.memory_space<vmem>>, vector<16x32xf32>
    tpu.vector_store %arg10[%c0_188, %c0_189], %145 {strides = array<i32>} : memref<16x32xf32, #tpu.memory_space<vmem>>, vector<16x32xf32>,
    %c1_190 = arith.constant 1 : index
    %c9_191 = arith.constant 9 : index
    %c0_192 = arith.constant 0 : index
    %147 = vector.load %arg9[%c1_190, %c9_191, %c0_192] : memref<4x17x48xf32, #tpu.memory_space<vmem>>, vector<2x8x32xf32>
    %148 = vector.shape_cast %147 : vector<2x8x32xf32> to vector<16x32xf32>
    %149 = arith.truncf %148 : vector<16x32xf32> to vector<16x32xbf16>
    %c1_193 = arith.constant 1 : index
    %c2_194 = arith.constant 2 : index
    %c0_195 = arith.constant 0 : index
    %c0_196 = arith.constant 0 : index
    %150 = vector.load %arg4[%c1_193, %c2_194, %c0_195, %c0_196] : memref<3x3x32x32xbf16, #tpu.memory_space<vmem>>, vector<1x1x32x32xbf16>
    %151 = vector.shape_cast %150 : vector<1x1x32x32xbf16> to vector<32x32xbf16>
    %cst_197 = arith.constant dense<0.000000e+00> : vector<16x32xf32>
    %152 = tpu.matmul %149, %151, %cst_197 {dimension_numbers = #tpu.dot_dimension_numbers<[1], [0], [0], [1], [0, 0, 1, 1], [], []>} : vector<16x32xbf16>, vector<32x32xbf16>, vector<16x32xf32> -> vector<16x32xf32>
    %c0_198 = arith.constant 0 : index
    %c0_199 = arith.constant 0 : index
    %153 = vector.load %arg10[%c0_198, %c0_199] : memref<16x32xf32, #tpu.memory_space<vmem>>, vector<16x32xf32>
    %154 = arith.addf %153, %152 : vector<16x32xf32>
    %c0_200 = arith.constant 0 : index
    %c0_201 = arith.constant 0 : index
    %155 = vector.load %arg10[%c0_200, %c0_201] : memref<16x32xf32, #tpu.memory_space<vmem>>, vector<16x32xf32>
    tpu.vector_store %arg10[%c0_200, %c0_201], %154 {strides = array<i32>} : memref<16x32xf32, #tpu.memory_space<vmem>>, vector<16x32xf32>,
    %c2_202 = arith.constant 2 : index
    %c7_203 = arith.constant 7 : index
    %c0_204 = arith.constant 0 : index
    %156 = vector.load %arg9[%c2_202, %c7_203, %c0_204] : memref<4x17x48xf32, #tpu.memory_space<vmem>>, vector<2x8x32xf32>
    %157 = vector.shape_cast %156 : vector<2x8x32xf32> to vector<16x32xf32>
    %158 = arith.truncf %157 : vector<16x32xf32> to vector<16x32xbf16>
    %c2_205 = arith.constant 2 : index
    %c0_206 = arith.constant 0 : index
    %c0_207 = arith.constant 0 : index
    %c0_208 = arith.constant 0 : index
    %159 = vector.load %arg4[%c2_205, %c0_206, %c0_207, %c0_208] : memref<3x3x32x32xbf16, #tpu.memory_space<vmem>>, vector<1x1x32x32xbf16>
    %160 = vector.shape_cast %159 : vector<1x1x32x32xbf16> to vector<32x32xbf16>
    %cst_209 = arith.constant dense<0.000000e+00> : vector<16x32xf32>
    %161 = tpu.matmul %158, %160, %cst_209 {dimension_numbers = #tpu.dot_dimension_numbers<[1], [0], [0], [1], [0, 0, 1, 1], [], []>} : vector<16x32xbf16>, vector<32x32xbf16>, vector<16x32xf32> -> vector<16x32xf32>
    %c0_210 = arith.constant 0 : index
    %c0_211 = arith.constant 0 : index
    %162 = vector.load %arg10[%c0_210, %c0_211] : memref<16x32xf32, #tpu.memory_space<vmem>>, vector<16x32xf32>
    %163 = arith.addf %162, %161 : vector<16x32xf32>
    %c0_212 = arith.constant 0 : index
    %c0_213 = arith.constant 0 : index
    %164 = vector.load %arg10[%c0_212, %c0_213] : memref<16x32xf32, #tpu.memory_space<vmem>>, vector<16x32xf32>
    tpu.vector_store %arg10[%c0_212, %c0_213], %163 {strides = array<i32>} : memref<16x32xf32, #tpu.memory_space<vmem>>, vector<16x32xf32>,
    %c2_214 = arith.constant 2 : index
    %c8_215 = arith.constant 8 : index
    %c0_216 = arith.constant 0 : index
    %165 = vector.load %arg9[%c2_214, %c8_215, %c0_216] : memref<4x17x48xf32, #tpu.memory_space<vmem>>, vector<2x8x32xf32>
    %166 = vector.shape_cast %165 : vector<2x8x32xf32> to vector<16x32xf32>
    %167 = arith.truncf %166 : vector<16x32xf32> to vector<16x32xbf16>
    %c2_217 = arith.constant 2 : index
    %c1_218 = arith.constant 1 : index
    %c0_219 = arith.constant 0 : index
    %c0_220 = arith.constant 0 : index
    %168 = vector.load %arg4[%c2_217, %c1_218, %c0_219, %c0_220] : memref<3x3x32x32xbf16, #tpu.memory_space<vmem>>, vector<1x1x32x32xbf16>
    %169 = vector.shape_cast %168 : vector<1x1x32x32xbf16> to vector<32x32xbf16>
    %cst_221 = arith.constant dense<0.000000e+00> : vector<16x32xf32>
    %170 = tpu.matmul %167, %169, %cst_221 {dimension_numbers = #tpu.dot_dimension_numbers<[1], [0], [0], [1], [0, 0, 1, 1], [], []>} : vector<16x32xbf16>, vector<32x32xbf16>, vector<16x32xf32> -> vector<16x32xf32>
    %c0_222 = arith.constant 0 : index
    %c0_223 = arith.constant 0 : index
    %171 = vector.load %arg10[%c0_222, %c0_223] : memref<16x32xf32, #tpu.memory_space<vmem>>, vector<16x32xf32>
    %172 = arith.addf %171, %170 : vector<16x32xf32>
    %c0_224 = arith.constant 0 : index
    %c0_225 = arith.constant 0 : index
    %173 = vector.load %arg10[%c0_224, %c0_225] : memref<16x32xf32, #tpu.memory_space<vmem>>, vector<16x32xf32>
    tpu.vector_store %arg10[%c0_224, %c0_225], %172 {strides = array<i32>} : memref<16x32xf32, #tpu.memory_space<vmem>>, vector<16x32xf32>,
    %c2_226 = arith.constant 2 : index
    %c9_227 = arith.constant 9 : index
    %c0_228 = arith.constant 0 : index
    %174 = vector.load %arg9[%c2_226, %c9_227, %c0_228] : memref<4x17x48xf32, #tpu.memory_space<vmem>>, vector<2x8x32xf32>
    %175 = vector.shape_cast %174 : vector<2x8x32xf32> to vector<16x32xf32>
    %176 = arith.truncf %175 : vector<16x32xf32> to vector<16x32xbf16>
    %c2_229 = arith.constant 2 : index
    %c2_230 = arith.constant 2 : index
    %c0_231 = arith.constant 0 : index
    %c0_232 = arith.constant 0 : index
    %177 = vector.load %arg4[%c2_229, %c2_230, %c0_231, %c0_232] : memref<3x3x32x32xbf16, #tpu.memory_space<vmem>>, vector<1x1x32x32xbf16>
    %178 = vector.shape_cast %177 : vector<1x1x32x32xbf16> to vector<32x32xbf16>
    %cst_233 = arith.constant dense<0.000000e+00> : vector<16x32xf32>
    %179 = tpu.matmul %176, %178, %cst_233 {dimension_numbers = #tpu.dot_dimension_numbers<[1], [0], [0], [1], [0, 0, 1, 1], [], []>} : vector<16x32xbf16>, vector<32x32xbf16>, vector<16x32xf32> -> vector<16x32xf32>
    %c0_234 = arith.constant 0 : index
    %c0_235 = arith.constant 0 : index
    %180 = vector.load %arg10[%c0_234, %c0_235] : memref<16x32xf32, #tpu.memory_space<vmem>>, vector<16x32xf32>
    %181 = arith.addf %180, %179 : vector<16x32xf32>
    %c0_236 = arith.constant 0 : index
    %c0_237 = arith.constant 0 : index
    %182 = vector.load %arg10[%c0_236, %c0_237] : memref<16x32xf32, #tpu.memory_space<vmem>>, vector<16x32xf32>
    tpu.vector_store %arg10[%c0_236, %c0_237], %181 {strides = array<i32>} : memref<16x32xf32, #tpu.memory_space<vmem>>, vector<16x32xf32>,
    %c0_238 = arith.constant 0 : index
    %c0_239 = arith.constant 0 : index
    %183 = vector.load %arg10[%c0_238, %c0_239] : memref<16x32xf32, #tpu.memory_space<vmem>>, vector<16x32xf32>
    %c0_240 = arith.constant 0 : index
    %c0_241 = arith.constant 0 : index
    %184 = vector.load %arg5[%c0_240, %c0_241] : memref<1x32xf32, #tpu.memory_space<vmem>>, vector<1x32xf32>
    %185 = vector.broadcast %184 : vector<1x32xf32> to vector<16x32xf32>
    %186 = arith.addf %183, %185 : vector<16x32xf32>
    %cst_242 = arith.constant 0.000000e+00 : f32
    %187 = vector.broadcast %cst_242 : f32 to vector<16x32xf32>
    %188 = arith.maximumf %186, %187 : vector<16x32xf32>
    %189 = vector.shape_cast %188 : vector<16x32xf32> to vector<2x8x32xf32>
    %190 = vector.extract_strided_slice %189 {offsets = [0, 0, 0], sizes = [2, 2, 32], strides = [1, 1, 1]} : vector<2x8x32xf32> to vector<2x2x32xf32>
    %c1_243 = arith.constant 1 : index
    %c8_244 = arith.constant 8 : index
    %c0_245 = arith.constant 0 : index
    %191 = vector.load %arg9[%c1_243, %c8_244, %c0_245] : memref<4x17x48xf32, #tpu.memory_space<vmem>>, vector<2x2x32xf32>
    tpu.vector_store %arg9[%c1_243, %c8_244, %c0_245], %190 {strides = array<i32>} : memref<4x17x48xf32, #tpu.memory_space<vmem>>, vector<2x2x32xf32>,
    %c0_246 = arith.constant 0 : index
    %c7_247 = arith.constant 7 : index
    %c0_248 = arith.constant 0 : index
    %192 = vector.load %arg9[%c0_246, %c7_247, %c0_248] : memref<4x17x48xf32, #tpu.memory_space<vmem>>, vector<2x8x32xf32>
    %193 = vector.shape_cast %192 : vector<2x8x32xf32> to vector<16x32xf32>
    %194 = arith.truncf %193 : vector<16x32xf32> to vector<16x32xbf16>
    %c0_249 = arith.constant 0 : index
    %c0_250 = arith.constant 0 : index
    %c0_251 = arith.constant 0 : index
    %c0_252 = arith.constant 0 : index
    %195 = vector.load %arg6[%c0_249, %c0_250, %c0_251, %c0_252] : memref<3x3x32x32xbf16, #tpu.memory_space<vmem>>, vector<1x1x32x32xbf16>
    %196 = vector.shape_cast %195 : vector<1x1x32x32xbf16> to vector<32x32xbf16>
    %cst_253 = arith.constant dense<0.000000e+00> : vector<16x32xf32>
    %197 = tpu.matmul %194, %196, %cst_253 {dimension_numbers = #tpu.dot_dimension_numbers<[1], [0], [0], [1], [0, 0, 1, 1], [], []>} : vector<16x32xbf16>, vector<32x32xbf16>, vector<16x32xf32> -> vector<16x32xf32>
    %c0_254 = arith.constant 0 : index
    %c0_255 = arith.constant 0 : index
    %198 = vector.load %arg10[%c0_254, %c0_255] : memref<16x32xf32, #tpu.memory_space<vmem>>, vector<16x32xf32>
    tpu.vector_store %arg10[%c0_254, %c0_255], %197 {strides = array<i32>} : memref<16x32xf32, #tpu.memory_space<vmem>>, vector<16x32xf32>,
    %c0_256 = arith.constant 0 : index
    %c8_257 = arith.constant 8 : index
    %c0_258 = arith.constant 0 : index
    %199 = vector.load %arg9[%c0_256, %c8_257, %c0_258] : memref<4x17x48xf32, #tpu.memory_space<vmem>>, vector<2x8x32xf32>
    %200 = vector.shape_cast %199 : vector<2x8x32xf32> to vector<16x32xf32>
    %201 = arith.truncf %200 : vector<16x32xf32> to vector<16x32xbf16>
    %c0_259 = arith.constant 0 : index
    %c1_260 = arith.constant 1 : index
    %c0_261 = arith.constant 0 : index
    %c0_262 = arith.constant 0 : index
    %202 = vector.load %arg6[%c0_259, %c1_260, %c0_261, %c0_262] : memref<3x3x32x32xbf16, #tpu.memory_space<vmem>>, vector<1x1x32x32xbf16>
    %203 = vector.shape_cast %202 : vector<1x1x32x32xbf16> to vector<32x32xbf16>
    %cst_263 = arith.constant dense<0.000000e+00> : vector<16x32xf32>
    %204 = tpu.matmul %201, %203, %cst_263 {dimension_numbers = #tpu.dot_dimension_numbers<[1], [0], [0], [1], [0, 0, 1, 1], [], []>} : vector<16x32xbf16>, vector<32x32xbf16>, vector<16x32xf32> -> vector<16x32xf32>
    %c0_264 = arith.constant 0 : index
    %c0_265 = arith.constant 0 : index
    %205 = vector.load %arg10[%c0_264, %c0_265] : memref<16x32xf32, #tpu.memory_space<vmem>>, vector<16x32xf32>
    %206 = arith.addf %205, %204 : vector<16x32xf32>
    %c0_266 = arith.constant 0 : index
    %c0_267 = arith.constant 0 : index
    %207 = vector.load %arg10[%c0_266, %c0_267] : memref<16x32xf32, #tpu.memory_space<vmem>>, vector<16x32xf32>
    tpu.vector_store %arg10[%c0_266, %c0_267], %206 {strides = array<i32>} : memref<16x32xf32, #tpu.memory_space<vmem>>, vector<16x32xf32>,
    %c0_268 = arith.constant 0 : index
    %c9_269 = arith.constant 9 : index
    %c0_270 = arith.constant 0 : index
    %208 = vector.load %arg9[%c0_268, %c9_269, %c0_270] : memref<4x17x48xf32, #tpu.memory_space<vmem>>, vector<2x8x32xf32>
    %209 = vector.shape_cast %208 : vector<2x8x32xf32> to vector<16x32xf32>
    %210 = arith.truncf %209 : vector<16x32xf32> to vector<16x32xbf16>
    %c0_271 = arith.constant 0 : index
    %c2_272 = arith.constant 2 : index
    %c0_273 = arith.constant 0 : index
    %c0_274 = arith.constant 0 : index
    %211 = vector.load %arg6[%c0_271, %c2_272, %c0_273, %c0_274] : memref<3x3x32x32xbf16, #tpu.memory_space<vmem>>, vector<1x1x32x32xbf16>
    %212 = vector.shape_cast %211 : vector<1x1x32x32xbf16> to vector<32x32xbf16>
    %cst_275 = arith.constant dense<0.000000e+00> : vector<16x32xf32>
    %213 = tpu.matmul %210, %212, %cst_275 {dimension_numbers = #tpu.dot_dimension_numbers<[1], [0], [0], [1], [0, 0, 1, 1], [], []>} : vector<16x32xbf16>, vector<32x32xbf16>, vector<16x32xf32> -> vector<16x32xf32>
    %c0_276 = arith.constant 0 : index
    %c0_277 = arith.constant 0 : index
    %214 = vector.load %arg10[%c0_276, %c0_277] : memref<16x32xf32, #tpu.memory_space<vmem>>, vector<16x32xf32>
    %215 = arith.addf %214, %213 : vector<16x32xf32>
    %c0_278 = arith.constant 0 : index
    %c0_279 = arith.constant 0 : index
    %216 = vector.load %arg10[%c0_278, %c0_279] : memref<16x32xf32, #tpu.memory_space<vmem>>, vector<16x32xf32>
    tpu.vector_store %arg10[%c0_278, %c0_279], %215 {strides = array<i32>} : memref<16x32xf32, #tpu.memory_space<vmem>>, vector<16x32xf32>,
    %c1_280 = arith.constant 1 : index
    %c7_281 = arith.constant 7 : index
    %c0_282 = arith.constant 0 : index
    %217 = vector.load %arg9[%c1_280, %c7_281, %c0_282] : memref<4x17x48xf32, #tpu.memory_space<vmem>>, vector<2x8x32xf32>
    %218 = vector.shape_cast %217 : vector<2x8x32xf32> to vector<16x32xf32>
    %219 = arith.truncf %218 : vector<16x32xf32> to vector<16x32xbf16>
    %c1_283 = arith.constant 1 : index
    %c0_284 = arith.constant 0 : index
    %c0_285 = arith.constant 0 : index
    %c0_286 = arith.constant 0 : index
    %220 = vector.load %arg6[%c1_283, %c0_284, %c0_285, %c0_286] : memref<3x3x32x32xbf16, #tpu.memory_space<vmem>>, vector<1x1x32x32xbf16>
    %221 = vector.shape_cast %220 : vector<1x1x32x32xbf16> to vector<32x32xbf16>
    %cst_287 = arith.constant dense<0.000000e+00> : vector<16x32xf32>
    %222 = tpu.matmul %219, %221, %cst_287 {dimension_numbers = #tpu.dot_dimension_numbers<[1], [0], [0], [1], [0, 0, 1, 1], [], []>} : vector<16x32xbf16>, vector<32x32xbf16>, vector<16x32xf32> -> vector<16x32xf32>
    %c0_288 = arith.constant 0 : index
    %c0_289 = arith.constant 0 : index
    %223 = vector.load %arg10[%c0_288, %c0_289] : memref<16x32xf32, #tpu.memory_space<vmem>>, vector<16x32xf32>
    %224 = arith.addf %223, %222 : vector<16x32xf32>
    %c0_290 = arith.constant 0 : index
    %c0_291 = arith.constant 0 : index
    %225 = vector.load %arg10[%c0_290, %c0_291] : memref<16x32xf32, #tpu.memory_space<vmem>>, vector<16x32xf32>
    tpu.vector_store %arg10[%c0_290, %c0_291], %224 {strides = array<i32>} : memref<16x32xf32, #tpu.memory_space<vmem>>, vector<16x32xf32>,
    %c1_292 = arith.constant 1 : index
    %c8_293 = arith.constant 8 : index
    %c0_294 = arith.constant 0 : index
    %226 = vector.load %arg9[%c1_292, %c8_293, %c0_294] : memref<4x17x48xf32, #tpu.memory_space<vmem>>, vector<2x8x32xf32>
    %227 = vector.shape_cast %226 : vector<2x8x32xf32> to vector<16x32xf32>
    %228 = arith.truncf %227 : vector<16x32xf32> to vector<16x32xbf16>
    %c1_295 = arith.constant 1 : index
    %c1_296 = arith.constant 1 : index
    %c0_297 = arith.constant 0 : index
    %c0_298 = arith.constant 0 : index
    %229 = vector.load %arg6[%c1_295, %c1_296, %c0_297, %c0_298] : memref<3x3x32x32xbf16, #tpu.memory_space<vmem>>, vector<1x1x32x32xbf16>
    %230 = vector.shape_cast %229 : vector<1x1x32x32xbf16> to vector<32x32xbf16>
    %cst_299 = arith.constant dense<0.000000e+00> : vector<16x32xf32>
    %231 = tpu.matmul %228, %230, %cst_299 {dimension_numbers = #tpu.dot_dimension_numbers<[1], [0], [0], [1], [0, 0, 1, 1], [], []>} : vector<16x32xbf16>, vector<32x32xbf16>, vector<16x32xf32> -> vector<16x32xf32>
    %c0_300 = arith.constant 0 : index
    %c0_301 = arith.constant 0 : index
    %232 = vector.load %arg10[%c0_300, %c0_301] : memref<16x32xf32, #tpu.memory_space<vmem>>, vector<16x32xf32>
    %233 = arith.addf %232, %231 : vector<16x32xf32>
    %c0_302 = arith.constant 0 : index
    %c0_303 = arith.constant 0 : index
    %234 = vector.load %arg10[%c0_302, %c0_303] : memref<16x32xf32, #tpu.memory_space<vmem>>, vector<16x32xf32>
    tpu.vector_store %arg10[%c0_302, %c0_303], %233 {strides = array<i32>} : memref<16x32xf32, #tpu.memory_space<vmem>>, vector<16x32xf32>,
    %c1_304 = arith.constant 1 : index
    %c9_305 = arith.constant 9 : index
    %c0_306 = arith.constant 0 : index
    %235 = vector.load %arg9[%c1_304, %c9_305, %c0_306] : memref<4x17x48xf32, #tpu.memory_space<vmem>>, vector<2x8x32xf32>
    %236 = vector.shape_cast %235 : vector<2x8x32xf32> to vector<16x32xf32>
    %237 = arith.truncf %236 : vector<16x32xf32> to vector<16x32xbf16>
    %c1_307 = arith.constant 1 : index
    %c2_308 = arith.constant 2 : index
    %c0_309 = arith.constant 0 : index
    %c0_310 = arith.constant 0 : index
    %238 = vector.load %arg6[%c1_307, %c2_308, %c0_309, %c0_310] : memref<3x3x32x32xbf16, #tpu.memory_space<vmem>>, vector<1x1x32x32xbf16>
    %239 = vector.shape_cast %238 : vector<1x1x32x32xbf16> to vector<32x32xbf16>
    %cst_311 = arith.constant dense<0.000000e+00> : vector<16x32xf32>
    %240 = tpu.matmul %237, %239, %cst_311 {dimension_numbers = #tpu.dot_dimension_numbers<[1], [0], [0], [1], [0, 0, 1, 1], [], []>} : vector<16x32xbf16>, vector<32x32xbf16>, vector<16x32xf32> -> vector<16x32xf32>
    %c0_312 = arith.constant 0 : index
    %c0_313 = arith.constant 0 : index
    %241 = vector.load %arg10[%c0_312, %c0_313] : memref<16x32xf32, #tpu.memory_space<vmem>>, vector<16x32xf32>
    %242 = arith.addf %241, %240 : vector<16x32xf32>
    %c0_314 = arith.constant 0 : index
    %c0_315 = arith.constant 0 : index
    %243 = vector.load %arg10[%c0_314, %c0_315] : memref<16x32xf32, #tpu.memory_space<vmem>>, vector<16x32xf32>
    tpu.vector_store %arg10[%c0_314, %c0_315], %242 {strides = array<i32>} : memref<16x32xf32, #tpu.memory_space<vmem>>, vector<16x32xf32>,
    %c2_316 = arith.constant 2 : index
    %c7_317 = arith.constant 7 : index
    %c0_318 = arith.constant 0 : index
    %244 = vector.load %arg9[%c2_316, %c7_317, %c0_318] : memref<4x17x48xf32, #tpu.memory_space<vmem>>, vector<2x8x32xf32>
    %245 = vector.shape_cast %244 : vector<2x8x32xf32> to vector<16x32xf32>
    %246 = arith.truncf %245 : vector<16x32xf32> to vector<16x32xbf16>
    %c2_319 = arith.constant 2 : index
    %c0_320 = arith.constant 0 : index
    %c0_321 = arith.constant 0 : index
    %c0_322 = arith.constant 0 : index
    %247 = vector.load %arg6[%c2_319, %c0_320, %c0_321, %c0_322] : memref<3x3x32x32xbf16, #tpu.memory_space<vmem>>, vector<1x1x32x32xbf16>
    %248 = vector.shape_cast %247 : vector<1x1x32x32xbf16> to vector<32x32xbf16>
    %cst_323 = arith.constant dense<0.000000e+00> : vector<16x32xf32>
    %249 = tpu.matmul %246, %248, %cst_323 {dimension_numbers = #tpu.dot_dimension_numbers<[1], [0], [0], [1], [0, 0, 1, 1], [], []>} : vector<16x32xbf16>, vector<32x32xbf16>, vector<16x32xf32> -> vector<16x32xf32>
    %c0_324 = arith.constant 0 : index
    %c0_325 = arith.constant 0 : index
    %250 = vector.load %arg10[%c0_324, %c0_325] : memref<16x32xf32, #tpu.memory_space<vmem>>, vector<16x32xf32>
    %251 = arith.addf %250, %249 : vector<16x32xf32>
    %c0_326 = arith.constant 0 : index
    %c0_327 = arith.constant 0 : index
    %252 = vector.load %arg10[%c0_326, %c0_327] : memref<16x32xf32, #tpu.memory_space<vmem>>, vector<16x32xf32>
    tpu.vector_store %arg10[%c0_326, %c0_327], %251 {strides = array<i32>} : memref<16x32xf32, #tpu.memory_space<vmem>>, vector<16x32xf32>,
    %c2_328 = arith.constant 2 : index
    %c8_329 = arith.constant 8 : index
    %c0_330 = arith.constant 0 : index
    %253 = vector.load %arg9[%c2_328, %c8_329, %c0_330] : memref<4x17x48xf32, #tpu.memory_space<vmem>>, vector<2x8x32xf32>
    %254 = vector.shape_cast %253 : vector<2x8x32xf32> to vector<16x32xf32>
    %255 = arith.truncf %254 : vector<16x32xf32> to vector<16x32xbf16>
    %c2_331 = arith.constant 2 : index
    %c1_332 = arith.constant 1 : index
    %c0_333 = arith.constant 0 : index
    %c0_334 = arith.constant 0 : index
    %256 = vector.load %arg6[%c2_331, %c1_332, %c0_333, %c0_334] : memref<3x3x32x32xbf16, #tpu.memory_space<vmem>>, vector<1x1x32x32xbf16>
    %257 = vector.shape_cast %256 : vector<1x1x32x32xbf16> to vector<32x32xbf16>
    %cst_335 = arith.constant dense<0.000000e+00> : vector<16x32xf32>
    %258 = tpu.matmul %255, %257, %cst_335 {dimension_numbers = #tpu.dot_dimension_numbers<[1], [0], [0], [1], [0, 0, 1, 1], [], []>} : vector<16x32xbf16>, vector<32x32xbf16>, vector<16x32xf32> -> vector<16x32xf32>
    %c0_336 = arith.constant 0 : index
    %c0_337 = arith.constant 0 : index
    %259 = vector.load %arg10[%c0_336, %c0_337] : memref<16x32xf32, #tpu.memory_space<vmem>>, vector<16x32xf32>
    %260 = arith.addf %259, %258 : vector<16x32xf32>
    %c0_338 = arith.constant 0 : index
    %c0_339 = arith.constant 0 : index
    %261 = vector.load %arg10[%c0_338, %c0_339] : memref<16x32xf32, #tpu.memory_space<vmem>>, vector<16x32xf32>
    tpu.vector_store %arg10[%c0_338, %c0_339], %260 {strides = array<i32>} : memref<16x32xf32, #tpu.memory_space<vmem>>, vector<16x32xf32>,
    %c2_340 = arith.constant 2 : index
    %c9_341 = arith.constant 9 : index
    %c0_342 = arith.constant 0 : index
    %262 = vector.load %arg9[%c2_340, %c9_341, %c0_342] : memref<4x17x48xf32, #tpu.memory_space<vmem>>, vector<2x8x32xf32>
    %263 = vector.shape_cast %262 : vector<2x8x32xf32> to vector<16x32xf32>
    %264 = arith.truncf %263 : vector<16x32xf32> to vector<16x32xbf16>
    %c2_343 = arith.constant 2 : index
    %c2_344 = arith.constant 2 : index
    %c0_345 = arith.constant 0 : index
    %c0_346 = arith.constant 0 : index
    %265 = vector.load %arg6[%c2_343, %c2_344, %c0_345, %c0_346] : memref<3x3x32x32xbf16, #tpu.memory_space<vmem>>, vector<1x1x32x32xbf16>
    %266 = vector.shape_cast %265 : vector<1x1x32x32xbf16> to vector<32x32xbf16>
    %cst_347 = arith.constant dense<0.000000e+00> : vector<16x32xf32>
    %267 = tpu.matmul %264, %266, %cst_347 {dimension_numbers = #tpu.dot_dimension_numbers<[1], [0], [0], [1], [0, 0, 1, 1], [], []>} : vector<16x32xbf16>, vector<32x32xbf16>, vector<16x32xf32> -> vector<16x32xf32>
    %c0_348 = arith.constant 0 : index
    %c0_349 = arith.constant 0 : index
    %268 = vector.load %arg10[%c0_348, %c0_349] : memref<16x32xf32, #tpu.memory_space<vmem>>, vector<16x32xf32>
    %269 = arith.addf %268, %267 : vector<16x32xf32>
    %c0_350 = arith.constant 0 : index
    %c0_351 = arith.constant 0 : index
    %270 = vector.load %arg10[%c0_350, %c0_351] : memref<16x32xf32, #tpu.memory_space<vmem>>, vector<16x32xf32>
    tpu.vector_store %arg10[%c0_350, %c0_351], %269 {strides = array<i32>} : memref<16x32xf32, #tpu.memory_space<vmem>>, vector<16x32xf32>,
    %c0_352 = arith.constant 0 : index
    %c0_353 = arith.constant 0 : index
    %271 = vector.load %arg10[%c0_352, %c0_353] : memref<16x32xf32, #tpu.memory_space<vmem>>, vector<16x32xf32>
    %c0_354 = arith.constant 0 : index
    %c0_355 = arith.constant 0 : index
    %272 = vector.load %arg7[%c0_354, %c0_355] : memref<1x32xf32, #tpu.memory_space<vmem>>, vector<1x32xf32>
    %273 = vector.broadcast %272 : vector<1x32xf32> to vector<16x32xf32>
    %274 = arith.addf %271, %273 : vector<16x32xf32>
    %cst_356 = arith.constant 0.000000e+00 : f32
    %275 = vector.broadcast %cst_356 : f32 to vector<16x32xf32>
    %276 = arith.maximumf %274, %275 : vector<16x32xf32>
    %277 = vector.shape_cast %276 : vector<16x32xf32> to vector<2x8x32xf32>
    %278 = vector.extract_strided_slice %277 {offsets = [0, 0, 0], sizes = [2, 2, 32], strides = [1, 1, 1]} : vector<2x8x32xf32> to vector<2x2x32xf32>
    %c0_357 = arith.constant 0 : index
    %c0_358 = arith.constant 0 : index
    %c0_359 = arith.constant 0 : index
    %c0_360 = arith.constant 0 : index
    %279 = vector.load %arg8[%c0_357, %c0_358, %c0_359, %c0_360] : memref<1x2x2x32xf32, #tpu.memory_space<vmem>>, vector<1x2x2x32xf32>
    %280 = vector.shape_cast %279 : vector<1x2x2x32xf32> to vector<2x2x32xf32>
    %281 = vector.shape_cast %278 : vector<2x2x32xf32> to vector<1x2x2x32xf32>
    tpu.vector_store %arg8[%c0_357, %c0_358, %c0_359, %c0_360], %281 {strides = array<i32>} : memref<1x2x2x32xf32, #tpu.memory_space<vmem>>, vector<1x2x2x32xf32>,
    return
  }
  func.func @transform_0(%arg0: i32) -> (i32, i32, i32, i32) {
    %c0_i32 = arith.constant 0 : i32
    %c0_i32_0 = arith.constant 0 : i32
    %c0_i32_1 = arith.constant 0 : i32
    %c0_i32_2 = arith.constant 0 : i32
    return %arg0, %c0_i32, %c0_i32_0, %c0_i32_1 : i32, i32, i32, i32
  }
  func.func @transform_1(%arg0: i32) -> (i32, i32, i32, i32) {
    %c0_i32 = arith.constant 0 : i32
    %c0_i32_0 = arith.constant 0 : i32
    %c0_i32_1 = arith.constant 0 : i32
    %c0_i32_2 = arith.constant 0 : i32
    return %arg0, %c0_i32, %c0_i32_0, %c0_i32_1 : i32, i32, i32, i32
  }
  func.func @transform_2(%arg0: i32) -> (i32, i32, i32, i32) {
    %c0_i32 = arith.constant 0 : i32
    %c0_i32_0 = arith.constant 0 : i32
    %c0_i32_1 = arith.constant 0 : i32
    %c0_i32_2 = arith.constant 0 : i32
    %c0_i32_3 = arith.constant 0 : i32
    return %c0_i32, %c0_i32_0, %c0_i32_1, %c0_i32_2 : i32, i32, i32, i32
  }
  func.func @transform_3(%arg0: i32) -> (i32, i32, i32, i32) {
    %c0_i32 = arith.constant 0 : i32
    %c0_i32_0 = arith.constant 0 : i32
    %c0_i32_1 = arith.constant 0 : i32
    %c0_i32_2 = arith.constant 0 : i32
    %c0_i32_3 = arith.constant 0 : i32
    return %c0_i32, %c0_i32_0, %c0_i32_1, %c0_i32_2 : i32, i32, i32, i32
  }
  func.func @transform_4(%arg0: i32) -> (i32, i32) {
    %c0_i32 = arith.constant 0 : i32
    %c0_i32_0 = arith.constant 0 : i32
    %c0_i32_1 = arith.constant 0 : i32
    return %c0_i32, %c0_i32_0 : i32, i32
  }
  func.func @transform_5(%arg0: i32) -> (i32, i32, i32, i32) {
    %c0_i32 = arith.constant 0 : i32
    %c0_i32_0 = arith.constant 0 : i32
    %c0_i32_1 = arith.constant 0 : i32
    %c0_i32_2 = arith.constant 0 : i32
    %c0_i32_3 = arith.constant 0 : i32
    return %c0_i32, %c0_i32_0, %c0_i32_1, %c0_i32_2 : i32, i32, i32, i32
  }
  func.func @transform_6(%arg0: i32) -> (i32, i32) {
    %c0_i32 = arith.constant 0 : i32
    %c0_i32_0 = arith.constant 0 : i32
    %c0_i32_1 = arith.constant 0 : i32
    return %c0_i32, %c0_i32_0 : i32, i32
  }
  func.func @transform_7(%arg0: i32) -> (i32, i32, i32, i32) {
    %c0_i32 = arith.constant 0 : i32
    %c0_i32_0 = arith.constant 0 : i32
    %c0_i32_1 = arith.constant 0 : i32
    %c0_i32_2 = arith.constant 0 : i32
    return %arg0, %c0_i32, %c0_i32_0, %c0_i32_1 : i32, i32, i32, i32
  }
}

</mosaic_0001>

<llo_original>
// kernel: tpu_custom_call.1
$region0: #{tpu_custom_call.1}
  #allocation0 [shape = 'u32[]', space=smem, size = 0x4, offset = 0x4, fixed_abs, tag = 'smem constant byte address 0x4 - core index']
  #allocation1 [shape = 'u32[144,128]{1,0:T(1,128)}', space=vmem, size = 0x12000, scoped, tag = 'internal scratch']
  #allocation2 [shape = 'f32[4,17,48]{2,1,0:T(8,128)}', space=vmem, size = 0xc000, scoped, tag = 'scratch operand']
  #allocation3 [shape = 'f32[16,32]{1,0:T(8,128)}', space=vmem, size = 0x2000, scoped, tag = 'scratch operand']
  %s0 = inlined_call_operand.vmem [shape: f32[2,1,2,48], index: 0, kind: input, shape index: {}]
  %s1 = inlined_call_operand.vmem [shape: f32[2,2,2,32], index: 1, kind: input, shape index: {}]
  %s2 = inlined_call_operand.vmem [shape: bf16[3,3,48,32], index: 2, kind: input, shape index: {}]
  %s3 = inlined_call_operand.vmem [shape: bf16[3,3,32,32], index: 3, kind: input, shape index: {}]
  %s4 = inlined_call_operand.vmem [shape: f32[1,32], index: 4, kind: input, shape index: {}]
  %s5 = inlined_call_operand.vmem [shape: bf16[3,3,32,32], index: 5, kind: input, shape index: {}]
  %s6 = inlined_call_operand.vmem [shape: f32[1,32], index: 6, kind: input, shape index: {}]
  %s7 = inlined_call_operand.hbm [shape: f32[2,2,2,32], index: 7, kind: output, shape index: {}]
  %s8 = sld [smem:[#allocation0]]
  $region61: #{tpu_custom_call.1} parent=0
    _
  %s10 = ssub.s32 1, %s8
  %s11 = scalar_select 0, %s10, %s8
  $region1: #{tpu_custom_call.1} parent=0
    #allocation4 [shape = 'u8[4096]{0}', space=vmem, size = 0x1000, scoped, tag = 'output window, operand 0']
    #allocation5 [shape = 's32[2]{0}', space=sflag, size = 0x8, scoped, tag = 'scoped memory for tpu_custom_call.1']
    %12 = vsyncpa [#allocation5], 0
    %s13 = scalar_lea.sflag [#allocation5], 1
    %14 = vsyncpa %s13, 0
    loop: start=0, step=1, limit=4
    $region2: #{tpu_custom_call.1} parent=1 // loop_pre_header
      _
    $region3: #{tpu_custom_call.1} parent=1 // loop_header
      %s16 = sphi 0, %s20
      %p17 = scmp.ge.s32.totalorder %s16, 4
      %s26 = sphi 0, %s28
      %s29 = sphi 0, %s26
      %s30 = sphi 0, %s29
      %s46 = sphi 0, %s30
      %s52 = sphi 0, %s54
      %s55 = sphi 0, %s52
      %s56 = sphi 0, %s55
      %s72 = sphi 0, %s56
      %s76 = sphi 0, %s76
      %s78 = sphi 0, %s76
      %s79 = sphi 0, %s78
      %s93 = sphi 0, %s79
      %s97 = sphi 0, %s97
      %s99 = sphi 0, %s97
      %s100 = sphi 0, %s99
      %s114 = sphi 0, %s100
      %s118 = sphi 0, %s118
      %s120 = sphi 0, %s118
      %s121 = sphi 0, %s120
      %s135 = sphi 0, %s121
      %s139 = sphi 0, %s139
      %s141 = sphi 0, %s139
      %s142 = sphi 0, %s141
      %s156 = sphi 0, %s142
      %s160 = sphi 0, %s160
      %s162 = sphi 0, %s160
      %s163 = sphi 0, %s162
      %s177 = sphi 0, %s163
      %s183 = sphi 0, %s185
      %s186 = sphi 0, %s183
      %s187 = sphi 0, %s186
      %s203 = sphi 0, %s187
    $region4: #{tpu_custom_call.1} parent=1 // loop_header_branch
      %19 = sbr.rel (%p17) target = $region8
    $region5: #{tpu_custom_call.1} parent=1 // loop_body
      %s21 = ssub.s32 %s16, 1
      %s22 = ssub.s32 %s16, 2
      %s23 = sadd.s32 %s16, 1
      %s24 = ssub.s32 %s16, %s23
      %p25 = scmp.eq.s32.totalorder %s24, 0
      %s27 = sadd.s32 %s26, 1
      %s28 = scalar_select %p25, %s26, %s27
      %p31 = pneg %p25
      %p32 = scmp.eq.s32.totalorder %s16, 1
      %p33 = por %p31, %p32
      %p34 = scmp.ne.s32.totalorder %s26, %s29
      %p35 = scmp.eq.s32.totalorder %s16, 0
      %p36 = por %p34, %p35
      %p37 = scmp.ne.s32.totalorder %s26, %s29
      %p38 = scmp.eq.s32.totalorder %s21, 1
      %p39 = por %p37, %p38
      %p40 = scmp.ne.s32.totalorder %s29, %s30
      %p41 = scmp.eq.s32.totalorder %s21, 0
      %p42 = por %p40, %p41
      %p43 = scmp.ne.s32.totalorder %s29, %s30
      %p44 = scmp.eq.s32.totalorder %s22, 1
      %p45 = por %p43, %p44
      %p47 = scmp.ne.s32.totalorder %s30, %s46
      %p48 = scmp.eq.s32.totalorder %s22, 0
      %p49 = por %p47, %p48
      %s50 = ssub.s32 %s16, %s23
      %p51 = scmp.eq.s32.totalorder %s50, 0
      %s53 = sadd.s32 %s52, 1
      %s54 = scalar_select %p51, %s52, %s53
      %p57 = pneg %p51
      %p58 = scmp.eq.s32.totalorder %s16, 1
      %p59 = por %p57, %p58
      %p60 = scmp.ne.s32.totalorder %s52, %s55
      %p61 = scmp.eq.s32.totalorder %s16, 0
      %p62 = por %p60, %p61
      %p63 = scmp.ne.s32.totalorder %s52, %s55
      %p64 = scmp.eq.s32.totalorder %s21, 1
      %p65 = por %p63, %p64
      %p66 = scmp.ne.s32.totalorder %s55, %s56
      %p67 = scmp.eq.s32.totalorder %s21, 0
      %p68 = por %p66, %p67
      %p69 = scmp.ne.s32.totalorder %s55, %s56
      %p70 = scmp.eq.s32.totalorder %s22, 1
      %p71 = por %p69, %p70
      %p73 = scmp.ne.s32.totalorder %s56, %s72
      %p74 = scmp.eq.s32.totalorder %s22, 0
      %p75 = por %p73, %p74
      %s77 = sadd.s32 %s76, 1
      %p80 = scmp.eq.s32.totalorder %s16, 1
      %p81 = scmp.ne.s32.totalorder %s76, %s78
      %p82 = scmp.eq.s32.totalorder %s16, 0
      %p83 = por %p81, %p82
      %p84 = scmp.ne.s32.totalorder %s76, %s78
      %p85 = scmp.eq.s32.totalorder %s21, 1
      %p86 = por %p84, %p85
      %p87 = scmp.ne.s32.totalorder %s78, %s79
      %p88 = scmp.eq.s32.totalorder %s21, 0
      %p89 = por %p87, %p88
      %p90 = scmp.ne.s32.totalorder %s78, %s79
      %p91 = scmp.eq.s32.totalorder %s22, 1
      %p92 = por %p90, %p91
      %p94 = scmp.ne.s32.totalorder %s79, %s93
      %p95 = scmp.eq.s32.totalorder %s22, 0
      %p96 = por %p94, %p95
      %s98 = sadd.s32 %s97, 1
      %p101 = scmp.eq.s32.totalorder %s16, 1
      %p102 = scmp.ne.s32.totalorder %s97, %s99
      %p103 = scmp.eq.s32.totalorder %s16, 0
      %p104 = por %p102, %p103
      %p105 = scmp.ne.s32.totalorder %s97, %s99
      %p106 = scmp.eq.s32.totalorder %s21, 1
      %p107 = por %p105, %p106
      %p108 = scmp.ne.s32.totalorder %s99, %s100
      %p109 = scmp.eq.s32.totalorder %s21, 0
      %p110 = por %p108, %p109
      %p111 = scmp.ne.s32.totalorder %s99, %s100
      %p112 = scmp.eq.s32.totalorder %s22, 1
      %p113 = por %p111, %p112
      %p115 = scmp.ne.s32.totalorder %s100, %s114
      %p116 = scmp.eq.s32.totalorder %s22, 0
      %p117 = por %p115, %p116
      %s119 = sadd.s32 %s118, 1
      %p122 = scmp.eq.s32.totalorder %s16, 1
      %p123 = scmp.ne.s32.totalorder %s118, %s120
      %p124 = scmp.eq.s32.totalorder %s16, 0
      %p125 = por %p123, %p124
      %p126 = scmp.ne.s32.totalorder %s118, %s120
      %p127 = scmp.eq.s32.totalorder %s21, 1
      %p128 = por %p126, %p127
      %p129 = scmp.ne.s32.totalorder %s120, %s121
      %p130 = scmp.eq.s32.totalorder %s21, 0
      %p131 = por %p129, %p130
      %p132 = scmp.ne.s32.totalorder %s120, %s121
      %p133 = scmp.eq.s32.totalorder %s22, 1
      %p134 = por %p132, %p133
      %p136 = scmp.ne.s32.totalorder %s121, %s135
      %p137 = scmp.eq.s32.totalorder %s22, 0
      %p138 = por %p136, %p137
      %s140 = sadd.s32 %s139, 1
      %p143 = scmp.eq.s32.totalorder %s16, 1
      %p144 = scmp.ne.s32.totalorder %s139, %s141
      %p145 = scmp.eq.s32.totalorder %s16, 0
      %p146 = por %p144, %p145
      %p147 = scmp.ne.s32.totalorder %s139, %s141
      %p148 = scmp.eq.s32.totalorder %s21, 1
      %p149 = por %p147, %p148
      %p150 = scmp.ne.s32.totalorder %s141, %s142
      %p151 = scmp.eq.s32.totalorder %s21, 0
      %p152 = por %p150, %p151
      %p153 = scmp.ne.s32.totalorder %s141, %s142
      %p154 = scmp.eq.s32.totalorder %s22, 1
      %p155 = por %p153, %p154
      %p157 = scmp.ne.s32.totalorder %s142, %s156
      %p158 = scmp.eq.s32.totalorder %s22, 0
      %p159 = por %p157, %p158
      %s161 = sadd.s32 %s160, 1
      %p164 = scmp.eq.s32.totalorder %s16, 1
      %p165 = scmp.ne.s32.totalorder %s160, %s162
      %p166 = scmp.eq.s32.totalorder %s16, 0
      %p167 = por %p165, %p166
      %p168 = scmp.ne.s32.totalorder %s160, %s162
      %p169 = scmp.eq.s32.totalorder %s21, 1
      %p170 = por %p168, %p169
      %p171 = scmp.ne.s32.totalorder %s162, %s163
      %p172 = scmp.eq.s32.totalorder %s21, 0
      %p173 = por %p171, %p172
      %p174 = scmp.ne.s32.totalorder %s162, %s163
      %p175 = scmp.eq.s32.totalorder %s22, 1
      %p176 = por %p174, %p175
      %p178 = scmp.ne.s32.totalorder %s163, %s177
      %p179 = scmp.eq.s32.totalorder %s22, 0
      %p180 = por %p178, %p179
      %s181 = ssub.s32 %s16, %s23
      %p182 = scmp.eq.s32.totalorder %s181, 0
      %s184 = sadd.s32 %s183, 1
      %s185 = scalar_select %p182, %s183, %s184
      %p188 = pneg %p182
      %p189 = scmp.eq.s32.totalorder %s16, 1
      %p190 = por %p188, %p189
      %p191 = scmp.ne.s32.totalorder %s183, %s186
      %p192 = scmp.eq.s32.totalorder %s16, 0
      %p193 = por %p191, %p192
      %p194 = scmp.ne.s32.totalorder %s183, %s186
      %p195 = scmp.eq.s32.totalorder %s21, 1
      %p196 = por %p194, %p195
      %p197 = scmp.ne.s32.totalorder %s186, %s187
      %p198 = scmp.eq.s32.totalorder %s21, 0
      %p199 = por %p197, %p198
      %p200 = scmp.ne.s32.totalorder %s186, %s187
      %p201 = scmp.eq.s32.totalorder %s22, 1
      %p202 = por %p200, %p201
      %p204 = scmp.ne.s32.totalorder %s187, %s203
      %p205 = scmp.eq.s32.totalorder %s22, 0
      %p206 = por %p204, %p205
      %p207 = scmp.le.s32.totalorder 1, %s16
      %p208 = scmp.lt.s32.totalorder %s16, 3
      %p209 = pnand %p207, %p208
      %p210 = pneg %p209
      // Predicated region
      $region9: #{tpu_custom_call.1} parent=5 // pred_check
        _
      $region10: #{tpu_custom_call.1} parent=5 // pred_check_branch
        %212 = sbr.rel (%p209) target = $region12
      $region11: #{tpu_custom_call.1} parent=5 // pred_region
        %s213 = ssub.s32 %s16, 1
        // Predicated region
        $region13: #{tpu_custom_call.1} parent=11 // pred_check
          %p214 = pneg %p89
        $region14: #{tpu_custom_call.1} parent=11 // pred_check_branch
          %216 = sbr.rel (%p214) target = $region16
        $region15: #{tpu_custom_call.1} parent=11 // pred_region
          _
        $region16: #{tpu_custom_call.1} parent=11 // pred_fallthru
          _
        // Predicated region
        $region17: #{tpu_custom_call.1} parent=11 // pred_check
          %p217 = pneg %p110
        $region18: #{tpu_custom_call.1} parent=11 // pred_check_branch
          %219 = sbr.rel (%p217) target = $region20
        $region19: #{tpu_custom_call.1} parent=11 // pred_region
          _
        $region20: #{tpu_custom_call.1} parent=11 // pred_fallthru
          _
        // Predicated region
        $region21: #{tpu_custom_call.1} parent=11 // pred_check
          %p220 = pneg %p131
        $region22: #{tpu_custom_call.1} parent=11 // pred_check_branch
          %222 = sbr.rel (%p220) target = $region24
        $region23: #{tpu_custom_call.1} parent=11 // pred_region
          _
        $region24: #{tpu_custom_call.1} parent=11 // pred_fallthru
          _
        // Predicated region
        $region25: #{tpu_custom_call.1} parent=11 // pred_check
          %p223 = pneg %p152
        $region26: #{tpu_custom_call.1} parent=11 // pred_check_branch
          %225 = sbr.rel (%p223) target = $region28
        $region27: #{tpu_custom_call.1} parent=11 // pred_region
          _
        $region28: #{tpu_custom_call.1} parent=11 // pred_fallthru
          _
        // Predicated region
        $region29: #{tpu_custom_call.1} parent=11 // pred_check
          %p226 = pneg %p173
        $region30: #{tpu_custom_call.1} parent=11 // pred_check_branch
          %228 = sbr.rel (%p226) target = $region32
        $region31: #{tpu_custom_call.1} parent=11 // pred_region
          _
        $region32: #{tpu_custom_call.1} parent=11 // pred_fallthru
          _
      $region12: #{tpu_custom_call.1} parent=5 // pred_fallthru
        _
      %p229 = scmp.lt.s32.totalorder %s16, 2
      // Predicated region
      $region33: #{tpu_custom_call.1} parent=5 // pred_check
        %p230 = pneg %p229
      $region34: #{tpu_custom_call.1} parent=5 // pred_check_branch
        %232 = sbr.rel (%p230) target = $region36
      $region35: #{tpu_custom_call.1} parent=5 // pred_region
        // Predicated region
        $region37: #{tpu_custom_call.1} parent=35 // pred_check
          %p233 = pneg %p36
        $region38: #{tpu_custom_call.1} parent=35 // pred_check_branch
          %235 = sbr.rel (%p233) target = $region40
        $region39: #{tpu_custom_call.1} parent=35 // pred_region
          %p236 = scmp.lt.s32.totalorder %s16, 1
          %s237 = scalar_select %p236, %s16, 1
          %s238 = smul.addr %s237, 2
          %s239 = scalar_lea.vmem %s0, %s238
        $region40: #{tpu_custom_call.1} parent=35 // pred_fallthru
          _
        // Predicated region
        $region41: #{tpu_custom_call.1} parent=35 // pred_check
          %p240 = pneg %p62
        $region42: #{tpu_custom_call.1} parent=35 // pred_check_branch
          %242 = sbr.rel (%p240) target = $region44
        $region43: #{tpu_custom_call.1} parent=35 // pred_region
          %p243 = scmp.lt.s32.totalorder %s16, 1
          %s244 = scalar_select %p243, %s16, 1
          %s245 = smul.addr %s244, 2
          %s246 = smul.addr %s245, 2
          %s247 = scalar_lea.vmem %s1, %s246
        $region44: #{tpu_custom_call.1} parent=35 // pred_fallthru
          _
      $region36: #{tpu_custom_call.1} parent=5 // pred_fallthru
        _
      %p248 = scmp.le.s32.totalorder 1, %s16
      %p249 = scmp.lt.s32.totalorder %s16, 3
      %p250 = pnand %p248, %p249
      %p251 = pneg %p250
      // Predicated region
      $region45: #{tpu_custom_call.1} parent=5 // pred_check
        _
      $region46: #{tpu_custom_call.1} parent=5 // pred_check_branch
        %253 = sbr.rel (%p250) target = $region48
      $region47: #{tpu_custom_call.1} parent=5 // pred_region
        %s254 = ssub.s32 %s16, 1
        %p255 = scmp.lt.s32.totalorder %s21, 1
        %s256 = scalar_select %p255, %s21, 1
        %s257 = smul.addr %s256, 2
        %s258 = scalar_lea.vmem %s0, %s257
        %p259 = pneg %p42
        %p260 = pneg %p39
        %p261 = scmp.lt.s32.totalorder %s21, 1
        %s262 = scalar_select %p261, %s21, 1
        %s263 = smul.addr %s262, 2
        %s264 = smul.addr %s263, 2
        %s265 = scalar_lea.vmem %s1, %s264
        %p266 = pneg %p68
        %p267 = pneg %p65
        %p268 = pneg %p89
        %p269 = pneg %p86
        %p270 = pneg %p110
        %p271 = pneg %p107
        %p272 = pneg %p131
        %p273 = pneg %p128
        %p274 = pneg %p152
        %p275 = pneg %p149
        %p276 = pneg %p173
        %p277 = pneg %p170
        %p278 = pneg %p199
        %p279 = pneg %p196
        %s280 = sand.u32 %s186, 1
        %s281 = scalar_lea.sflag [#allocation5], %s280
        %s282 = sand.u32 %s186, 1
        %s283 = smul.addr %s282, 4
        %s284 = scalar_lea.vmem [#allocation4], %s283
        %p285 = scmp.lt.s32.totalorder %s21, 1
        %s286 = scalar_select %p285, %s21, 1
        %s287 = smul.addr %s286, 2
        %s288 = scalar_lea.vmem %s0, %s287
        %p289 = scmp.lt.s32.totalorder %s21, 1
        %s290 = scalar_select %p289, %s21, 1
        %s291 = smul.addr %s290, 2
        %s292 = smul.addr %s291, 2
        %s293 = scalar_lea.vmem %s1, %s292
        %vm295 = vcmask 392192
        %296 = vst.msk [vmem:[#allocation2] sm:$0xff] %vm295, 0.0
        %297 = vst.msk [vmem:[#allocation2 + $0x8] sm:$0xff] %vm295, 0.0
        %vm298 = vcmask 385024
        %299 = vst.msk [vmem:[#allocation2 + $0x10] sm:$0x1] %vm298, 0.0
        %s300 = scalar_lea.vmem [#allocation2], 72
        %301 = vst.msk [vmem:[%s300] sm:$0xff] %vm295, 0.0
        %302 = vst.msk [vmem:[%s300 + $0x8] sm:$0xff] %vm295, 0.0
        %303 = vst.msk [vmem:[%s300 + $0x10] sm:$0x1] %vm298, 0.0
        %s304 = scalar_lea.vmem [#allocation2], 24
        %305 = vst.msk [vmem:[%s304 + $0x7] sm:$0x1] %vm298, 0.0
        %306 = vst.msk [vmem:[%s304 + $0x1f] sm:$0x1] %vm298, 0.0
        %vm307 = vcmask 391168
        %308 = vst.msk [vmem:[%s304 + $0xa] sm:$0x7f] %vm307, 0.0
        %309 = vst.msk [vmem:[%s304 + $0x22] sm:$0x7f] %vm307, 0.0
        %v310 = vld [vmem:[%s288] sm:$0x3]
        %vm311 = vcmask 386048
        %312 = vst.msk [vmem:[%s304 + $0x8] sm:$0x3] %vm311, %v310
        %s313 = scalar_lea.vmem [#allocation2], 48
        %314 = vst.msk [vmem:[%s313 + $0x8] sm:$0x3] %vm311, %v310
        %v315 = vld [vmem:[#allocation2 + $0x7] sm:$0xff]
        %v316 = vld [vmem:[#allocation2 + $0x1f] sm:$0xff]
        %v317 = vpack.c.bf16 %v316, %v315
        %v318 = vld [vmem:[%s2] sm:$0xf]
        %v319 = vld [vmem:[%s2 + $0x4] sm:$0xf]
        %v320 = vld [vmem:[%s2 + $0x8] sm:$0xf]
        %v321 = vld [vmem:[%s2 + $0xc] sm:$0xf]
        %v322 = vld [vmem:[%s2 + $0x10] sm:$0xf]
        %v323 = vld [vmem:[%s2 + $0x14] sm:$0xf]
        %v330 = vunpack.c.l.b16 %v318
        %v331 = vunpack.c.l.b16 %v319
        %v332 = vunpack.c.l.b16 %v320
        %v333 = vunpack.c.l.b16 %v321
        %v334 = vunpack.c.l.b16 %v322
        %v335 = vunpack.c.l.b16 %v323
        %v336 = vpack.c.b16 %v331, %v330
        %v337 = vpack.c.b16 %v333, %v332
        %v338 = vpack.c.b16 %v335, %v334
        %v343 = vsel %vm295, %v317, 0
        %345 = vmatprep.subr.bf16.mxu0 0
        %346 = vmatpush1.bf16.msra.mxu0 %v336
        %347 = vmatprep.subr.bf16.mxu0 0
        %348 = vmatpush1.bf16.msra.mxu0 %v337
        %349 = vmatprep.subr.bf16.mxu0 0
        %350 = vmatpush1.bf16.msra.mxu0 %v338
        %351 = vmatprep.subr.bf16.mxu0 0
        %352 = vmatpush1.bf16.msra.mxu0 0
        %353 = vmatprep.subr.bf16.mxu0 0
        %354 = vmatpush1.bf16.msra.mxu0 0
        %355 = vmatprep.subr.bf16.mxu0 0
        %356 = vmatpush1.bf16.msra.mxu0 0
        %357 = vmatprep.subr.bf16.mxu0 0
        %358 = vmatpush1.bf16.msra.mxu0 0
        %359 = vmatprep.subr.bf16.mxu0 0
        %360 = vmatpush1.bf16.msra.mxu0 0
        %361 = vmatprep.subr.bf16.mxu0 0
        %362 = vmatpush1.bf16.msra.mxu0 0
        %363 = vmatprep.subr.bf16.mxu0 0
        %364 = vmatpush1.bf16.msra.mxu0 0
        %365 = vmatprep.subr.bf16.mxu0 0
        %366 = vmatpush1.bf16.msra.mxu0 0
        %367 = vmatprep.subr.bf16.mxu0 0
        %368 = vmatpush1.bf16.msra.mxu0 0
        %369 = vmatprep.subr.bf16.mxu0 0
        %370 = vmatpush1.bf16.msra.mxu0 0
        %371 = vmatprep.subr.bf16.mxu0 0
        %372 = vmatpush1.bf16.msra.mxu0 0
        %373 = vmatprep.subr.bf16.mxu0 0
        %374 = vmatpush1.bf16.msra.mxu0 0
        %375 = vmatprep.subr.bf16.mxu0 0
        %376 = vmatpush1.bf16.msra.mxu0 0
        %377 = vmatprep.mubr.bf16.mxu0 0
        %378 = vmatmul.mubr.bf16.gmra.mrb[0].mxu0 %v343
        %v379 = vpop.f32.mrb[0].mxu0
        %v380 = vadd.f32 0.0, %v379
        %v381 = vpop.f32.mrb[0].mxu0
        %v382 = vpop.f32.mrb[0].mxu0
        %v383 = vadd.f32 0.0, %v382
        %v384 = vpop.f32.mrb[0].mxu0
        %385 = vdwg.mxu0
        %vm386 = vcmask 261120
        %387 = vst.msk [vmem:[#allocation3] sm:$0xff] %vm386, %v380
        %388 = vst.msk [vmem:[#allocation3 + $0x8] sm:$0xff] %vm386, %v383
        %v389 = vld [vmem:[#allocation2 + $0x8] sm:$0xff]
        %v390 = vld [vmem:[#allocation2 + $0x20] sm:$0xff]
        %v391 = vpack.c.bf16 %v390, %v389
        %s392 = scalar_lea.vmem %s2, 24
        %v393 = vld [vmem:[%s392] sm:$0xf]
        %v394 = vld [vmem:[%s392 + $0x4] sm:$0xf]
        %v395 = vld [vmem:[%s392 + $0x8] sm:$0xf]
        %v396 = vld [vmem:[%s392 + $0xc] sm:$0xf]
        %v397 = vld [vmem:[%s392 + $0x10] sm:$0xf]
        %v398 = vld [vmem:[%s392 + $0x14] sm:$0xf]
        %v405 = vunpack.c.l.b16 %v393
        %v406 = vunpack.c.l.b16 %v394
        %v407 = vunpack.c.l.b16 %v395
        %v408 = vunpack.c.l.b16 %v396
        %v409 = vunpack.c.l.b16 %v397
        %v410 = vunpack.c.l.b16 %v398
        %v411 = vpack.c.b16 %v406, %v405
        %v412 = vpack.c.b16 %v408, %v407
        %v413 = vpack.c.b16 %v410, %v409
        %v418 = vsel %vm295, %v391, 0
        %420 = vmatprep.subr.bf16.mxu0 0
        %421 = vmatpush1.bf16.msra.mxu0 %v411
        %422 = vmatprep.subr.bf16.mxu0 0
        %423 = vmatpush1.bf16.msra.mxu0 %v412
        %424 = vmatprep.subr.bf16.mxu0 0
        %425 = vmatpush1.bf16.msra.mxu0 %v413
        %426 = vmatprep.subr.bf16.mxu0 0
        %427 = vmatpush1.bf16.msra.mxu0 0
        %428 = vmatprep.subr.bf16.mxu0 0
        %429 = vmatpush1.bf16.msra.mxu0 0
        %430 = vmatprep.subr.bf16.mxu0 0
        %431 = vmatpush1.bf16.msra.mxu0 0
        %432 = vmatprep.subr.bf16.mxu0 0
        %433 = vmatpush1.bf16.msra.mxu0 0
        %434 = vmatprep.subr.bf16.mxu0 0
        %435 = vmatpush1.bf16.msra.mxu0 0
        %436 = vmatprep.subr.bf16.mxu0 0
        %437 = vmatpush1.bf16.msra.mxu0 0
        %438 = vmatprep.subr.bf16.mxu0 0
        %439 = vmatpush1.bf16.msra.mxu0 0
        %440 = vmatprep.subr.bf16.mxu0 0
        %441 = vmatpush1.bf16.msra.mxu0 0
        %442 = vmatprep.subr.bf16.mxu0 0
        %443 = vmatpush1.bf16.msra.mxu0 0
        %444 = vmatprep.subr.bf16.mxu0 0
        %445 = vmatpush1.bf16.msra.mxu0 0
        %446 = vmatprep.subr.bf16.mxu0 0
        %447 = vmatpush1.bf16.msra.mxu0 0
        %448 = vmatprep.subr.bf16.mxu0 0
        %449 = vmatpush1.bf16.msra.mxu0 0
        %450 = vmatprep.subr.bf16.mxu0 0
        %451 = vmatpush1.bf16.msra.mxu0 0
        %452 = vmatprep.mubr.bf16.mxu0 0
        %453 = vmatmul.mubr.bf16.gmra.mrb[0].mxu0 %v418
        %v454 = vpop.f32.mrb[0].mxu0
        %v455 = vadd.f32 0.0, %v454
        %v456 = vpop.f32.mrb[0].mxu0
        %v457 = vpop.f32.mrb[0].mxu0
        %v458 = vadd.f32 0.0, %v457
        %v459 = vpop.f32.mrb[0].mxu0
        %460 = vdwg.mxu0
        %v461 = vld [vmem:[#allocation3] sm:$0xff]
        %v462 = vld [vmem:[#allocation3 + $0x8] sm:$0xff]
        %v463 = vadd.f32 %v461, %v455
        %v464 = vadd.f32 %v462, %v458
        %465 = vst.msk [vmem:[#allocation3] sm:$0xff] %vm386, %v463
        %466 = vst.msk [vmem:[#allocation3 + $0x8] sm:$0xff] %vm386, %v464
        %v467 = vld [vmem:[#allocation2 + $0x9] sm:$0xff]
        %v468 = vld [vmem:[#allocation2 + $0x21] sm:$0xff]
        %v469 = vpack.c.bf16 %v468, %v467
        %s470 = scalar_lea.vmem %s2, 48
        %v471 = vld [vmem:[%s470] sm:$0xf]
        %v472 = vld [vmem:[%s470 + $0x4] sm:$0xf]
        %v473 = vld [vmem:[%s470 + $0x8] sm:$0xf]
        %v474 = vld [vmem:[%s470 + $0xc] sm:$0xf]
        %v475 = vld [vmem:[%s470 + $0x10] sm:$0xf]
        %v476 = vld [vmem:[%s470 + $0x14] sm:$0xf]
        %v483 = vunpack.c.l.b16 %v471
        %v484 = vunpack.c.l.b16 %v472
        %v485 = vunpack.c.l.b16 %v473
        %v486 = vunpack.c.l.b16 %v474
        %v487 = vunpack.c.l.b16 %v475
        %v488 = vunpack.c.l.b16 %v476
        %v489 = vpack.c.b16 %v484, %v483
        %v490 = vpack.c.b16 %v486, %v485
        %v491 = vpack.c.b16 %v488, %v487
        %v496 = vsel %vm295, %v469, 0
        %498 = vmatprep.subr.bf16.mxu0 0
        %499 = vmatpush1.bf16.msra.mxu0 %v489
        %500 = vmatprep.subr.bf16.mxu0 0
        %501 = vmatpush1.bf16.msra.mxu0 %v490
        %502 = vmatprep.subr.bf16.mxu0 0
        %503 = vmatpush1.bf16.msra.mxu0 %v491
        %504 = vmatprep.subr.bf16.mxu0 0
        %505 = vmatpush1.bf16.msra.mxu0 0
        %506 = vmatprep.subr.bf16.mxu0 0
        %507 = vmatpush1.bf16.msra.mxu0 0
        %508 = vmatprep.subr.bf16.mxu0 0
        %509 = vmatpush1.bf16.msra.mxu0 0
        %510 = vmatprep.subr.bf16.mxu0 0
        %511 = vmatpush1.bf16.msra.mxu0 0
        %512 = vmatprep.subr.bf16.mxu0 0
        %513 = vmatpush1.bf16.msra.mxu0 0
        %514 = vmatprep.subr.bf16.mxu0 0
        %515 = vmatpush1.bf16.msra.mxu0 0
        %516 = vmatprep.subr.bf16.mxu0 0
        %517 = vmatpush1.bf16.msra.mxu0 0
        %518 = vmatprep.subr.bf16.mxu0 0
        %519 = vmatpush1.bf16.msra.mxu0 0
        %520 = vmatprep.subr.bf16.mxu0 0
        %521 = vmatpush1.bf16.msra.mxu0 0
        %522 = vmatprep.subr.bf16.mxu0 0
        %523 = vmatpush1.bf16.msra.mxu0 0
        %524 = vmatprep.subr.bf16.mxu0 0
        %525 = vmatpush1.bf16.msra.mxu0 0
        %526 = vmatprep.subr.bf16.mxu0 0
        %527 = vmatpush1.bf16.msra.mxu0 0
        %528 = vmatprep.subr.bf16.mxu0 0
        %529 = vmatpush1.bf16.msra.mxu0 0
        %530 = vmatprep.mubr.bf16.mxu0 0
        %531 = vmatmul.mubr.bf16.gmra.mrb[0].mxu0 %v496
        %v532 = vpop.f32.mrb[0].mxu0
        %v533 = vadd.f32 0.0, %v532
        %v534 = vpop.f32.mrb[0].mxu0
        %v535 = vpop.f32.mrb[0].mxu0
        %v536 = vadd.f32 0.0, %v535
        %v537 = vpop.f32.mrb[0].mxu0
        %538 = vdwg.mxu0
        %v539 = vld [vmem:[#allocation3] sm:$0xff]
        %v540 = vld [vmem:[#allocation3 + $0x8] sm:$0xff]
        %v541 = vadd.f32 %v539, %v533
        %v542 = vadd.f32 %v540, %v536
        %543 = vst.msk [vmem:[#allocation3] sm:$0xff] %vm386, %v541
        %544 = vst.msk [vmem:[#allocation3 + $0x8] sm:$0xff] %vm386, %v542
        %v545 = vld [vmem:[%s304 + $0x7] sm:$0xff]
        %v546 = vld [vmem:[%s304 + $0x1f] sm:$0xff]
        %v547 = vpack.c.bf16 %v546, %v545
        %s548 = scalar_lea.vmem %s2, 72
        %v549 = vld [vmem:[%s548] sm:$0xf]
        %v550 = vld [vmem:[%s548 + $0x4] sm:$0xf]
        %v551 = vld [vmem:[%s548 + $0x8] sm:$0xf]
        %v552 = vld [vmem:[%s548 + $0xc] sm:$0xf]
        %v553 = vld [vmem:[%s548 + $0x10] sm:$0xf]
        %v554 = vld [vmem:[%s548 + $0x14] sm:$0xf]
        %v561 = vunpack.c.l.b16 %v549
        %v562 = vunpack.c.l.b16 %v550
        %v563 = vunpack.c.l.b16 %v551
        %v564 = vunpack.c.l.b16 %v552
        %v565 = vunpack.c.l.b16 %v553
        %v566 = vunpack.c.l.b16 %v554
        %v567 = vpack.c.b16 %v562, %v561
        %v568 = vpack.c.b16 %v564, %v563
        %v569 = vpack.c.b16 %v566, %v565
        %v574 = vsel %vm295, %v547, 0
        %576 = vmatprep.subr.bf16.mxu0 0
        %577 = vmatpush1.bf16.msra.mxu0 %v567
        %578 = vmatprep.subr.bf16.mxu0 0
        %579 = vmatpush1.bf16.msra.mxu0 %v568
        %580 = vmatprep.subr.bf16.mxu0 0
        %581 = vmatpush1.bf16.msra.mxu0 %v569
        %582 = vmatprep.subr.bf16.mxu0 0
        %583 = vmatpush1.bf16.msra.mxu0 0
        %584 = vmatprep.subr.bf16.mxu0 0
        %585 = vmatpush1.bf16.msra.mxu0 0
        %586 = vmatprep.subr.bf16.mxu0 0
        %587 = vmatpush1.bf16.msra.mxu0 0
        %588 = vmatprep.subr.bf16.mxu0 0
        %589 = vmatpush1.bf16.msra.mxu0 0
        %590 = vmatprep.subr.bf16.mxu0 0
        %591 = vmatpush1.bf16.msra.mxu0 0
        %592 = vmatprep.subr.bf16.mxu0 0
        %593 = vmatpush1.bf16.msra.mxu0 0
        %594 = vmatprep.subr.bf16.mxu0 0
        %595 = vmatpush1.bf16.msra.mxu0 0
        %596 = vmatprep.subr.bf16.mxu0 0
        %597 = vmatpush1.bf16.msra.mxu0 0
        %598 = vmatprep.subr.bf16.mxu0 0
        %599 = vmatpush1.bf16.msra.mxu0 0
        %600 = vmatprep.subr.bf16.mxu0 0
        %601 = vmatpush1.bf16.msra.mxu0 0
        %602 = vmatprep.subr.bf16.mxu0 0
        %603 = vmatpush1.bf16.msra.mxu0 0
        %604 = vmatprep.subr.bf16.mxu0 0
        %605 = vmatpush1.bf16.msra.mxu0 0
        %606 = vmatprep.subr.bf16.mxu0 0
        %607 = vmatpush1.bf16.msra.mxu0 0
        %608 = vmatprep.mubr.bf16.mxu0 0
        %609 = vmatmul.mubr.bf16.gmra.mrb[0].mxu0 %v574
        %v610 = vpop.f32.mrb[0].mxu0
        %v611 = vadd.f32 0.0, %v610
        %v612 = vpop.f32.mrb[0].mxu0
        %v613 = vpop.f32.mrb[0].mxu0
        %v614 = vadd.f32 0.0, %v613
        %v615 = vpop.f32.mrb[0].mxu0
        %616 = vdwg.mxu0
        %v617 = vld [vmem:[#allocation3] sm:$0xff]
        %v618 = vld [vmem:[#allocation3 + $0x8] sm:$0xff]
        %v619 = vadd.f32 %v617, %v611
        %v620 = vadd.f32 %v618, %v614
        %621 = vst.msk [vmem:[#allocation3] sm:$0xff] %vm386, %v619
        %622 = vst.msk [vmem:[#allocation3 + $0x8] sm:$0xff] %vm386, %v620
        %v623 = vld [vmem:[%s304 + $0x8] sm:$0xff]
        %v624 = vld [vmem:[%s304 + $0x20] sm:$0xff]
        %v625 = vpack.c.bf16 %v624, %v623
        %s626 = scalar_lea.vmem %s2, 96
        %v627 = vld [vmem:[%s626] sm:$0xf]
        %v628 = vld [vmem:[%s626 + $0x4] sm:$0xf]
        %v629 = vld [vmem:[%s626 + $0x8] sm:$0xf]
        %v630 = vld [vmem:[%s626 + $0xc] sm:$0xf]
        %v631 = vld [vmem:[%s626 + $0x10] sm:$0xf]
        %v632 = vld [vmem:[%s626 + $0x14] sm:$0xf]
        %v639 = vunpack.c.l.b16 %v627
        %v640 = vunpack.c.l.b16 %v628
        %v641 = vunpack.c.l.b16 %v629
        %v642 = vunpack.c.l.b16 %v630
        %v643 = vunpack.c.l.b16 %v631
        %v644 = vunpack.c.l.b16 %v632
        %v645 = vpack.c.b16 %v640, %v639
        %v646 = vpack.c.b16 %v642, %v641
        %v647 = vpack.c.b16 %v644, %v643
        %v652 = vsel %vm295, %v625, 0
        %654 = vmatprep.subr.bf16.mxu0 0
        %655 = vmatpush1.bf16.msra.mxu0 %v645
        %656 = vmatprep.subr.bf16.mxu0 0
        %657 = vmatpush1.bf16.msra.mxu0 %v646
        %658 = vmatprep.subr.bf16.mxu0 0
        %659 = vmatpush1.bf16.msra.mxu0 %v647
        %660 = vmatprep.subr.bf16.mxu0 0
        %661 = vmatpush1.bf16.msra.mxu0 0
        %662 = vmatprep.subr.bf16.mxu0 0
        %663 = vmatpush1.bf16.msra.mxu0 0
        %664 = vmatprep.subr.bf16.mxu0 0
        %665 = vmatpush1.bf16.msra.mxu0 0
        %666 = vmatprep.subr.bf16.mxu0 0
        %667 = vmatpush1.bf16.msra.mxu0 0
        %668 = vmatprep.subr.bf16.mxu0 0
        %669 = vmatpush1.bf16.msra.mxu0 0
        %670 = vmatprep.subr.bf16.mxu0 0
        %671 = vmatpush1.bf16.msra.mxu0 0
        %672 = vmatprep.subr.bf16.mxu0 0
        %673 = vmatpush1.bf16.msra.mxu0 0
        %674 = vmatprep.subr.bf16.mxu0 0
        %675 = vmatpush1.bf16.msra.mxu0 0
        %676 = vmatprep.subr.bf16.mxu0 0
        %677 = vmatpush1.bf16.msra.mxu0 0
        %678 = vmatprep.subr.bf16.mxu0 0
        %679 = vmatpush1.bf16.msra.mxu0 0
        %680 = vmatprep.subr.bf16.mxu0 0
        %681 = vmatpush1.bf16.msra.mxu0 0
        %682 = vmatprep.subr.bf16.mxu0 0
        %683 = vmatpush1.bf16.msra.mxu0 0
        %684 = vmatprep.subr.bf16.mxu0 0
        %685 = vmatpush1.bf16.msra.mxu0 0
        %686 = vmatprep.mubr.bf16.mxu0 0
        %687 = vmatmul.mubr.bf16.gmra.mrb[0].mxu0 %v652
        %v688 = vpop.f32.mrb[0].mxu0
        %v689 = vadd.f32 0.0, %v688
        %v690 = vpop.f32.mrb[0].mxu0
        %v691 = vpop.f32.mrb[0].mxu0
        %v692 = vadd.f32 0.0, %v691
        %v693 = vpop.f32.mrb[0].mxu0
        %694 = vdwg.mxu0
        %v695 = vld [vmem:[#allocation3] sm:$0xff]
        %v696 = vld [vmem:[#allocation3 + $0x8] sm:$0xff]
        %v697 = vadd.f32 %v695, %v689
        %v698 = vadd.f32 %v696, %v692
        %699 = vst.msk [vmem:[#allocation3] sm:$0xff] %vm386, %v697
        %700 = vst.msk [vmem:[#allocation3 + $0x8] sm:$0xff] %vm386, %v698
        %v701 = vld [vmem:[%s304 + $0x9] sm:$0xff]
        %v702 = vld [vmem:[%s304 + $0x21] sm:$0xff]
        %v703 = vpack.c.bf16 %v702, %v701
        %s704 = scalar_lea.vmem %s2, 120
        %v705 = vld [vmem:[%s704] sm:$0xf]
        %v706 = vld [vmem:[%s704 + $0x4] sm:$0xf]
        %v707 = vld [vmem:[%s704 + $0x8] sm:$0xf]
        %v708 = vld [vmem:[%s704 + $0xc] sm:$0xf]
        %v709 = vld [vmem:[%s704 + $0x10] sm:$0xf]
        %v710 = vld [vmem:[%s704 + $0x14] sm:$0xf]
        %v717 = vunpack.c.l.b16 %v705
        %v718 = vunpack.c.l.b16 %v706
        %v719 = vunpack.c.l.b16 %v707
        %v720 = vunpack.c.l.b16 %v708
        %v721 = vunpack.c.l.b16 %v709
        %v722 = vunpack.c.l.b16 %v710
        %v723 = vpack.c.b16 %v718, %v717
        %v724 = vpack.c.b16 %v720, %v719
        %v725 = vpack.c.b16 %v722, %v721
        %v730 = vsel %vm295, %v703, 0
        %732 = vmatprep.subr.bf16.mxu0 0
        %733 = vmatpush1.bf16.msra.mxu0 %v723
        %734 = vmatprep.subr.bf16.mxu0 0
        %735 = vmatpush1.bf16.msra.mxu0 %v724
        %736 = vmatprep.subr.bf16.mxu0 0
        %737 = vmatpush1.bf16.msra.mxu0 %v725
        %738 = vmatprep.subr.bf16.mxu0 0
        %739 = vmatpush1.bf16.msra.mxu0 0
        %740 = vmatprep.subr.bf16.mxu0 0
        %741 = vmatpush1.bf16.msra.mxu0 0
        %742 = vmatprep.subr.bf16.mxu0 0
        %743 = vmatpush1.bf16.msra.mxu0 0
        %744 = vmatprep.subr.bf16.mxu0 0
        %745 = vmatpush1.bf16.msra.mxu0 0
        %746 = vmatprep.subr.bf16.mxu0 0
        %747 = vmatpush1.bf16.msra.mxu0 0
        %748 = vmatprep.subr.bf16.mxu0 0
        %749 = vmatpush1.bf16.msra.mxu0 0
        %750 = vmatprep.subr.bf16.mxu0 0
        %751 = vmatpush1.bf16.msra.mxu0 0
        %752 = vmatprep.subr.bf16.mxu0 0
        %753 = vmatpush1.bf16.msra.mxu0 0
        %754 = vmatprep.subr.bf16.mxu0 0
        %755 = vmatpush1.bf16.msra.mxu0 0
        %756 = vmatprep.subr.bf16.mxu0 0
        %757 = vmatpush1.bf16.msra.mxu0 0
        %758 = vmatprep.subr.bf16.mxu0 0
        %759 = vmatpush1.bf16.msra.mxu0 0
        %760 = vmatprep.subr.bf16.mxu0 0
        %761 = vmatpush1.bf16.msra.mxu0 0
        %762 = vmatprep.subr.bf16.mxu0 0
        %763 = vmatpush1.bf16.msra.mxu0 0
        %764 = vmatprep.mubr.bf16.mxu0 0
        %765 = vmatmul.mubr.bf16.gmra.mrb[0].mxu0 %v730
        %v766 = vpop.f32.mrb[0].mxu0
        %v767 = vadd.f32 0.0, %v766
        %v768 = vpop.f32.mrb[0].mxu0
        %v769 = vpop.f32.mrb[0].mxu0
        %v770 = vadd.f32 0.0, %v769
        %v771 = vpop.f32.mrb[0].mxu0
        %772 = vdwg.mxu0
        %v773 = vld [vmem:[#allocation3] sm:$0xff]
        %v774 = vld [vmem:[#allocation3 + $0x8] sm:$0xff]
        %v775 = vadd.f32 %v773, %v767
        %v776 = vadd.f32 %v774, %v770
        %777 = vst.msk [vmem:[#allocation3] sm:$0xff] %vm386, %v775
        %778 = vst.msk [vmem:[#allocation3 + $0x8] sm:$0xff] %vm386, %v776
        %v779 = vld [vmem:[%s313 + $0x7] sm:$0xff]
        %v780 = vld [vmem:[%s313 + $0x1f] sm:$0xff]
        %v781 = vpack.c.bf16 %v780, %v779
        %s782 = scalar_lea.vmem %s2, 144
        %v783 = vld [vmem:[%s782] sm:$0xf]
        %v784 = vld [vmem:[%s782 + $0x4] sm:$0xf]
        %v785 = vld [vmem:[%s782 + $0x8] sm:$0xf]
        %v786 = vld [vmem:[%s782 + $0xc] sm:$0xf]
        %v787 = vld [vmem:[%s782 + $0x10] sm:$0xf]
        %v788 = vld [vmem:[%s782 + $0x14] sm:$0xf]
        %v795 = vunpack.c.l.b16 %v783
        %v796 = vunpack.c.l.b16 %v784
        %v797 = vunpack.c.l.b16 %v785
        %v798 = vunpack.c.l.b16 %v786
        %v799 = vunpack.c.l.b16 %v787
        %v800 = vunpack.c.l.b16 %v788
        %v801 = vpack.c.b16 %v796, %v795
        %v802 = vpack.c.b16 %v798, %v797
        %v803 = vpack.c.b16 %v800, %v799
        %v808 = vsel %vm295, %v781, 0
        %810 = vmatprep.subr.bf16.mxu0 0
        %811 = vmatpush1.bf16.msra.mxu0 %v801
        %812 = vmatprep.subr.bf16.mxu0 0
        %813 = vmatpush1.bf16.msra.mxu0 %v802
        %814 = vmatprep.subr.bf16.mxu0 0
        %815 = vmatpush1.bf16.msra.mxu0 %v803
        %816 = vmatprep.subr.bf16.mxu0 0
        %817 = vmatpush1.bf16.msra.mxu0 0
        %818 = vmatprep.subr.bf16.mxu0 0
        %819 = vmatpush1.bf16.msra.mxu0 0
        %820 = vmatprep.subr.bf16.mxu0 0
        %821 = vmatpush1.bf16.msra.mxu0 0
        %822 = vmatprep.subr.bf16.mxu0 0
        %823 = vmatpush1.bf16.msra.mxu0 0
        %824 = vmatprep.subr.bf16.mxu0 0
        %825 = vmatpush1.bf16.msra.mxu0 0
        %826 = vmatprep.subr.bf16.mxu0 0
        %827 = vmatpush1.bf16.msra.mxu0 0
        %828 = vmatprep.subr.bf16.mxu0 0
        %829 = vmatpush1.bf16.msra.mxu0 0
        %830 = vmatprep.subr.bf16.mxu0 0
        %831 = vmatpush1.bf16.msra.mxu0 0
        %832 = vmatprep.subr.bf16.mxu0 0
        %833 = vmatpush1.bf16.msra.mxu0 0
        %834 = vmatprep.subr.bf16.mxu0 0
        %835 = vmatpush1.bf16.msra.mxu0 0
        %836 = vmatprep.subr.bf16.mxu0 0
        %837 = vmatpush1.bf16.msra.mxu0 0
        %838 = vmatprep.subr.bf16.mxu0 0
        %839 = vmatpush1.bf16.msra.mxu0 0
        %840 = vmatprep.subr.bf16.mxu0 0
        %841 = vmatpush1.bf16.msra.mxu0 0
        %842 = vmatprep.mubr.bf16.mxu0 0
        %843 = vmatmul.mubr.bf16.gmra.mrb[0].mxu0 %v808
        %v844 = vpop.f32.mrb[0].mxu0
        %v845 = vadd.f32 0.0, %v844
        %v846 = vpop.f32.mrb[0].mxu0
        %v847 = vpop.f32.mrb[0].mxu0
        %v848 = vadd.f32 0.0, %v847
        %v849 = vpop.f32.mrb[0].mxu0
        %850 = vdwg.mxu0
        %v851 = vld [vmem:[#allocation3] sm:$0xff]
        %v852 = vld [vmem:[#allocation3 + $0x8] sm:$0xff]
        %v853 = vadd.f32 %v851, %v845
        %v854 = vadd.f32 %v852, %v848
        %855 = vst.msk [vmem:[#allocation3] sm:$0xff] %vm386, %v853
        %856 = vst.msk [vmem:[#allocation3 + $0x8] sm:$0xff] %vm386, %v854
        %v857 = vld [vmem:[%s313 + $0x8] sm:$0xff]
        %v858 = vld [vmem:[%s313 + $0x20] sm:$0xff]
        %v859 = vpack.c.bf16 %v858, %v857
        %s860 = scalar_lea.vmem %s2, 168
        %v861 = vld [vmem:[%s860] sm:$0xf]
        %v862 = vld [vmem:[%s860 + $0x4] sm:$0xf]
        %v863 = vld [vmem:[%s860 + $0x8] sm:$0xf]
        %v864 = vld [vmem:[%s860 + $0xc] sm:$0xf]
        %v865 = vld [vmem:[%s860 + $0x10] sm:$0xf]
        %v866 = vld [vmem:[%s860 + $0x14] sm:$0xf]
        %v873 = vunpack.c.l.b16 %v861
        %v874 = vunpack.c.l.b16 %v862
        %v875 = vunpack.c.l.b16 %v863
        %v876 = vunpack.c.l.b16 %v864
        %v877 = vunpack.c.l.b16 %v865
        %v878 = vunpack.c.l.b16 %v866
        %v879 = vpack.c.b16 %v874, %v873
        %v880 = vpack.c.b16 %v876, %v875
        %v881 = vpack.c.b16 %v878, %v877
        %v886 = vsel %vm295, %v859, 0
        %888 = vmatprep.subr.bf16.mxu0 0
        %889 = vmatpush1.bf16.msra.mxu0 %v879
        %890 = vmatprep.subr.bf16.mxu0 0
        %891 = vmatpush1.bf16.msra.mxu0 %v880
        %892 = vmatprep.subr.bf16.mxu0 0
        %893 = vmatpush1.bf16.msra.mxu0 %v881
        %894 = vmatprep.subr.bf16.mxu0 0
        %895 = vmatpush1.bf16.msra.mxu0 0
        %896 = vmatprep.subr.bf16.mxu0 0
        %897 = vmatpush1.bf16.msra.mxu0 0
        %898 = vmatprep.subr.bf16.mxu0 0
        %899 = vmatpush1.bf16.msra.mxu0 0
        %900 = vmatprep.subr.bf16.mxu0 0
        %901 = vmatpush1.bf16.msra.mxu0 0
        %902 = vmatprep.subr.bf16.mxu0 0
        %903 = vmatpush1.bf16.msra.mxu0 0
        %904 = vmatprep.subr.bf16.mxu0 0
        %905 = vmatpush1.bf16.msra.mxu0 0
        %906 = vmatprep.subr.bf16.mxu0 0
        %907 = vmatpush1.bf16.msra.mxu0 0
        %908 = vmatprep.subr.bf16.mxu0 0
        %909 = vmatpush1.bf16.msra.mxu0 0
        %910 = vmatprep.subr.bf16.mxu0 0
        %911 = vmatpush1.bf16.msra.mxu0 0
        %912 = vmatprep.subr.bf16.mxu0 0
        %913 = vmatpush1.bf16.msra.mxu0 0
        %914 = vmatprep.subr.bf16.mxu0 0
        %915 = vmatpush1.bf16.msra.mxu0 0
        %916 = vmatprep.subr.bf16.mxu0 0
        %917 = vmatpush1.bf16.msra.mxu0 0
        %918 = vmatprep.subr.bf16.mxu0 0
        %919 = vmatpush1.bf16.msra.mxu0 0
        %920 = vmatprep.mubr.bf16.mxu0 0
        %921 = vmatmul.mubr.bf16.gmra.mrb[0].mxu0 %v886
        %v922 = vpop.f32.mrb[0].mxu0
        %v923 = vadd.f32 0.0, %v922
        %v924 = vpop.f32.mrb[0].mxu0
        %v925 = vpop.f32.mrb[0].mxu0
        %v926 = vadd.f32 0.0, %v925
        %v927 = vpop.f32.mrb[0].mxu0
        %928 = vdwg.mxu0
        %v929 = vld [vmem:[#allocation3] sm:$0xff]
        %v930 = vld [vmem:[#allocation3 + $0x8] sm:$0xff]
        %v931 = vadd.f32 %v929, %v923
        %v932 = vadd.f32 %v930, %v926
        %933 = vst.msk [vmem:[#allocation3] sm:$0xff] %vm386, %v931
        %934 = vst.msk [vmem:[#allocation3 + $0x8] sm:$0xff] %vm386, %v932
        %v935 = vld [vmem:[%s313 + $0x9] sm:$0xff]
        %v936 = vld [vmem:[%s313 + $0x21] sm:$0xff]
        %v937 = vpack.c.bf16 %v936, %v935
        %s938 = scalar_lea.vmem %s2, 192
        %v939 = vld [vmem:[%s938] sm:$0xf]
        %v940 = vld [vmem:[%s938 + $0x4] sm:$0xf]
        %v941 = vld [vmem:[%s938 + $0x8] sm:$0xf]
        %v942 = vld [vmem:[%s938 + $0xc] sm:$0xf]
        %v943 = vld [vmem:[%s938 + $0x10] sm:$0xf]
        %v944 = vld [vmem:[%s938 + $0x14] sm:$0xf]
        %v951 = vunpack.c.l.b16 %v939
        %v952 = vunpack.c.l.b16 %v940
        %v953 = vunpack.c.l.b16 %v941
        %v954 = vunpack.c.l.b16 %v942
        %v955 = vunpack.c.l.b16 %v943
        %v956 = vunpack.c.l.b16 %v944
        %v957 = vpack.c.b16 %v952, %v951
        %v958 = vpack.c.b16 %v954, %v953
        %v959 = vpack.c.b16 %v956, %v955
        %v964 = vsel %vm295, %v937, 0
        %966 = vmatprep.subr.bf16.mxu0 0
        %967 = vmatpush1.bf16.msra.mxu0 %v957
        %968 = vmatprep.subr.bf16.mxu0 0
        %969 = vmatpush1.bf16.msra.mxu0 %v958
        %970 = vmatprep.subr.bf16.mxu0 0
        %971 = vmatpush1.bf16.msra.mxu0 %v959
        %972 = vmatprep.subr.bf16.mxu0 0
        %973 = vmatpush1.bf16.msra.mxu0 0
        %974 = vmatprep.subr.bf16.mxu0 0
        %975 = vmatpush1.bf16.msra.mxu0 0
        %976 = vmatprep.subr.bf16.mxu0 0
        %977 = vmatpush1.bf16.msra.mxu0 0
        %978 = vmatprep.subr.bf16.mxu0 0
        %979 = vmatpush1.bf16.msra.mxu0 0
        %980 = vmatprep.subr.bf16.mxu0 0
        %981 = vmatpush1.bf16.msra.mxu0 0
        %982 = vmatprep.subr.bf16.mxu0 0
        %983 = vmatpush1.bf16.msra.mxu0 0
        %984 = vmatprep.subr.bf16.mxu0 0
        %985 = vmatpush1.bf16.msra.mxu0 0
        %986 = vmatprep.subr.bf16.mxu0 0
        %987 = vmatpush1.bf16.msra.mxu0 0
        %988 = vmatprep.subr.bf16.mxu0 0
        %989 = vmatpush1.bf16.msra.mxu0 0
        %990 = vmatprep.subr.bf16.mxu0 0
        %991 = vmatpush1.bf16.msra.mxu0 0
        %992 = vmatprep.subr.bf16.mxu0 0
        %993 = vmatpush1.bf16.msra.mxu0 0
        %994 = vmatprep.subr.bf16.mxu0 0
        %995 = vmatpush1.bf16.msra.mxu0 0
        %996 = vmatprep.subr.bf16.mxu0 0
        %997 = vmatpush1.bf16.msra.mxu0 0
        %998 = vmatprep.mubr.bf16.mxu0 0
        %999 = vmatmul.mubr.bf16.gmra.mrb[0].mxu0 %v964
        %v1000 = vpop.f32.mrb[0].mxu0
        %v1001 = vadd.f32 0.0, %v1000
        %v1002 = vpop.f32.mrb[0].mxu0
        %v1003 = vpop.f32.mrb[0].mxu0
        %v1004 = vadd.f32 0.0, %v1003
        %v1005 = vpop.f32.mrb[0].mxu0
        %1006 = vdwg.mxu0
        %v1007 = vld [vmem:[#allocation3] sm:$0xff]
        %v1008 = vld [vmem:[#allocation3 + $0x8] sm:$0xff]
        %v1009 = vadd.f32 %v1007, %v1001
        %v1010 = vadd.f32 %v1008, %v1004
        %1011 = vst.msk [vmem:[#allocation3] sm:$0xff] %vm386, %v1009
        %1012 = vst.msk [vmem:[#allocation3 + $0x8] sm:$0xff] %vm386, %v1010
        %v1013 = vld [vmem:[%s293] sm:$0x3]
        %v1014 = vld [vmem:[%s293 + $0x2] sm:$0x3]
        %vm1015 = vcmask 254976
        %1016 = vst.msk [vmem:[%s304 + $0x8] sm:$0x3] %vm1015, %v1013
        %1017 = vst.msk [vmem:[%s304 + $0x20] sm:$0x3] %vm1015, %v1014
        %v1018 = vld [vmem:[#allocation2 + $0x7] sm:$0xff]
        %v1019 = vld [vmem:[#allocation2 + $0x1f] sm:$0xff]
        %v1020 = vpack.c.bf16 %v1019, %v1018
        %v1021 = vld [vmem:[%s3] sm:$0xf]
        %v1022 = vld [vmem:[%s3 + $0x4] sm:$0xf]
        %v1023 = vld [vmem:[%s3 + $0x8] sm:$0xf]
        %v1024 = vld [vmem:[%s3 + $0xc] sm:$0xf]
        %v1029 = vunpack.c.l.b16 %v1021
        %v1030 = vunpack.c.l.b16 %v1022
        %v1031 = vunpack.c.l.b16 %v1023
        %v1032 = vunpack.c.l.b16 %v1024
        %v1033 = vpack.c.b16 %v1030, %v1029
        %v1034 = vpack.c.b16 %v1032, %v1031
        %v1038 = vsel %vm386, %v1020, 0
        %1040 = vmatprep.subr.bf16.mxu0 0
        %1041 = vmatpush1.bf16.msra.mxu0 %v1033
        %1042 = vmatprep.subr.bf16.mxu0 0
        %1043 = vmatpush1.bf16.msra.mxu0 %v1034
        %1044 = vmatprep.subr.bf16.mxu0 0
        %1045 = vmatpush1.bf16.msra.mxu0 0
        %1046 = vmatprep.subr.bf16.mxu0 0
        %1047 = vmatpush1.bf16.msra.mxu0 0
        %1048 = vmatprep.subr.bf16.mxu0 0
        %1049 = vmatpush1.bf16.msra.mxu0 0
        %1050 = vmatprep.subr.bf16.mxu0 0
        %1051 = vmatpush1.bf16.msra.mxu0 0
        %1052 = vmatprep.subr.bf16.mxu0 0
        %1053 = vmatpush1.bf16.msra.mxu0 0
        %1054 = vmatprep.subr.bf16.mxu0 0
        %1055 = vmatpush1.bf16.msra.mxu0 0
        %1056 = vmatprep.subr.bf16.mxu0 0
        %1057 = vmatpush1.bf16.msra.mxu0 0
        %1058 = vmatprep.subr.bf16.mxu0 0
        %1059 = vmatpush1.bf16.msra.mxu0 0
        %1060 = vmatprep.subr.bf16.mxu0 0
        %1061 = vmatpush1.bf16.msra.mxu0 0
        %1062 = vmatprep.subr.bf16.mxu0 0
        %1063 = vmatpush1.bf16.msra.mxu0 0
        %1064 = vmatprep.subr.bf16.mxu0 0
        %1065 = vmatpush1.bf16.msra.mxu0 0
        %1066 = vmatprep.subr.bf16.mxu0 0
        %1067 = vmatpush1.bf16.msra.mxu0 0
        %1068 = vmatprep.subr.bf16.mxu0 0
        %1069 = vmatpush1.bf16.msra.mxu0 0
        %1070 = vmatprep.subr.bf16.mxu0 0
        %1071 = vmatpush1.bf16.msra.mxu0 0
        %1072 = vmatprep.mubr.bf16.mxu0 0
        %1073 = vmatmul.mubr.bf16.gmra.mrb[0].mxu0 %v1038
        %v1074 = vpop.f32.mrb[0].mxu0
        %v1075 = vadd.f32 0.0, %v1074
        %v1076 = vpop.f32.mrb[0].mxu0
        %v1077 = vpop.f32.mrb[0].mxu0
        %v1078 = vadd.f32 0.0, %v1077
        %v1079 = vpop.f32.mrb[0].mxu0
        %1080 = vdwg.mxu0
        %v1081 = vld [vmem:[#allocation3] sm:$0xff]
        %v1082 = vld [vmem:[#allocation3 + $0x8] sm:$0xff]
        %v1083 = vadd.f32 %v1081, %v1075
        %v1084 = vadd.f32 %v1082, %v1078
        %1085 = vst.msk [vmem:[#allocation3] sm:$0xff] %vm386, %v1083
        %1086 = vst.msk [vmem:[#allocation3 + $0x8] sm:$0xff] %vm386, %v1084
        %v1087 = vld [vmem:[#allocation2 + $0x8] sm:$0xff]
        %v1088 = vld [vmem:[#allocation2 + $0x20] sm:$0xff]
        %v1089 = vpack.c.bf16 %v1088, %v1087
        %s1090 = scalar_lea.vmem %s3, 16
        %v1091 = vld [vmem:[%s1090] sm:$0xf]
        %v1092 = vld [vmem:[%s1090 + $0x4] sm:$0xf]
        %v1093 = vld [vmem:[%s1090 + $0x8] sm:$0xf]
        %v1094 = vld [vmem:[%s1090 + $0xc] sm:$0xf]
        %v1099 = vunpack.c.l.b16 %v1091
        %v1100 = vunpack.c.l.b16 %v1092
        %v1101 = vunpack.c.l.b16 %v1093
        %v1102 = vunpack.c.l.b16 %v1094
        %v1103 = vpack.c.b16 %v1100, %v1099
        %v1104 = vpack.c.b16 %v1102, %v1101
        %v1108 = vsel %vm386, %v1089, 0
        %1110 = vmatprep.subr.bf16.mxu0 0
        %1111 = vmatpush1.bf16.msra.mxu0 %v1103
        %1112 = vmatprep.subr.bf16.mxu0 0
        %1113 = vmatpush1.bf16.msra.mxu0 %v1104
        %1114 = vmatprep.subr.bf16.mxu0 0
        %1115 = vmatpush1.bf16.msra.mxu0 0
        %1116 = vmatprep.subr.bf16.mxu0 0
        %1117 = vmatpush1.bf16.msra.mxu0 0
        %1118 = vmatprep.subr.bf16.mxu0 0
        %1119 = vmatpush1.bf16.msra.mxu0 0
        %1120 = vmatprep.subr.bf16.mxu0 0
        %1121 = vmatpush1.bf16.msra.mxu0 0
        %1122 = vmatprep.subr.bf16.mxu0 0
        %1123 = vmatpush1.bf16.msra.mxu0 0
        %1124 = vmatprep.subr.bf16.mxu0 0
        %1125 = vmatpush1.bf16.msra.mxu0 0
        %1126 = vmatprep.subr.bf16.mxu0 0
        %1127 = vmatpush1.bf16.msra.mxu0 0
        %1128 = vmatprep.subr.bf16.mxu0 0
        %1129 = vmatpush1.bf16.msra.mxu0 0
        %1130 = vmatprep.subr.bf16.mxu0 0
        %1131 = vmatpush1.bf16.msra.mxu0 0
        %1132 = vmatprep.subr.bf16.mxu0 0
        %1133 = vmatpush1.bf16.msra.mxu0 0
        %1134 = vmatprep.subr.bf16.mxu0 0
        %1135 = vmatpush1.bf16.msra.mxu0 0
        %1136 = vmatprep.subr.bf16.mxu0 0
        %1137 = vmatpush1.bf16.msra.mxu0 0
        %1138 = vmatprep.subr.bf16.mxu0 0
        %1139 = vmatpush1.bf16.msra.mxu0 0
        %1140 = vmatprep.subr.bf16.mxu0 0
        %1141 = vmatpush1.bf16.msra.mxu0 0
        %1142 = vmatprep.mubr.bf16.mxu0 0
        %1143 = vmatmul.mubr.bf16.gmra.mrb[0].mxu0 %v1108
        %v1144 = vpop.f32.mrb[0].mxu0
        %v1145 = vadd.f32 0.0, %v1144
        %v1146 = vpop.f32.mrb[0].mxu0
        %v1147 = vpop.f32.mrb[0].mxu0
        %v1148 = vadd.f32 0.0, %v1147
        %v1149 = vpop.f32.mrb[0].mxu0
        %1150 = vdwg.mxu0
        %v1151 = vld [vmem:[#allocation3] sm:$0xff]
        %v1152 = vld [vmem:[#allocation3 + $0x8] sm:$0xff]
        %v1153 = vadd.f32 %v1151, %v1145
        %v1154 = vadd.f32 %v1152, %v1148
        %1155 = vst.msk [vmem:[#allocation3] sm:$0xff] %vm386, %v1153
        %1156 = vst.msk [vmem:[#allocation3 + $0x8] sm:$0xff] %vm386, %v1154
        %v1157 = vld [vmem:[#allocation2 + $0x9] sm:$0xff]
        %v1158 = vld [vmem:[#allocation2 + $0x21] sm:$0xff]
        %v1159 = vpack.c.bf16 %v1158, %v1157
        %s1160 = scalar_lea.vmem %s3, 32
        %v1161 = vld [vmem:[%s1160] sm:$0xf]
        %v1162 = vld [vmem:[%s1160 + $0x4] sm:$0xf]
        %v1163 = vld [vmem:[%s1160 + $0x8] sm:$0xf]
        %v1164 = vld [vmem:[%s1160 + $0xc] sm:$0xf]
        %v1169 = vunpack.c.l.b16 %v1161
        %v1170 = vunpack.c.l.b16 %v1162
        %v1171 = vunpack.c.l.b16 %v1163
        %v1172 = vunpack.c.l.b16 %v1164
        %v1173 = vpack.c.b16 %v1170, %v1169
        %v1174 = vpack.c.b16 %v1172, %v1171
        %v1178 = vsel %vm386, %v1159, 0
        %1180 = vmatprep.subr.bf16.mxu0 0
        %1181 = vmatpush1.bf16.msra.mxu0 %v1173
        %1182 = vmatprep.subr.bf16.mxu0 0
        %1183 = vmatpush1.bf16.msra.mxu0 %v1174
        %1184 = vmatprep.subr.bf16.mxu0 0
        %1185 = vmatpush1.bf16.msra.mxu0 0
        %1186 = vmatprep.subr.bf16.mxu0 0
        %1187 = vmatpush1.bf16.msra.mxu0 0
        %1188 = vmatprep.subr.bf16.mxu0 0
        %1189 = vmatpush1.bf16.msra.mxu0 0
        %1190 = vmatprep.subr.bf16.mxu0 0
        %1191 = vmatpush1.bf16.msra.mxu0 0
        %1192 = vmatprep.subr.bf16.mxu0 0
        %1193 = vmatpush1.bf16.msra.mxu0 0
        %1194 = vmatprep.subr.bf16.mxu0 0
        %1195 = vmatpush1.bf16.msra.mxu0 0
        %1196 = vmatprep.subr.bf16.mxu0 0
        %1197 = vmatpush1.bf16.msra.mxu0 0
        %1198 = vmatprep.subr.bf16.mxu0 0
        %1199 = vmatpush1.bf16.msra.mxu0 0
        %1200 = vmatprep.subr.bf16.mxu0 0
        %1201 = vmatpush1.bf16.msra.mxu0 0
        %1202 = vmatprep.subr.bf16.mxu0 0
        %1203 = vmatpush1.bf16.msra.mxu0 0
        %1204 = vmatprep.subr.bf16.mxu0 0
        %1205 = vmatpush1.bf16.msra.mxu0 0
        %1206 = vmatprep.subr.bf16.mxu0 0
        %1207 = vmatpush1.bf16.msra.mxu0 0
        %1208 = vmatprep.subr.bf16.mxu0 0
        %1209 = vmatpush1.bf16.msra.mxu0 0
        %1210 = vmatprep.subr.bf16.mxu0 0
        %1211 = vmatpush1.bf16.msra.mxu0 0
        %1212 = vmatprep.mubr.bf16.mxu0 0
        %1213 = vmatmul.mubr.bf16.gmra.mrb[0].mxu0 %v1178
        %v1214 = vpop.f32.mrb[0].mxu0
        %v1215 = vadd.f32 0.0, %v1214
        %v1216 = vpop.f32.mrb[0].mxu0
        %v1217 = vpop.f32.mrb[0].mxu0
        %v1218 = vadd.f32 0.0, %v1217
        %v1219 = vpop.f32.mrb[0].mxu0
        %1220 = vdwg.mxu0
        %v1221 = vld [vmem:[#allocation3] sm:$0xff]
        %v1222 = vld [vmem:[#allocation3 + $0x8] sm:$0xff]
        %v1223 = vadd.f32 %v1221, %v1215
        %v1224 = vadd.f32 %v1222, %v1218
        %1225 = vst.msk [vmem:[#allocation3] sm:$0xff] %vm386, %v1223
        %1226 = vst.msk [vmem:[#allocation3 + $0x8] sm:$0xff] %vm386, %v1224
        %v1227 = vld [vmem:[%s304 + $0x7] sm:$0xff]
        %v1228 = vld [vmem:[%s304 + $0x1f] sm:$0xff]
        %v1229 = vpack.c.bf16 %v1228, %v1227
        %s1230 = scalar_lea.vmem %s3, 48
        %v1231 = vld [vmem:[%s1230] sm:$0xf]
        %v1232 = vld [vmem:[%s1230 + $0x4] sm:$0xf]
        %v1233 = vld [vmem:[%s1230 + $0x8] sm:$0xf]
        %v1234 = vld [vmem:[%s1230 + $0xc] sm:$0xf]
        %v1239 = vunpack.c.l.b16 %v1231
        %v1240 = vunpack.c.l.b16 %v1232
        %v1241 = vunpack.c.l.b16 %v1233
        %v1242 = vunpack.c.l.b16 %v1234
        %v1243 = vpack.c.b16 %v1240, %v1239
        %v1244 = vpack.c.b16 %v1242, %v1241
        %v1248 = vsel %vm386, %v1229, 0
        %1250 = vmatprep.subr.bf16.mxu0 0
        %1251 = vmatpush1.bf16.msra.mxu0 %v1243
        %1252 = vmatprep.subr.bf16.mxu0 0
        %1253 = vmatpush1.bf16.msra.mxu0 %v1244
        %1254 = vmatprep.subr.bf16.mxu0 0
        %1255 = vmatpush1.bf16.msra.mxu0 0
        %1256 = vmatprep.subr.bf16.mxu0 0
        %1257 = vmatpush1.bf16.msra.mxu0 0
        %1258 = vmatprep.subr.bf16.mxu0 0
        %1259 = vmatpush1.bf16.msra.mxu0 0
        %1260 = vmatprep.subr.bf16.mxu0 0
        %1261 = vmatpush1.bf16.msra.mxu0 0
        %1262 = vmatprep.subr.bf16.mxu0 0
        %1263 = vmatpush1.bf16.msra.mxu0 0
        %1264 = vmatprep.subr.bf16.mxu0 0
        %1265 = vmatpush1.bf16.msra.mxu0 0
        %1266 = vmatprep.subr.bf16.mxu0 0
        %1267 = vmatpush1.bf16.msra.mxu0 0
        %1268 = vmatprep.subr.bf16.mxu0 0
        %1269 = vmatpush1.bf16.msra.mxu0 0
        %1270 = vmatprep.subr.bf16.mxu0 0
        %1271 = vmatpush1.bf16.msra.mxu0 0
        %1272 = vmatprep.subr.bf16.mxu0 0
        %1273 = vmatpush1.bf16.msra.mxu0 0
        %1274 = vmatprep.subr.bf16.mxu0 0
        %1275 = vmatpush1.bf16.msra.mxu0 0
        %1276 = vmatprep.subr.bf16.mxu0 0
        %1277 = vmatpush1.bf16.msra.mxu0 0
        %1278 = vmatprep.subr.bf16.mxu0 0
        %1279 = vmatpush1.bf16.msra.mxu0 0
        %1280 = vmatprep.subr.bf16.mxu0 0
        %1281 = vmatpush1.bf16.msra.mxu0 0
        %1282 = vmatprep.mubr.bf16.mxu0 0
        %1283 = vmatmul.mubr.bf16.gmra.mrb[0].mxu0 %v1248
        %v1284 = vpop.f32.mrb[0].mxu0
        %v1285 = vadd.f32 0.0, %v1284
        %v1286 = vpop.f32.mrb[0].mxu0
        %v1287 = vpop.f32.mrb[0].mxu0
        %v1288 = vadd.f32 0.0, %v1287
        %v1289 = vpop.f32.mrb[0].mxu0
        %1290 = vdwg.mxu0
        %v1291 = vld [vmem:[#allocation3] sm:$0xff]
        %v1292 = vld [vmem:[#allocation3 + $0x8] sm:$0xff]
        %v1293 = vadd.f32 %v1291, %v1285
        %v1294 = vadd.f32 %v1292, %v1288
        %1295 = vst.msk [vmem:[#allocation3] sm:$0xff] %vm386, %v1293
        %1296 = vst.msk [vmem:[#allocation3 + $0x8] sm:$0xff] %vm386, %v1294
        %v1297 = vld [vmem:[%s304 + $0x8] sm:$0xff]
        %v1298 = vld [vmem:[%s304 + $0x20] sm:$0xff]
        %v1299 = vpack.c.bf16 %v1298, %v1297
        %s1300 = scalar_lea.vmem %s3, 64
        %v1301 = vld [vmem:[%s1300] sm:$0xf]
        %v1302 = vld [vmem:[%s1300 + $0x4] sm:$0xf]
        %v1303 = vld [vmem:[%s1300 + $0x8] sm:$0xf]
        %v1304 = vld [vmem:[%s1300 + $0xc] sm:$0xf]
        %v1309 = vunpack.c.l.b16 %v1301
        %v1310 = vunpack.c.l.b16 %v1302
        %v1311 = vunpack.c.l.b16 %v1303
        %v1312 = vunpack.c.l.b16 %v1304
        %v1313 = vpack.c.b16 %v1310, %v1309
        %v1314 = vpack.c.b16 %v1312, %v1311
        %v1318 = vsel %vm386, %v1299, 0
        %1320 = vmatprep.subr.bf16.mxu0 0
        %1321 = vmatpush1.bf16.msra.mxu0 %v1313
        %1322 = vmatprep.subr.bf16.mxu0 0
        %1323 = vmatpush1.bf16.msra.mxu0 %v1314
        %1324 = vmatprep.subr.bf16.mxu0 0
        %1325 = vmatpush1.bf16.msra.mxu0 0
        %1326 = vmatprep.subr.bf16.mxu0 0
        %1327 = vmatpush1.bf16.msra.mxu0 0
        %1328 = vmatprep.subr.bf16.mxu0 0
        %1329 = vmatpush1.bf16.msra.mxu0 0
        %1330 = vmatprep.subr.bf16.mxu0 0
        %1331 = vmatpush1.bf16.msra.mxu0 0
        %1332 = vmatprep.subr.bf16.mxu0 0
        %1333 = vmatpush1.bf16.msra.mxu0 0
        %1334 = vmatprep.subr.bf16.mxu0 0
        %1335 = vmatpush1.bf16.msra.mxu0 0
        %1336 = vmatprep.subr.bf16.mxu0 0
        %1337 = vmatpush1.bf16.msra.mxu0 0
        %1338 = vmatprep.subr.bf16.mxu0 0
        %1339 = vmatpush1.bf16.msra.mxu0 0
        %1340 = vmatprep.subr.bf16.mxu0 0
        %1341 = vmatpush1.bf16.msra.mxu0 0
        %1342 = vmatprep.subr.bf16.mxu0 0
        %1343 = vmatpush1.bf16.msra.mxu0 0
        %1344 = vmatprep.subr.bf16.mxu0 0
        %1345 = vmatpush1.bf16.msra.mxu0 0
        %1346 = vmatprep.subr.bf16.mxu0 0
        %1347 = vmatpush1.bf16.msra.mxu0 0
        %1348 = vmatprep.subr.bf16.mxu0 0
        %1349 = vmatpush1.bf16.msra.mxu0 0
        %1350 = vmatprep.subr.bf16.mxu0 0
        %1351 = vmatpush1.bf16.msra.mxu0 0
        %1352 = vmatprep.mubr.bf16.mxu0 0
        %1353 = vmatmul.mubr.bf16.gmra.mrb[0].mxu0 %v1318
        %v1354 = vpop.f32.mrb[0].mxu0
        %v1355 = vadd.f32 0.0, %v1354
        %v1356 = vpop.f32.mrb[0].mxu0
        %v1357 = vpop.f32.mrb[0].mxu0
        %v1358 = vadd.f32 0.0, %v1357
        %v1359 = vpop.f32.mrb[0].mxu0
        %1360 = vdwg.mxu0
        %v1361 = vld [vmem:[#allocation3] sm:$0xff]
        %v1362 = vld [vmem:[#allocation3 + $0x8] sm:$0xff]
        %v1363 = vadd.f32 %v1361, %v1355
        %v1364 = vadd.f32 %v1362, %v1358
        %1365 = vst.msk [vmem:[#allocation3] sm:$0xff] %vm386, %v1363
        %1366 = vst.msk [vmem:[#allocation3 + $0x8] sm:$0xff] %vm386, %v1364
        %v1367 = vld [vmem:[%s304 + $0x9] sm:$0xff]
        %v1368 = vld [vmem:[%s304 + $0x21] sm:$0xff]
        %v1369 = vpack.c.bf16 %v1368, %v1367
        %s1370 = scalar_lea.vmem %s3, 80
        %v1371 = vld [vmem:[%s1370] sm:$0xf]
        %v1372 = vld [vmem:[%s1370 + $0x4] sm:$0xf]
        %v1373 = vld [vmem:[%s1370 + $0x8] sm:$0xf]
        %v1374 = vld [vmem:[%s1370 + $0xc] sm:$0xf]
        %v1379 = vunpack.c.l.b16 %v1371
        %v1380 = vunpack.c.l.b16 %v1372
        %v1381 = vunpack.c.l.b16 %v1373
        %v1382 = vunpack.c.l.b16 %v1374
        %v1383 = vpack.c.b16 %v1380, %v1379
        %v1384 = vpack.c.b16 %v1382, %v1381
        %v1388 = vsel %vm386, %v1369, 0
        %1390 = vmatprep.subr.bf16.mxu0 0
        %1391 = vmatpush1.bf16.msra.mxu0 %v1383
        %1392 = vmatprep.subr.bf16.mxu0 0
        %1393 = vmatpush1.bf16.msra.mxu0 %v1384
        %1394 = vmatprep.subr.bf16.mxu0 0
        %1395 = vmatpush1.bf16.msra.mxu0 0
        %1396 = vmatprep.subr.bf16.mxu0 0
        %1397 = vmatpush1.bf16.msra.mxu0 0
        %1398 = vmatprep.subr.bf16.mxu0 0
        %1399 = vmatpush1.bf16.msra.mxu0 0
        %1400 = vmatprep.subr.bf16.mxu0 0
        %1401 = vmatpush1.bf16.msra.mxu0 0
        %1402 = vmatprep.subr.bf16.mxu0 0
        %1403 = vmatpush1.bf16.msra.mxu0 0
        %1404 = vmatprep.subr.bf16.mxu0 0
        %1405 = vmatpush1.bf16.msra.mxu0 0
        %1406 = vmatprep.subr.bf16.mxu0 0
        %1407 = vmatpush1.bf16.msra.mxu0 0
        %1408 = vmatprep.subr.bf16.mxu0 0
        %1409 = vmatpush1.bf16.msra.mxu0 0
        %1410 = vmatprep.subr.bf16.mxu0 0
        %1411 = vmatpush1.bf16.msra.mxu0 0
        %1412 = vmatprep.subr.bf16.mxu0 0
        %1413 = vmatpush1.bf16.msra.mxu0 0
        %1414 = vmatprep.subr.bf16.mxu0 0
        %1415 = vmatpush1.bf16.msra.mxu0 0
        %1416 = vmatprep.subr.bf16.mxu0 0
        %1417 = vmatpush1.bf16.msra.mxu0 0
        %1418 = vmatprep.subr.bf16.mxu0 0
        %1419 = vmatpush1.bf16.msra.mxu0 0
        %1420 = vmatprep.subr.bf16.mxu0 0
        %1421 = vmatpush1.bf16.msra.mxu0 0
        %1422 = vmatprep.mubr.bf16.mxu0 0
        %1423 = vmatmul.mubr.bf16.gmra.mrb[0].mxu0 %v1388
        %v1424 = vpop.f32.mrb[0].mxu0
        %v1425 = vadd.f32 0.0, %v1424
        %v1426 = vpop.f32.mrb[0].mxu0
        %v1427 = vpop.f32.mrb[0].mxu0
        %v1428 = vadd.f32 0.0, %v1427
        %v1429 = vpop.f32.mrb[0].mxu0
        %1430 = vdwg.mxu0
        %v1431 = vld [vmem:[#allocation3] sm:$0xff]
        %v1432 = vld [vmem:[#allocation3 + $0x8] sm:$0xff]
        %v1433 = vadd.f32 %v1431, %v1425
        %v1434 = vadd.f32 %v1432, %v1428
        %1435 = vst.msk [vmem:[#allocation3] sm:$0xff] %vm386, %v1433
        %1436 = vst.msk [vmem:[#allocation3 + $0x8] sm:$0xff] %vm386, %v1434
        %v1437 = vld [vmem:[%s313 + $0x7] sm:$0xff]
        %v1438 = vld [vmem:[%s313 + $0x1f] sm:$0xff]
        %v1439 = vpack.c.bf16 %v1438, %v1437
        %s1440 = scalar_lea.vmem %s3, 96
        %v1441 = vld [vmem:[%s1440] sm:$0xf]
        %v1442 = vld [vmem:[%s1440 + $0x4] sm:$0xf]
        %v1443 = vld [vmem:[%s1440 + $0x8] sm:$0xf]
        %v1444 = vld [vmem:[%s1440 + $0xc] sm:$0xf]
        %v1449 = vunpack.c.l.b16 %v1441
        %v1450 = vunpack.c.l.b16 %v1442
        %v1451 = vunpack.c.l.b16 %v1443
        %v1452 = vunpack.c.l.b16 %v1444
        %v1453 = vpack.c.b16 %v1450, %v1449
        %v1454 = vpack.c.b16 %v1452, %v1451
        %v1458 = vsel %vm386, %v1439, 0
        %1460 = vmatprep.subr.bf16.mxu0 0
        %1461 = vmatpush1.bf16.msra.mxu0 %v1453
        %1462 = vmatprep.subr.bf16.mxu0 0
        %1463 = vmatpush1.bf16.msra.mxu0 %v1454
        %1464 = vmatprep.subr.bf16.mxu0 0
        %1465 = vmatpush1.bf16.msra.mxu0 0
        %1466 = vmatprep.subr.bf16.mxu0 0
        %1467 = vmatpush1.bf16.msra.mxu0 0
        %1468 = vmatprep.subr.bf16.mxu0 0
        %1469 = vmatpush1.bf16.msra.mxu0 0
        %1470 = vmatprep.subr.bf16.mxu0 0
        %1471 = vmatpush1.bf16.msra.mxu0 0
        %1472 = vmatprep.subr.bf16.mxu0 0
        %1473 = vmatpush1.bf16.msra.mxu0 0
        %1474 = vmatprep.subr.bf16.mxu0 0
        %1475 = vmatpush1.bf16.msra.mxu0 0
        %1476 = vmatprep.subr.bf16.mxu0 0
        %1477 = vmatpush1.bf16.msra.mxu0 0
        %1478 = vmatprep.subr.bf16.mxu0 0
        %1479 = vmatpush1.bf16.msra.mxu0 0
        %1480 = vmatprep.subr.bf16.mxu0 0
        %1481 = vmatpush1.bf16.msra.mxu0 0
        %1482 = vmatprep.subr.bf16.mxu0 0
        %1483 = vmatpush1.bf16.msra.mxu0 0
        %1484 = vmatprep.subr.bf16.mxu0 0
        %1485 = vmatpush1.bf16.msra.mxu0 0
        %1486 = vmatprep.subr.bf16.mxu0 0
        %1487 = vmatpush1.bf16.msra.mxu0 0
        %1488 = vmatprep.subr.bf16.mxu0 0
        %1489 = vmatpush1.bf16.msra.mxu0 0
        %1490 = vmatprep.subr.bf16.mxu0 0
        %1491 = vmatpush1.bf16.msra.mxu0 0
        %1492 = vmatprep.mubr.bf16.mxu0 0
        %1493 = vmatmul.mubr.bf16.gmra.mrb[0].mxu0 %v1458
        %v1494 = vpop.f32.mrb[0].mxu0
        %v1495 = vadd.f32 0.0, %v1494
        %v1496 = vpop.f32.mrb[0].mxu0
        %v1497 = vpop.f32.mrb[0].mxu0
        %v1498 = vadd.f32 0.0, %v1497
        %v1499 = vpop.f32.mrb[0].mxu0
        %1500 = vdwg.mxu0
        %v1501 = vld [vmem:[#allocation3] sm:$0xff]
        %v1502 = vld [vmem:[#allocation3 + $0x8] sm:$0xff]
        %v1503 = vadd.f32 %v1501, %v1495
        %v1504 = vadd.f32 %v1502, %v1498
        %1505 = vst.msk [vmem:[#allocation3] sm:$0xff] %vm386, %v1503
        %1506 = vst.msk [vmem:[#allocation3 + $0x8] sm:$0xff] %vm386, %v1504
        %v1507 = vld [vmem:[%s313 + $0x8] sm:$0xff]
        %v1508 = vld [vmem:[%s313 + $0x20] sm:$0xff]
        %v1509 = vpack.c.bf16 %v1508, %v1507
        %s1510 = scalar_lea.vmem %s3, 112
        %v1511 = vld [vmem:[%s1510] sm:$0xf]
        %v1512 = vld [vmem:[%s1510 + $0x4] sm:$0xf]
        %v1513 = vld [vmem:[%s1510 + $0x8] sm:$0xf]
        %v1514 = vld [vmem:[%s1510 + $0xc] sm:$0xf]
        %v1519 = vunpack.c.l.b16 %v1511
        %v1520 = vunpack.c.l.b16 %v1512
        %v1521 = vunpack.c.l.b16 %v1513
        %v1522 = vunpack.c.l.b16 %v1514
        %v1523 = vpack.c.b16 %v1520, %v1519
        %v1524 = vpack.c.b16 %v1522, %v1521
        %v1528 = vsel %vm386, %v1509, 0
        %1530 = vmatprep.subr.bf16.mxu0 0
        %1531 = vmatpush1.bf16.msra.mxu0 %v1523
        %1532 = vmatprep.subr.bf16.mxu0 0
        %1533 = vmatpush1.bf16.msra.mxu0 %v1524
        %1534 = vmatprep.subr.bf16.mxu0 0
        %1535 = vmatpush1.bf16.msra.mxu0 0
        %1536 = vmatprep.subr.bf16.mxu0 0
        %1537 = vmatpush1.bf16.msra.mxu0 0
        %1538 = vmatprep.subr.bf16.mxu0 0
        %1539 = vmatpush1.bf16.msra.mxu0 0
        %1540 = vmatprep.subr.bf16.mxu0 0
        %1541 = vmatpush1.bf16.msra.mxu0 0
        %1542 = vmatprep.subr.bf16.mxu0 0
        %1543 = vmatpush1.bf16.msra.mxu0 0
        %1544 = vmatprep.subr.bf16.mxu0 0
        %1545 = vmatpush1.bf16.msra.mxu0 0
        %1546 = vmatprep.subr.bf16.mxu0 0
        %1547 = vmatpush1.bf16.msra.mxu0 0
        %1548 = vmatprep.subr.bf16.mxu0 0
        %1549 = vmatpush1.bf16.msra.mxu0 0
        %1550 = vmatprep.subr.bf16.mxu0 0
        %1551 = vmatpush1.bf16.msra.mxu0 0
        %1552 = vmatprep.subr.bf16.mxu0 0
        %1553 = vmatpush1.bf16.msra.mxu0 0
        %1554 = vmatprep.subr.bf16.mxu0 0
        %1555 = vmatpush1.bf16.msra.mxu0 0
        %1556 = vmatprep.subr.bf16.mxu0 0
        %1557 = vmatpush1.bf16.msra.mxu0 0
        %1558 = vmatprep.subr.bf16.mxu0 0
        %1559 = vmatpush1.bf16.msra.mxu0 0
        %1560 = vmatprep.subr.bf16.mxu0 0
        %1561 = vmatpush1.bf16.msra.mxu0 0
        %1562 = vmatprep.mubr.bf16.mxu0 0
        %1563 = vmatmul.mubr.bf16.gmra.mrb[0].mxu0 %v1528
        %v1564 = vpop.f32.mrb[0].mxu0
        %v1565 = vadd.f32 0.0, %v1564
        %v1566 = vpop.f32.mrb[0].mxu0
        %v1567 = vpop.f32.mrb[0].mxu0
        %v1568 = vadd.f32 0.0, %v1567
        %v1569 = vpop.f32.mrb[0].mxu0
        %1570 = vdwg.mxu0
        %v1571 = vld [vmem:[#allocation3] sm:$0xff]
        %v1572 = vld [vmem:[#allocation3 + $0x8] sm:$0xff]
        %v1573 = vadd.f32 %v1571, %v1565
        %v1574 = vadd.f32 %v1572, %v1568
        %1575 = vst.msk [vmem:[#allocation3] sm:$0xff] %vm386, %v1573
        %1576 = vst.msk [vmem:[#allocation3 + $0x8] sm:$0xff] %vm386, %v1574
        %v1577 = vld [vmem:[%s313 + $0x9] sm:$0xff]
        %v1578 = vld [vmem:[%s313 + $0x21] sm:$0xff]
        %v1579 = vpack.c.bf16 %v1578, %v1577
        %s1580 = scalar_lea.vmem %s3, 128
        %v1581 = vld [vmem:[%s1580] sm:$0xf]
        %v1582 = vld [vmem:[%s1580 + $0x4] sm:$0xf]
        %v1583 = vld [vmem:[%s1580 + $0x8] sm:$0xf]
        %v1584 = vld [vmem:[%s1580 + $0xc] sm:$0xf]
        %v1589 = vunpack.c.l.b16 %v1581
        %v1590 = vunpack.c.l.b16 %v1582
        %v1591 = vunpack.c.l.b16 %v1583
        %v1592 = vunpack.c.l.b16 %v1584
        %v1593 = vpack.c.b16 %v1590, %v1589
        %v1594 = vpack.c.b16 %v1592, %v1591
        %v1598 = vsel %vm386, %v1579, 0
        %1600 = vmatprep.subr.bf16.mxu0 0
        %1601 = vmatpush1.bf16.msra.mxu0 %v1593
        %1602 = vmatprep.subr.bf16.mxu0 0
        %1603 = vmatpush1.bf16.msra.mxu0 %v1594
        %1604 = vmatprep.subr.bf16.mxu0 0
        %1605 = vmatpush1.bf16.msra.mxu0 0
        %1606 = vmatprep.subr.bf16.mxu0 0
        %1607 = vmatpush1.bf16.msra.mxu0 0
        %1608 = vmatprep.subr.bf16.mxu0 0
        %1609 = vmatpush1.bf16.msra.mxu0 0
        %1610 = vmatprep.subr.bf16.mxu0 0
        %1611 = vmatpush1.bf16.msra.mxu0 0
        %1612 = vmatprep.subr.bf16.mxu0 0
        %1613 = vmatpush1.bf16.msra.mxu0 0
        %1614 = vmatprep.subr.bf16.mxu0 0
        %1615 = vmatpush1.bf16.msra.mxu0 0
        %1616 = vmatprep.subr.bf16.mxu0 0
        %1617 = vmatpush1.bf16.msra.mxu0 0
        %1618 = vmatprep.subr.bf16.mxu0 0
        %1619 = vmatpush1.bf16.msra.mxu0 0
        %1620 = vmatprep.subr.bf16.mxu0 0
        %1621 = vmatpush1.bf16.msra.mxu0 0
        %1622 = vmatprep.subr.bf16.mxu0 0
        %1623 = vmatpush1.bf16.msra.mxu0 0
        %1624 = vmatprep.subr.bf16.mxu0 0
        %1625 = vmatpush1.bf16.msra.mxu0 0
        %1626 = vmatprep.subr.bf16.mxu0 0
        %1627 = vmatpush1.bf16.msra.mxu0 0
        %1628 = vmatprep.subr.bf16.mxu0 0
        %1629 = vmatpush1.bf16.msra.mxu0 0
        %1630 = vmatprep.subr.bf16.mxu0 0
        %1631 = vmatpush1.bf16.msra.mxu0 0
        %1632 = vmatprep.mubr.bf16.mxu0 0
        %1633 = vmatmul.mubr.bf16.gmra.mrb[0].mxu0 %v1598
        %v1634 = vpop.f32.mrb[0].mxu0
        %v1635 = vadd.f32 0.0, %v1634
        %v1636 = vpop.f32.mrb[0].mxu0
        %v1637 = vpop.f32.mrb[0].mxu0
        %v1638 = vadd.f32 0.0, %v1637
        %v1639 = vpop.f32.mrb[0].mxu0
        %1640 = vdwg.mxu0
        %v1641 = vld [vmem:[#allocation3] sm:$0xff]
        %v1642 = vld [vmem:[#allocation3 + $0x8] sm:$0xff]
        %v1643 = vadd.f32 %v1641, %v1635
        %v1644 = vadd.f32 %v1642, %v1638
        %1645 = vst.msk [vmem:[#allocation3] sm:$0xff] %vm386, %v1643
        %1646 = vst.msk [vmem:[#allocation3 + $0x8] sm:$0xff] %vm386, %v1644
        %v1647 = vld [vmem:[#allocation3] sm:$0xff]
        %v1648 = vld [vmem:[#allocation3 + $0x8] sm:$0xff]
        %v1649 = vld [vmem:[%s4] sm:$0x1]
        %v1651 = vlaneseq
        %v1652 = vshrl.u32 %v1651, 7
        %v1653 = vsub.s32 0, %v1652
        %v1654 = vrot.slane %v1649, %v1653
        %v1656 = vadd.f32 %v1647, %v1654
        %v1657 = vadd.f32 %v1648, %v1654
        %v1658 = vmax.f32 %v1656, 0.0
        %v1659 = vmax.f32 %v1657, 0.0
        %1660 = vst.msk [vmem:[%s304 + $0x8] sm:$0x3] %vm1015, %v1658
        %1661 = vst.msk [vmem:[%s304 + $0x20] sm:$0x3] %vm1015, %v1659
        %v1662 = vld [vmem:[#allocation2 + $0x7] sm:$0xff]
        %v1663 = vld [vmem:[#allocation2 + $0x1f] sm:$0xff]
        %v1664 = vpack.c.bf16 %v1663, %v1662
        %v1665 = vld [vmem:[%s5] sm:$0xf]
        %v1666 = vld [vmem:[%s5 + $0x4] sm:$0xf]
        %v1667 = vld [vmem:[%s5 + $0x8] sm:$0xf]
        %v1668 = vld [vmem:[%s5 + $0xc] sm:$0xf]
        %v1673 = vunpack.c.l.b16 %v1665
        %v1674 = vunpack.c.l.b16 %v1666
        %v1675 = vunpack.c.l.b16 %v1667
        %v1676 = vunpack.c.l.b16 %v1668
        %v1677 = vpack.c.b16 %v1674, %v1673
        %v1678 = vpack.c.b16 %v1676, %v1675
        %v1682 = vsel %vm386, %v1664, 0
        %1684 = vmatprep.subr.bf16.mxu0 0
        %1685 = vmatpush1.bf16.msra.mxu0 %v1677
        %1686 = vmatprep.subr.bf16.mxu0 0
        %1687 = vmatpush1.bf16.msra.mxu0 %v1678
        %1688 = vmatprep.subr.bf16.mxu0 0
        %1689 = vmatpush1.bf16.msra.mxu0 0
        %1690 = vmatprep.subr.bf16.mxu0 0
        %1691 = vmatpush1.bf16.msra.mxu0 0
        %1692 = vmatprep.subr.bf16.mxu0 0
        %1693 = vmatpush1.bf16.msra.mxu0 0
        %1694 = vmatprep.subr.bf16.mxu0 0
        %1695 = vmatpush1.bf16.msra.mxu0 0
        %1696 = vmatprep.subr.bf16.mxu0 0
        %1697 = vmatpush1.bf16.msra.mxu0 0
        %1698 = vmatprep.subr.bf16.mxu0 0
        %1699 = vmatpush1.bf16.msra.mxu0 0
        %1700 = vmatprep.subr.bf16.mxu0 0
        %1701 = vmatpush1.bf16.msra.mxu0 0
        %1702 = vmatprep.subr.bf16.mxu0 0
        %1703 = vmatpush1.bf16.msra.mxu0 0
        %1704 = vmatprep.subr.bf16.mxu0 0
        %1705 = vmatpush1.bf16.msra.mxu0 0
        %1706 = vmatprep.subr.bf16.mxu0 0
        %1707 = vmatpush1.bf16.msra.mxu0 0
        %1708 = vmatprep.subr.bf16.mxu0 0
        %1709 = vmatpush1.bf16.msra.mxu0 0
        %1710 = vmatprep.subr.bf16.mxu0 0
        %1711 = vmatpush1.bf16.msra.mxu0 0
        %1712 = vmatprep.subr.bf16.mxu0 0
        %1713 = vmatpush1.bf16.msra.mxu0 0
        %1714 = vmatprep.subr.bf16.mxu0 0
        %1715 = vmatpush1.bf16.msra.mxu0 0
        %1716 = vmatprep.mubr.bf16.mxu0 0
        %1717 = vmatmul.mubr.bf16.gmra.mrb[0].mxu0 %v1682
        %v1718 = vpop.f32.mrb[0].mxu0
        %v1719 = vadd.f32 0.0, %v1718
        %v1720 = vpop.f32.mrb[0].mxu0
        %v1721 = vpop.f32.mrb[0].mxu0
        %v1722 = vadd.f32 0.0, %v1721
        %v1723 = vpop.f32.mrb[0].mxu0
        %1724 = vdwg.mxu0
        %1725 = vst.msk [vmem:[#allocation3] sm:$0xff] %vm386, %v1719
        %1726 = vst.msk [vmem:[#allocation3 + $0x8] sm:$0xff] %vm386, %v1722
        %v1727 = vld [vmem:[#allocation2 + $0x8] sm:$0xff]
        %v1728 = vld [vmem:[#allocation2 + $0x20] sm:$0xff]
        %v1729 = vpack.c.bf16 %v1728, %v1727
        %s1730 = scalar_lea.vmem %s5, 16
        %v1731 = vld [vmem:[%s1730] sm:$0xf]
        %v1732 = vld [vmem:[%s1730 + $0x4] sm:$0xf]
        %v1733 = vld [vmem:[%s1730 + $0x8] sm:$0xf]
        %v1734 = vld [vmem:[%s1730 + $0xc] sm:$0xf]
        %v1739 = vunpack.c.l.b16 %v1731
        %v1740 = vunpack.c.l.b16 %v1732
        %v1741 = vunpack.c.l.b16 %v1733
        %v1742 = vunpack.c.l.b16 %v1734
        %v1743 = vpack.c.b16 %v1740, %v1739
        %v1744 = vpack.c.b16 %v1742, %v1741
        %v1748 = vsel %vm386, %v1729, 0
        %1750 = vmatprep.subr.bf16.mxu0 0
        %1751 = vmatpush1.bf16.msra.mxu0 %v1743
        %1752 = vmatprep.subr.bf16.mxu0 0
        %1753 = vmatpush1.bf16.msra.mxu0 %v1744
        %1754 = vmatprep.subr.bf16.mxu0 0
        %1755 = vmatpush1.bf16.msra.mxu0 0
        %1756 = vmatprep.subr.bf16.mxu0 0
        %1757 = vmatpush1.bf16.msra.mxu0 0
        %1758 = vmatprep.subr.bf16.mxu0 0
        %1759 = vmatpush1.bf16.msra.mxu0 0
        %1760 = vmatprep.subr.bf16.mxu0 0
        %1761 = vmatpush1.bf16.msra.mxu0 0
        %1762 = vmatprep.subr.bf16.mxu0 0
        %1763 = vmatpush1.bf16.msra.mxu0 0
        %1764 = vmatprep.subr.bf16.mxu0 0
        %1765 = vmatpush1.bf16.msra.mxu0 0
        %1766 = vmatprep.subr.bf16.mxu0 0
        %1767 = vmatpush1.bf16.msra.mxu0 0
        %1768 = vmatprep.subr.bf16.mxu0 0
        %1769 = vmatpush1.bf16.msra.mxu0 0
        %1770 = vmatprep.subr.bf16.mxu0 0
        %1771 = vmatpush1.bf16.msra.mxu0 0
        %1772 = vmatprep.subr.bf16.mxu0 0
        %1773 = vmatpush1.bf16.msra.mxu0 0
        %1774 = vmatprep.subr.bf16.mxu0 0
        %1775 = vmatpush1.bf16.msra.mxu0 0
        %1776 = vmatprep.subr.bf16.mxu0 0
        %1777 = vmatpush1.bf16.msra.mxu0 0
        %1778 = vmatprep.subr.bf16.mxu0 0
        %1779 = vmatpush1.bf16.msra.mxu0 0
        %1780 = vmatprep.subr.bf16.mxu0 0
        %1781 = vmatpush1.bf16.msra.mxu0 0
        %1782 = vmatprep.mubr.bf16.mxu0 0
        %1783 = vmatmul.mubr.bf16.gmra.mrb[0].mxu0 %v1748
        %v1784 = vpop.f32.mrb[0].mxu0
        %v1785 = vadd.f32 0.0, %v1784
        %v1786 = vpop.f32.mrb[0].mxu0
        %v1787 = vpop.f32.mrb[0].mxu0
        %v1788 = vadd.f32 0.0, %v1787
        %v1789 = vpop.f32.mrb[0].mxu0
        %1790 = vdwg.mxu0
        %v1791 = vld [vmem:[#allocation3] sm:$0xff]
        %v1792 = vld [vmem:[#allocation3 + $0x8] sm:$0xff]
        %v1793 = vadd.f32 %v1791, %v1785
        %v1794 = vadd.f32 %v1792, %v1788
        %1795 = vst.msk [vmem:[#allocation3] sm:$0xff] %vm386, %v1793
        %1796 = vst.msk [vmem:[#allocation3 + $0x8] sm:$0xff] %vm386, %v1794
        %v1797 = vld [vmem:[#allocation2 + $0x9] sm:$0xff]
        %v1798 = vld [vmem:[#allocation2 + $0x21] sm:$0xff]
        %v1799 = vpack.c.bf16 %v1798, %v1797
        %s1800 = scalar_lea.vmem %s5, 32
        %v1801 = vld [vmem:[%s1800] sm:$0xf]
        %v1802 = vld [vmem:[%s1800 + $0x4] sm:$0xf]
        %v1803 = vld [vmem:[%s1800 + $0x8] sm:$0xf]
        %v1804 = vld [vmem:[%s1800 + $0xc] sm:$0xf]
        %v1809 = vunpack.c.l.b16 %v1801
        %v1810 = vunpack.c.l.b16 %v1802
        %v1811 = vunpack.c.l.b16 %v1803
        %v1812 = vunpack.c.l.b16 %v1804
        %v1813 = vpack.c.b16 %v1810, %v1809
        %v1814 = vpack.c.b16 %v1812, %v1811
        %v1818 = vsel %vm386, %v1799, 0
        %1820 = vmatprep.subr.bf16.mxu0 0
        %1821 = vmatpush1.bf16.msra.mxu0 %v1813
        %1822 = vmatprep.subr.bf16.mxu0 0
        %1823 = vmatpush1.bf16.msra.mxu0 %v1814
        %1824 = vmatprep.subr.bf16.mxu0 0
        %1825 = vmatpush1.bf16.msra.mxu0 0
        %1826 = vmatprep.subr.bf16.mxu0 0
        %1827 = vmatpush1.bf16.msra.mxu0 0
        %1828 = vmatprep.subr.bf16.mxu0 0
        %1829 = vmatpush1.bf16.msra.mxu0 0
        %1830 = vmatprep.subr.bf16.mxu0 0
        %1831 = vmatpush1.bf16.msra.mxu0 0
        %1832 = vmatprep.subr.bf16.mxu0 0
        %1833 = vmatpush1.bf16.msra.mxu0 0
        %1834 = vmatprep.subr.bf16.mxu0 0
        %1835 = vmatpush1.bf16.msra.mxu0 0
        %1836 = vmatprep.subr.bf16.mxu0 0
        %1837 = vmatpush1.bf16.msra.mxu0 0
        %1838 = vmatprep.subr.bf16.mxu0 0
        %1839 = vmatpush1.bf16.msra.mxu0 0
        %1840 = vmatprep.subr.bf16.mxu0 0
        %1841 = vmatpush1.bf16.msra.mxu0 0
        %1842 = vmatprep.subr.bf16.mxu0 0
        %1843 = vmatpush1.bf16.msra.mxu0 0
        %1844 = vmatprep.subr.bf16.mxu0 0
        %1845 = vmatpush1.bf16.msra.mxu0 0
        %1846 = vmatprep.subr.bf16.mxu0 0
        %1847 = vmatpush1.bf16.msra.mxu0 0
        %1848 = vmatprep.subr.bf16.mxu0 0
        %1849 = vmatpush1.bf16.msra.mxu0 0
        %1850 = vmatprep.subr.bf16.mxu0 0
        %1851 = vmatpush1.bf16.msra.mxu0 0
        %1852 = vmatprep.mubr.bf16.mxu0 0
        %1853 = vmatmul.mubr.bf16.gmra.mrb[0].mxu0 %v1818
        %v1854 = vpop.f32.mrb[0].mxu0
        %v1855 = vadd.f32 0.0, %v1854
        %v1856 = vpop.f32.mrb[0].mxu0
        %v1857 = vpop.f32.mrb[0].mxu0
        %v1858 = vadd.f32 0.0, %v1857
        %v1859 = vpop.f32.mrb[0].mxu0
        %1860 = vdwg.mxu0
        %v1861 = vld [vmem:[#allocation3] sm:$0xff]
        %v1862 = vld [vmem:[#allocation3 + $0x8] sm:$0xff]
        %v1863 = vadd.f32 %v1861, %v1855
        %v1864 = vadd.f32 %v1862, %v1858
        %1865 = vst.msk [vmem:[#allocation3] sm:$0xff] %vm386, %v1863
        %1866 = vst.msk [vmem:[#allocation3 + $0x8] sm:$0xff] %vm386, %v1864
        %v1867 = vld [vmem:[%s304 + $0x7] sm:$0xff]
        %v1868 = vld [vmem:[%s304 + $0x1f] sm:$0xff]
        %v1869 = vpack.c.bf16 %v1868, %v1867
        %s1870 = scalar_lea.vmem %s5, 48
        %v1871 = vld [vmem:[%s1870] sm:$0xf]
        %v1872 = vld [vmem:[%s1870 + $0x4] sm:$0xf]
        %v1873 = vld [vmem:[%s1870 + $0x8] sm:$0xf]
        %v1874 = vld [vmem:[%s1870 + $0xc] sm:$0xf]
        %v1879 = vunpack.c.l.b16 %v1871
        %v1880 = vunpack.c.l.b16 %v1872
        %v1881 = vunpack.c.l.b16 %v1873
        %v1882 = vunpack.c.l.b16 %v1874
        %v1883 = vpack.c.b16 %v1880, %v1879
        %v1884 = vpack.c.b16 %v1882, %v1881
        %v1888 = vsel %vm386, %v1869, 0
        %1890 = vmatprep.subr.bf16.mxu0 0
        %1891 = vmatpush1.bf16.msra.mxu0 %v1883
        %1892 = vmatprep.subr.bf16.mxu0 0
        %1893 = vmatpush1.bf16.msra.mxu0 %v1884
        %1894 = vmatprep.subr.bf16.mxu0 0
        %1895 = vmatpush1.bf16.msra.mxu0 0
        %1896 = vmatprep.subr.bf16.mxu0 0
        %1897 = vmatpush1.bf16.msra.mxu0 0
        %1898 = vmatprep.subr.bf16.mxu0 0
        %1899 = vmatpush1.bf16.msra.mxu0 0
        %1900 = vmatprep.subr.bf16.mxu0 0
        %1901 = vmatpush1.bf16.msra.mxu0 0
        %1902 = vmatprep.subr.bf16.mxu0 0
        %1903 = vmatpush1.bf16.msra.mxu0 0
        %1904 = vmatprep.subr.bf16.mxu0 0
        %1905 = vmatpush1.bf16.msra.mxu0 0
        %1906 = vmatprep.subr.bf16.mxu0 0
        %1907 = vmatpush1.bf16.msra.mxu0 0
        %1908 = vmatprep.subr.bf16.mxu0 0
        %1909 = vmatpush1.bf16.msra.mxu0 0
        %1910 = vmatprep.subr.bf16.mxu0 0
        %1911 = vmatpush1.bf16.msra.mxu0 0
        %1912 = vmatprep.subr.bf16.mxu0 0
        %1913 = vmatpush1.bf16.msra.mxu0 0
        %1914 = vmatprep.subr.bf16.mxu0 0
        %1915 = vmatpush1.bf16.msra.mxu0 0
        %1916 = vmatprep.subr.bf16.mxu0 0
        %1917 = vmatpush1.bf16.msra.mxu0 0
        %1918 = vmatprep.subr.bf16.mxu0 0
        %1919 = vmatpush1.bf16.msra.mxu0 0
        %1920 = vmatprep.subr.bf16.mxu0 0
        %1921 = vmatpush1.bf16.msra.mxu0 0
        %1922 = vmatprep.mubr.bf16.mxu0 0
        %1923 = vmatmul.mubr.bf16.gmra.mrb[0].mxu0 %v1888
        %v1924 = vpop.f32.mrb[0].mxu0
        %v1925 = vadd.f32 0.0, %v1924
        %v1926 = vpop.f32.mrb[0].mxu0
        %v1927 = vpop.f32.mrb[0].mxu0
        %v1928 = vadd.f32 0.0, %v1927
        %v1929 = vpop.f32.mrb[0].mxu0
        %1930 = vdwg.mxu0
        %v1931 = vld [vmem:[#allocation3] sm:$0xff]
        %v1932 = vld [vmem:[#allocation3 + $0x8] sm:$0xff]
        %v1933 = vadd.f32 %v1931, %v1925
        %v1934 = vadd.f32 %v1932, %v1928
        %1935 = vst.msk [vmem:[#allocation3] sm:$0xff] %vm386, %v1933
        %1936 = vst.msk [vmem:[#allocation3 + $0x8] sm:$0xff] %vm386, %v1934
        %v1937 = vld [vmem:[%s304 + $0x8] sm:$0xff]
        %v1938 = vld [vmem:[%s304 + $0x20] sm:$0xff]
        %v1939 = vpack.c.bf16 %v1938, %v1937
        %s1940 = scalar_lea.vmem %s5, 64
        %v1941 = vld [vmem:[%s1940] sm:$0xf]
        %v1942 = vld [vmem:[%s1940 + $0x4] sm:$0xf]
        %v1943 = vld [vmem:[%s1940 + $0x8] sm:$0xf]
        %v1944 = vld [vmem:[%s1940 + $0xc] sm:$0xf]
        %v1949 = vunpack.c.l.b16 %v1941
        %v1950 = vunpack.c.l.b16 %v1942
        %v1951 = vunpack.c.l.b16 %v1943
        %v1952 = vunpack.c.l.b16 %v1944
        %v1953 = vpack.c.b16 %v1950, %v1949
        %v1954 = vpack.c.b16 %v1952, %v1951
        %v1958 = vsel %vm386, %v1939, 0
        %1960 = vmatprep.subr.bf16.mxu0 0
        %1961 = vmatpush1.bf16.msra.mxu0 %v1953
        %1962 = vmatprep.subr.bf16.mxu0 0
        %1963 = vmatpush1.bf16.msra.mxu0 %v1954
        %1964 = vmatprep.subr.bf16.mxu0 0
        %1965 = vmatpush1.bf16.msra.mxu0 0
        %1966 = vmatprep.subr.bf16.mxu0 0
        %1967 = vmatpush1.bf16.msra.mxu0 0
        %1968 = vmatprep.subr.bf16.mxu0 0
        %1969 = vmatpush1.bf16.msra.mxu0 0
        %1970 = vmatprep.subr.bf16.mxu0 0
        %1971 = vmatpush1.bf16.msra.mxu0 0
        %1972 = vmatprep.subr.bf16.mxu0 0
        %1973 = vmatpush1.bf16.msra.mxu0 0
        %1974 = vmatprep.subr.bf16.mxu0 0
        %1975 = vmatpush1.bf16.msra.mxu0 0
        %1976 = vmatprep.subr.bf16.mxu0 0
        %1977 = vmatpush1.bf16.msra.mxu0 0
        %1978 = vmatprep.subr.bf16.mxu0 0
        %1979 = vmatpush1.bf16.msra.mxu0 0
        %1980 = vmatprep.subr.bf16.mxu0 0
        %1981 = vmatpush1.bf16.msra.mxu0 0
        %1982 = vmatprep.subr.bf16.mxu0 0
        %1983 = vmatpush1.bf16.msra.mxu0 0
        %1984 = vmatprep.subr.bf16.mxu0 0
        %1985 = vmatpush1.bf16.msra.mxu0 0
        %1986 = vmatprep.subr.bf16.mxu0 0
        %1987 = vmatpush1.bf16.msra.mxu0 0
        %1988 = vmatprep.subr.bf16.mxu0 0
        %1989 = vmatpush1.bf16.msra.mxu0 0
        %1990 = vmatprep.subr.bf16.mxu0 0
        %1991 = vmatpush1.bf16.msra.mxu0 0
        %1992 = vmatprep.mubr.bf16.mxu0 0
        %1993 = vmatmul.mubr.bf16.gmra.mrb[0].mxu0 %v1958
        %v1994 = vpop.f32.mrb[0].mxu0
        %v1995 = vadd.f32 0.0, %v1994
        %v1996 = vpop.f32.mrb[0].mxu0
        %v1997 = vpop.f32.mrb[0].mxu0
        %v1998 = vadd.f32 0.0, %v1997
        %v1999 = vpop.f32.mrb[0].mxu0
        %2000 = vdwg.mxu0
        %v2001 = vld [vmem:[#allocation3] sm:$0xff]
        %v2002 = vld [vmem:[#allocation3 + $0x8] sm:$0xff]
        %v2003 = vadd.f32 %v2001, %v1995
        %v2004 = vadd.f32 %v2002, %v1998
        %2005 = vst.msk [vmem:[#allocation3] sm:$0xff] %vm386, %v2003
        %2006 = vst.msk [vmem:[#allocation3 + $0x8] sm:$0xff] %vm386, %v2004
        %v2007 = vld [vmem:[%s304 + $0x9] sm:$0xff]
        %v2008 = vld [vmem:[%s304 + $0x21] sm:$0xff]
        %v2009 = vpack.c.bf16 %v2008, %v2007
        %s2010 = scalar_lea.vmem %s5, 80
        %v2011 = vld [vmem:[%s2010] sm:$0xf]
        %v2012 = vld [vmem:[%s2010 + $0x4] sm:$0xf]
        %v2013 = vld [vmem:[%s2010 + $0x8] sm:$0xf]
        %v2014 = vld [vmem:[%s2010 + $0xc] sm:$0xf]
        %v2019 = vunpack.c.l.b16 %v2011
        %v2020 = vunpack.c.l.b16 %v2012
        %v2021 = vunpack.c.l.b16 %v2013
        %v2022 = vunpack.c.l.b16 %v2014
        %v2023 = vpack.c.b16 %v2020, %v2019
        %v2024 = vpack.c.b16 %v2022, %v2021
        %v2028 = vsel %vm386, %v2009, 0
        %2030 = vmatprep.subr.bf16.mxu0 0
        %2031 = vmatpush1.bf16.msra.mxu0 %v2023
        %2032 = vmatprep.subr.bf16.mxu0 0
        %2033 = vmatpush1.bf16.msra.mxu0 %v2024
        %2034 = vmatprep.subr.bf16.mxu0 0
        %2035 = vmatpush1.bf16.msra.mxu0 0
        %2036 = vmatprep.subr.bf16.mxu0 0
        %2037 = vmatpush1.bf16.msra.mxu0 0
        %2038 = vmatprep.subr.bf16.mxu0 0
        %2039 = vmatpush1.bf16.msra.mxu0 0
        %2040 = vmatprep.subr.bf16.mxu0 0
        %2041 = vmatpush1.bf16.msra.mxu0 0
        %2042 = vmatprep.subr.bf16.mxu0 0
        %2043 = vmatpush1.bf16.msra.mxu0 0
        %2044 = vmatprep.subr.bf16.mxu0 0
        %2045 = vmatpush1.bf16.msra.mxu0 0
        %2046 = vmatprep.subr.bf16.mxu0 0
        %2047 = vmatpush1.bf16.msra.mxu0 0
        %2048 = vmatprep.subr.bf16.mxu0 0
        %2049 = vmatpush1.bf16.msra.mxu0 0
        %2050 = vmatprep.subr.bf16.mxu0 0
        %2051 = vmatpush1.bf16.msra.mxu0 0
        %2052 = vmatprep.subr.bf16.mxu0 0
        %2053 = vmatpush1.bf16.msra.mxu0 0
        %2054 = vmatprep.subr.bf16.mxu0 0
        %2055 = vmatpush1.bf16.msra.mxu0 0
        %2056 = vmatprep.subr.bf16.mxu0 0
        %2057 = vmatpush1.bf16.msra.mxu0 0
        %2058 = vmatprep.subr.bf16.mxu0 0
        %2059 = vmatpush1.bf16.msra.mxu0 0
        %2060 = vmatprep.subr.bf16.mxu0 0
        %2061 = vmatpush1.bf16.msra.mxu0 0
        %2062 = vmatprep.mubr.bf16.mxu0 0
        %2063 = vmatmul.mubr.bf16.gmra.mrb[0].mxu0 %v2028
        %v2064 = vpop.f32.mrb[0].mxu0
        %v2065 = vadd.f32 0.0, %v2064
        %v2066 = vpop.f32.mrb[0].mxu0
        %v2067 = vpop.f32.mrb[0].mxu0
        %v2068 = vadd.f32 0.0, %v2067
        %v2069 = vpop.f32.mrb[0].mxu0
        %2070 = vdwg.mxu0
        %v2071 = vld [vmem:[#allocation3] sm:$0xff]
        %v2072 = vld [vmem:[#allocation3 + $0x8] sm:$0xff]
        %v2073 = vadd.f32 %v2071, %v2065
        %v2074 = vadd.f32 %v2072, %v2068
        %2075 = vst.msk [vmem:[#allocation3] sm:$0xff] %vm386, %v2073
        %2076 = vst.msk [vmem:[#allocation3 + $0x8] sm:$0xff] %vm386, %v2074
        %v2077 = vld [vmem:[%s313 + $0x7] sm:$0xff]
        %v2078 = vld [vmem:[%s313 + $0x1f] sm:$0xff]
        %v2079 = vpack.c.bf16 %v2078, %v2077
        %s2080 = scalar_lea.vmem %s5, 96
        %v2081 = vld [vmem:[%s2080] sm:$0xf]
        %v2082 = vld [vmem:[%s2080 + $0x4] sm:$0xf]
        %v2083 = vld [vmem:[%s2080 + $0x8] sm:$0xf]
        %v2084 = vld [vmem:[%s2080 + $0xc] sm:$0xf]
        %v2089 = vunpack.c.l.b16 %v2081
        %v2090 = vunpack.c.l.b16 %v2082
        %v2091 = vunpack.c.l.b16 %v2083
        %v2092 = vunpack.c.l.b16 %v2084
        %v2093 = vpack.c.b16 %v2090, %v2089
        %v2094 = vpack.c.b16 %v2092, %v2091
        %v2098 = vsel %vm386, %v2079, 0
        %2100 = vmatprep.subr.bf16.mxu0 0
        %2101 = vmatpush1.bf16.msra.mxu0 %v2093
        %2102 = vmatprep.subr.bf16.mxu0 0
        %2103 = vmatpush1.bf16.msra.mxu0 %v2094
        %2104 = vmatprep.subr.bf16.mxu0 0
        %2105 = vmatpush1.bf16.msra.mxu0 0
        %2106 = vmatprep.subr.bf16.mxu0 0
        %2107 = vmatpush1.bf16.msra.mxu0 0
        %2108 = vmatprep.subr.bf16.mxu0 0
        %2109 = vmatpush1.bf16.msra.mxu0 0
        %2110 = vmatprep.subr.bf16.mxu0 0
        %2111 = vmatpush1.bf16.msra.mxu0 0
        %2112 = vmatprep.subr.bf16.mxu0 0
        %2113 = vmatpush1.bf16.msra.mxu0 0
        %2114 = vmatprep.subr.bf16.mxu0 0
        %2115 = vmatpush1.bf16.msra.mxu0 0
        %2116 = vmatprep.subr.bf16.mxu0 0
        %2117 = vmatpush1.bf16.msra.mxu0 0
        %2118 = vmatprep.subr.bf16.mxu0 0
        %2119 = vmatpush1.bf16.msra.mxu0 0
        %2120 = vmatprep.subr.bf16.mxu0 0
        %2121 = vmatpush1.bf16.msra.mxu0 0
        %2122 = vmatprep.subr.bf16.mxu0 0
        %2123 = vmatpush1.bf16.msra.mxu0 0
        %2124 = vmatprep.subr.bf16.mxu0 0
        %2125 = vmatpush1.bf16.msra.mxu0 0
        %2126 = vmatprep.subr.bf16.mxu0 0
        %2127 = vmatpush1.bf16.msra.mxu0 0
        %2128 = vmatprep.subr.bf16.mxu0 0
        %2129 = vmatpush1.bf16.msra.mxu0 0
        %2130 = vmatprep.subr.bf16.mxu0 0
        %2131 = vmatpush1.bf16.msra.mxu0 0
        %2132 = vmatprep.mubr.bf16.mxu0 0
        %2133 = vmatmul.mubr.bf16.gmra.mrb[0].mxu0 %v2098
        %v2134 = vpop.f32.mrb[0].mxu0
        %v2135 = vadd.f32 0.0, %v2134
        %v2136 = vpop.f32.mrb[0].mxu0
        %v2137 = vpop.f32.mrb[0].mxu0
        %v2138 = vadd.f32 0.0, %v2137
        %v2139 = vpop.f32.mrb[0].mxu0
        %2140 = vdwg.mxu0
        %v2141 = vld [vmem:[#allocation3] sm:$0xff]
        %v2142 = vld [vmem:[#allocation3 + $0x8] sm:$0xff]
        %v2143 = vadd.f32 %v2141, %v2135
        %v2144 = vadd.f32 %v2142, %v2138
        %2145 = vst.msk [vmem:[#allocation3] sm:$0xff] %vm386, %v2143
        %2146 = vst.msk [vmem:[#allocation3 + $0x8] sm:$0xff] %vm386, %v2144
        %v2147 = vld [vmem:[%s313 + $0x8] sm:$0xff]
        %v2148 = vld [vmem:[%s313 + $0x20] sm:$0xff]
        %v2149 = vpack.c.bf16 %v2148, %v2147
        %s2150 = scalar_lea.vmem %s5, 112
        %v2151 = vld [vmem:[%s2150] sm:$0xf]
        %v2152 = vld [vmem:[%s2150 + $0x4] sm:$0xf]
        %v2153 = vld [vmem:[%s2150 + $0x8] sm:$0xf]
        %v2154 = vld [vmem:[%s2150 + $0xc] sm:$0xf]
        %v2159 = vunpack.c.l.b16 %v2151
        %v2160 = vunpack.c.l.b16 %v2152
        %v2161 = vunpack.c.l.b16 %v2153
        %v2162 = vunpack.c.l.b16 %v2154
        %v2163 = vpack.c.b16 %v2160, %v2159
        %v2164 = vpack.c.b16 %v2162, %v2161
        %v2168 = vsel %vm386, %v2149, 0
        %2170 = vmatprep.subr.bf16.mxu0 0
        %2171 = vmatpush1.bf16.msra.mxu0 %v2163
        %2172 = vmatprep.subr.bf16.mxu0 0
        %2173 = vmatpush1.bf16.msra.mxu0 %v2164
        %2174 = vmatprep.subr.bf16.mxu0 0
        %2175 = vmatpush1.bf16.msra.mxu0 0
        %2176 = vmatprep.subr.bf16.mxu0 0
        %2177 = vmatpush1.bf16.msra.mxu0 0
        %2178 = vmatprep.subr.bf16.mxu0 0
        %2179 = vmatpush1.bf16.msra.mxu0 0
        %2180 = vmatprep.subr.bf16.mxu0 0
        %2181 = vmatpush1.bf16.msra.mxu0 0
        %2182 = vmatprep.subr.bf16.mxu0 0
        %2183 = vmatpush1.bf16.msra.mxu0 0
        %2184 = vmatprep.subr.bf16.mxu0 0
        %2185 = vmatpush1.bf16.msra.mxu0 0
        %2186 = vmatprep.subr.bf16.mxu0 0
        %2187 = vmatpush1.bf16.msra.mxu0 0
        %2188 = vmatprep.subr.bf16.mxu0 0
        %2189 = vmatpush1.bf16.msra.mxu0 0
        %2190 = vmatprep.subr.bf16.mxu0 0
        %2191 = vmatpush1.bf16.msra.mxu0 0
        %2192 = vmatprep.subr.bf16.mxu0 0
        %2193 = vmatpush1.bf16.msra.mxu0 0
        %2194 = vmatprep.subr.bf16.mxu0 0
        %2195 = vmatpush1.bf16.msra.mxu0 0
        %2196 = vmatprep.subr.bf16.mxu0 0
        %2197 = vmatpush1.bf16.msra.mxu0 0
        %2198 = vmatprep.subr.bf16.mxu0 0
        %2199 = vmatpush1.bf16.msra.mxu0 0
        %2200 = vmatprep.subr.bf16.mxu0 0
        %2201 = vmatpush1.bf16.msra.mxu0 0
        %2202 = vmatprep.mubr.bf16.mxu0 0
        %2203 = vmatmul.mubr.bf16.gmra.mrb[0].mxu0 %v2168
        %v2204 = vpop.f32.mrb[0].mxu0
        %v2205 = vadd.f32 0.0, %v2204
        %v2206 = vpop.f32.mrb[0].mxu0
        %v2207 = vpop.f32.mrb[0].mxu0
        %v2208 = vadd.f32 0.0, %v2207
        %v2209 = vpop.f32.mrb[0].mxu0
        %2210 = vdwg.mxu0
        %v2211 = vld [vmem:[#allocation3] sm:$0xff]
        %v2212 = vld [vmem:[#allocation3 + $0x8] sm:$0xff]
        %v2213 = vadd.f32 %v2211, %v2205
        %v2214 = vadd.f32 %v2212, %v2208
        %2215 = vst.msk [vmem:[#allocation3] sm:$0xff] %vm386, %v2213
        %2216 = vst.msk [vmem:[#allocation3 + $0x8] sm:$0xff] %vm386, %v2214
        %v2217 = vld [vmem:[%s313 + $0x9] sm:$0xff]
        %v2218 = vld [vmem:[%s313 + $0x21] sm:$0xff]
        %v2219 = vpack.c.bf16 %v2218, %v2217
        %s2220 = scalar_lea.vmem %s5, 128
        %v2221 = vld [vmem:[%s2220] sm:$0xf]
        %v2222 = vld [vmem:[%s2220 + $0x4] sm:$0xf]
        %v2223 = vld [vmem:[%s2220 + $0x8] sm:$0xf]
        %v2224 = vld [vmem:[%s2220 + $0xc] sm:$0xf]
        %v2229 = vunpack.c.l.b16 %v2221
        %v2230 = vunpack.c.l.b16 %v2222
        %v2231 = vunpack.c.l.b16 %v2223
        %v2232 = vunpack.c.l.b16 %v2224
        %v2233 = vpack.c.b16 %v2230, %v2229
        %v2234 = vpack.c.b16 %v2232, %v2231
        %v2238 = vsel %vm386, %v2219, 0
        %2240 = vmatprep.subr.bf16.mxu0 0
        %2241 = vmatpush1.bf16.msra.mxu0 %v2233
        %2242 = vmatprep.subr.bf16.mxu0 0
        %2243 = vmatpush1.bf16.msra.mxu0 %v2234
        %2244 = vmatprep.subr.bf16.mxu0 0
        %2245 = vmatpush1.bf16.msra.mxu0 0
        %2246 = vmatprep.subr.bf16.mxu0 0
        %2247 = vmatpush1.bf16.msra.mxu0 0
        %2248 = vmatprep.subr.bf16.mxu0 0
        %2249 = vmatpush1.bf16.msra.mxu0 0
        %2250 = vmatprep.subr.bf16.mxu0 0
        %2251 = vmatpush1.bf16.msra.mxu0 0
        %2252 = vmatprep.subr.bf16.mxu0 0
        %2253 = vmatpush1.bf16.msra.mxu0 0
        %2254 = vmatprep.subr.bf16.mxu0 0
        %2255 = vmatpush1.bf16.msra.mxu0 0
        %2256 = vmatprep.subr.bf16.mxu0 0
        %2257 = vmatpush1.bf16.msra.mxu0 0
        %2258 = vmatprep.subr.bf16.mxu0 0
        %2259 = vmatpush1.bf16.msra.mxu0 0
        %2260 = vmatprep.subr.bf16.mxu0 0
        %2261 = vmatpush1.bf16.msra.mxu0 0
        %2262 = vmatprep.subr.bf16.mxu0 0
        %2263 = vmatpush1.bf16.msra.mxu0 0
        %2264 = vmatprep.subr.bf16.mxu0 0
        %2265 = vmatpush1.bf16.msra.mxu0 0
        %2266 = vmatprep.subr.bf16.mxu0 0
        %2267 = vmatpush1.bf16.msra.mxu0 0
        %2268 = vmatprep.subr.bf16.mxu0 0
        %2269 = vmatpush1.bf16.msra.mxu0 0
        %2270 = vmatprep.subr.bf16.mxu0 0
        %2271 = vmatpush1.bf16.msra.mxu0 0
        %2272 = vmatprep.mubr.bf16.mxu0 0
        %2273 = vmatmul.mubr.bf16.gmra.mrb[0].mxu0 %v2238
        %v2274 = vpop.f32.mrb[0].mxu0
        %v2275 = vadd.f32 0.0, %v2274
        %v2276 = vpop.f32.mrb[0].mxu0
        %v2277 = vpop.f32.mrb[0].mxu0
        %v2278 = vadd.f32 0.0, %v2277
        %v2279 = vpop.f32.mrb[0].mxu0
        %2280 = vdwg.mxu0
        %v2281 = vld [vmem:[#allocation3] sm:$0xff]
        %v2282 = vld [vmem:[#allocation3 + $0x8] sm:$0xff]
        %v2283 = vadd.f32 %v2281, %v2275
        %v2284 = vadd.f32 %v2282, %v2278
        %2285 = vst.msk [vmem:[#allocation3] sm:$0xff] %vm386, %v2283
        %2286 = vst.msk [vmem:[#allocation3 + $0x8] sm:$0xff] %vm386, %v2284
        %v2287 = vld [vmem:[#allocation3] sm:$0xff]
        %v2288 = vld [vmem:[#allocation3 + $0x8] sm:$0xff]
        %v2289 = vld [vmem:[%s6] sm:$0x1]
        %v2291 = vlaneseq
        %v2292 = vshrl.u32 %v2291, 7
        %v2293 = vsub.s32 0, %v2292
        %v2294 = vrot.slane %v2289, %v2293
        %v2296 = vadd.f32 %v2287, %v2294
        %v2297 = vadd.f32 %v2288, %v2294
        %v2298 = vmax.f32 %v2296, 0.0
        %v2299 = vmax.f32 %v2297, 0.0
        %2300 = vst.msk [vmem:[%s284] sm:$0x3] %vm1015, %v2298
        %2301 = vst.msk [vmem:[%s284 + $0x2] sm:$0x3] %vm1015, %v2299
        %s2302 = sand.u32 %s186, 1
        %s2303 = scalar_lea.sflag [#allocation5], %s2302
        %s2304 = sand.u32 %s186, 1
        %s2305 = smul.addr %s2304, 4
        %s2306 = scalar_lea.vmem [#allocation4], %s2305
        // Predicated region
        $region49: #{tpu_custom_call.1} parent=47 // pred_check
          %p2307 = pneg %p196
        $region50: #{tpu_custom_call.1} parent=47 // pred_check_branch
          %2309 = sbr.rel (%p2307) target = $region52
        $region51: #{tpu_custom_call.1} parent=47 // pred_region
          %s2311 = ssub.s32 64, 64
          %2312 = vsyncadd %s2303, %s2311
          %s2313 = smul.addr %s21, 2
          %s2314 = smul.addr %s2313, 32
          %s2315 = scalar_lea.hbm %s7, %s2314
          %s2316 = sshll.u32 %s2306, 4
          %s2317 = int_to_ptr.vmem [resolvable:$true] %s2316
          %2322 = dma.vmem_to_hbm [thread:$0]  %s2317, 64, %s2315, %s2303, 32, 32, 2
        $region52: #{tpu_custom_call.1} parent=47 // pred_fallthru
          _
      $region48: #{tpu_custom_call.1} parent=5 // pred_fallthru
        _
      %p2323 = scmp.le.s32.totalorder 2, %s16
      // Predicated region
      $region53: #{tpu_custom_call.1} parent=5 // pred_check
        %p2324 = pneg %p2323
      $region54: #{tpu_custom_call.1} parent=5 // pred_check_branch
        %2326 = sbr.rel (%p2324) target = $region56
      $region55: #{tpu_custom_call.1} parent=5 // pred_region
        %s2327 = ssub.s32 %s16, 2
        // Predicated region
        $region57: #{tpu_custom_call.1} parent=55 // pred_check
          %p2328 = pneg %p202
        $region58: #{tpu_custom_call.1} parent=55 // pred_check_branch
          %2330 = sbr.rel (%p2328) target = $region60
        $region59: #{tpu_custom_call.1} parent=55 // pred_region
          %s2331 = sand.u32 %s187, 1
          %s2332 = scalar_lea.sflag [#allocation5], %s2331
          %s2333 = sand.u32 %s187, 1
          %s2334 = smul.addr %s2333, 4
          %s2335 = scalar_lea.vmem [#allocation4], %s2334
          %2336 = dma.done %s2332, 64
        $region60: #{tpu_custom_call.1} parent=55 // pred_fallthru
          _
      $region56: #{tpu_custom_call.1} parent=5 // pred_fallthru
        _
    $region6: #{tpu_custom_call.1} parent=1 // loop_footer
      %s20 = sadd.s32 1, %s16
    $region7: #{tpu_custom_call.1} parent=1 // loop_footer_branch
      %15 = sbr.rel target = $region3
    $region8: #{tpu_custom_call.1} parent=1 // loop_exit
      _
    %2337 = vsyncpa [#allocation5], 1
    %s2338 = scalar_lea.sflag [#allocation5], 1
    %2339 = vsyncpa %s2338, 1

</llo_original>
